<compile_context>
chip_gen: v6e
topology: v6e:2x2x1
jax: 0.10.0
libtpu: 0.0.40
codegen_flags: <defaults>
</compile_context>

<pallas_src>
import functools

import jax
import jax.numpy as jnp
from jax import lax
from jax.experimental import pallas as pl
from jax.experimental.pallas import tpu as pltpu


# ---------------------------------------------------------------------------
# In-kernel helpers (shared by the pool kernel and the main kernel)
# ---------------------------------------------------------------------------
def _dw3x3(u, kw, kb, tile_rows, W):
    """3x3 depthwise conv on a flattened ((tile_rows+2)*W, 2C) f32 slab.

    `u` carries one halo row above and below the tile (already zeroed where it
    falls outside the image), so only the +-1 column shifts remain; they use
    pltpu.roll along the flattened row-major axis (XLU slot) plus column masks
    for the wrap-around pixels.
    """
    P, C2 = u.shape
    n = tile_rows * W
    col = lax.broadcasted_iota(jnp.int32, (P, 1), 0) % W
    u_left = jnp.where(col == 0, 0.0, pltpu.roll(u, 1, axis=0))           # src col w-1
    u_right = jnp.where(col == W - 1, 0.0, pltpu.roll(u, P - 1, axis=0))  # src col w+1
    acc = jnp.zeros((n, C2), jnp.float32)
    for dy in range(3):
        o = dy * W
        acc = acc + u_left[o:o + n] * kw[3 * dy + 0:3 * dy + 1, :]
        acc = acc + u[o:o + n] * kw[3 * dy + 1:3 * dy + 2, :]
        acc = acc + u_right[o:o + n] * kw[3 * dy + 2:3 * dy + 3, :]
    return acc + kb


def _layer_norm(x, w, b, eps):
    """Channel LayerNorm, two-pass (x-mu)^2 variance for precision; f32 stats."""
    mu = jnp.mean(x, axis=-1, keepdims=True)
    d = x - mu
    var = jnp.mean(d * d, axis=-1, keepdims=True)
    return d * lax.rsqrt(var + eps) * w + b


def _gated_branch(slab_raw, shift, scale, n1_w, n1_b, c1_w, c1_b, c2_w, c2_b,
                  is_top, is_bot, tile_rows, W, eps):
    """norm1 -> time-mod -> conv1 (1x1, C->2C) -> depthwise 3x3 -> SimpleGate."""
    f32 = jnp.float32
    P, C = slab_raw.shape
    u = _layer_norm(slab_raw.astype(f32), n1_w, n1_b, eps)
    u = u * (scale + 1.0) + shift                                  # time modulation
    u2 = (jnp.dot(u.astype(c1_w.dtype), c1_w, preferred_element_type=f32)
          + c1_b)                                                  # (P, 2C)

    # conv2 zero-pads its *input*: zero the halo rows that lie outside the
    # image (single select on the merged 2C slab; no-op on interior tiles).
    row = lax.broadcasted_iota(jnp.int32, (P, 1), 0)
    kill = jnp.logical_or(jnp.logical_and(is_top, row < W),
                          jnp.logical_and(is_bot, row >= (tile_rows + 1) * W))
    u2 = jnp.where(kill, 0.0, u2)

    g2 = _dw3x3(u2, c2_w, c2_b, tile_rows, W)                      # (n, 2C)
    return g2[:, :C] * g2[:, C:]                                   # SimpleGate -> (n, C)


# ---------------------------------------------------------------------------
# Pass 1: partial spatial sums of the gated activation (for the SCA pool)
# ---------------------------------------------------------------------------
def _sca_pool_kernel(tile_rows, W, n_tiles, tpc, eps,
                     x_ref, xp_ref, xn_ref, emb_ref,
                     vecC_ref, vec2C_ref, w_c2c_ref, c2w_ref,
                     sum_ref):
    f32 = jnp.float32
    s = pl.program_id(1)
    i = pl.program_id(2)
    t = s * tpc + i                                                # global row-tile index

    @pl.when(i == 0)
    def _():
        sum_ref[...] = jnp.zeros_like(sum_ref)

    emb = emb_ref[0].astype(f32)                                   # (4, C)
    vC = vecC_ref[...].astype(f32)                                 # (8, C)
    v2 = vec2C_ref[...].astype(f32)                                # (3, 2C)

    slab_raw = jnp.concatenate([xp_ref[0], x_ref[0], xn_ref[0]], axis=0)
    g = _gated_branch(slab_raw, emb[0:1], emb[1:2],
                      vC[0:1], vC[1:2],                            # n1_w, n1_b
                      w_c2c_ref[0], v2[0:1],                       # c1_w, c1_b
                      c2w_ref[...].astype(f32), v2[1:2],           # c2_w, c2_b
                      t == 0, t == n_tiles - 1, tile_rows, W, eps)
    sum_ref[0] += jnp.sum(g, axis=0, keepdims=True)                # partial spatial sum


# ---------------------------------------------------------------------------
# Pass 2: full NAFBlock for one (batch, row-tile) block
# ---------------------------------------------------------------------------
def _nafblock_kernel(tile_rows, W, eps,
                     x_ref, xp_ref, xn_ref, emb_ref, att_ref,
                     vecC_ref, vec2C_ref, w_c2c_ref, c2w_ref, w_cc_ref,
                     out_ref):
    f32 = jnp.float32
    i = pl.program_id(1)
    is_top = i == 0
    is_bot = i == pl.num_programs(1) - 1

    emb = emb_ref[0].astype(f32)                                   # (4, C)
    vC = vecC_ref[...].astype(f32)                                 # (8, C)
    v2 = vec2C_ref[...].astype(f32)                                # (3, 2C)
    n1_w, n1_b, n2_w, n2_b = vC[0:1], vC[1:2], vC[2:3], vC[3:4]
    c3_b, c5_b, beta, gamma = vC[4:5], vC[5:6], vC[6:7], vC[7:8]
    c1_b, c2_b, c4_b = v2[0:1], v2[1:2], v2[2:3]
    mxu = w_c2c_ref.dtype

    slab_raw = jnp.concatenate([xp_ref[0], x_ref[0], xn_ref[0]], axis=0)  # (P, C)
    C = slab_raw.shape[-1]

    # ---- attention-style branch (SCA vector computed in pass 1) ----
    g = _gated_branch(slab_raw, emb[0:1], emb[1:2], n1_w, n1_b,
                      w_c2c_ref[0], c1_b, c2w_ref[...].astype(f32), c2_b,
                      is_top, is_bot, tile_rows, W, eps)           # (n, C)
    x = g * att_ref[0].astype(f32)                                 # SCA channel scaling
    x = jnp.dot(x.astype(mxu), w_cc_ref[0], preferred_element_type=f32) + c3_b
    inp = x_ref[0].astype(f32)
    y = inp + x * beta                                             # dropout1 = Identity

    # ---- FFN branch ----
    z = _layer_norm(y, n2_w, n2_b, eps)
    z = z * (emb[3:4] + 1.0) + emb[2:3]                            # scale_ffn, shift_ffn
    z2 = jnp.dot(z.astype(mxu), w_c2c_ref[1], preferred_element_type=f32) + c4_b
    z = z2[:, :C] * z2[:, C:]                                      # SimpleGate
    z = jnp.dot(z.astype(mxu), w_cc_ref[1], preferred_element_type=f32) + c5_b
    out_ref[0] = (y + z * gamma).astype(out_ref.dtype)             # dropout2 = Identity


# ---------------------------------------------------------------------------
# VMEM budgeting (generation aware)
# ---------------------------------------------------------------------------
def _vmem_capacity_bytes():
    try:
        return int(pltpu.get_tpu_info().vmem_capacity_bytes)
    except Exception:
        return 64 << 20                         # conservative fallback (v7x-sized)


def _tile_bytes(th, W, C, itemsize):
    """Rough per-grid-step VMEM footprint: ~12 concurrent f32 slabs of
    (th+2)*W rows (merged 2C path) plus double-buffered tile/halo/output DMA."""
    n = th * W
    work = 12 * (th + 2) * W * C * 4
    stream = 4 * n * C * itemsize + 4 * W * C * itemsize
    return work + stream


def _pick_tile_rows(H, W, C, itemsize, budget):
    best = 1
    for th in range(1, H + 1):
        if H % th == 0 and _tile_bytes(th, W, C, itemsize) <= budget:
            best = th
    return best


def _vmem_limit_bytes(th, W, C, itemsize, cap):
    est = _tile_bytes(th, W, C, itemsize) + (2 << 20)
    return int(min(max(2 * est, 32 << 20), int(0.85 * cap)))


def _pack_params(p):
    vecC = jnp.concatenate([p["n1_w"], p["n1_b"], p["n2_w"], p["n2_b"],
                            p["c3_b"], p["c5_b"], p["beta"], p["gamma"]], axis=0)   # (8, C)
    vec2C = jnp.concatenate([p["c1_b"], p["c2_b"], p["c4_b"]], axis=0)              # (3, 2C)
    w_c2c = jnp.stack([p["c1_w"], p["c4_w"]], axis=0)                               # (2, C, 2C)
    w_cc = jnp.stack([p["c3_w"], p["c5_w"]], axis=0)                                # (2, C, C)
    return vecC, vec2C, w_c2c, w_cc, p["c2_w"]


# ---------------------------------------------------------------------------
# Wrapper
# ---------------------------------------------------------------------------
@functools.partial(jax.jit, static_argnums=(3, 4, 5, 6))
def _nafblock_jit(x_nhwc, time, p, tile_rows, n_split, eps, vmem_limit):
    B, H, W, C = x_nhwc.shape
    n_tiles = H // tile_rows
    tpc = n_tiles // n_split
    n = tile_rows * W
    f32 = jnp.float32

    # Tiny time-embedding MLP (SimpleGate + Linear): O(B*4C), computed once in XLA.
    Td = time.shape[1]
    tg = (time[:, :Td // 2] * time[:, Td // 2:]).astype(f32)
    emb = (tg @ p["mlp_w"].astype(f32) + p["mlp_b"].astype(f32)).reshape(B, 4, C)
    # rows: shift_att, scale_att, shift_ffn, scale_ffn

    vecC, vec2C, w_c2c, w_cc, c2w = _pack_params(p)
    xf = x_nhwc.reshape(B, H * W, C)            # free reshape: rows flatten onto sublanes

    # ---- pass 1: per-(batch, chunk) spatial sums of the gated activation ----
    psum = pl.pallas_call(
        functools.partial(_sca_pool_kernel, tile_rows, W, n_tiles, tpc, eps),
        out_shape=jax.ShapeDtypeStruct((B * n_split, 1, C), f32),
        grid=(B, n_split, tpc),
        in_specs=[
            pl.BlockSpec((1, n, C), lambda b, s, i: (b, s * tpc + i, 0)),
            pl.BlockSpec((1, W, C),
                         lambda b, s, i: (b, jnp.maximum((s * tpc + i) * tile_rows - 1, 0), 0)),
            pl.BlockSpec((1, W, C),
                         lambda b, s, i: (b, jnp.minimum((s * tpc + i + 1) * tile_rows, H - 1), 0)),
            pl.BlockSpec((1, 4, C), lambda b, s, i: (b, 0, 0)),
            pl.BlockSpec(vecC.shape, lambda b, s, i: (0, 0)),
            pl.BlockSpec(vec2C.shape, lambda b, s, i: (0, 0)),
            pl.BlockSpec(w_c2c.shape, lambda b, s, i: (0, 0, 0)),
            pl.BlockSpec(c2w.shape, lambda b, s, i: (0, 0)),
        ],
        out_specs=pl.BlockSpec((1, 1, C), lambda b, s, i: (b * n_split + s, 0, 0)),
        compiler_params=pltpu.CompilerParams(
            dimension_semantics=("parallel", "parallel", "arbitrary"),
            vmem_limit_bytes=vmem_limit),
    )(xf, xf, xf, emb, vecC, vec2C, w_c2c, c2w)

    # SCA finalize: global average pool + 1x1 conv ((B,C)@(C,C) -> tiny, in XLA).
    pooled = psum.reshape(B, n_split, C).sum(axis=1) * (1.0 / (H * W))
    att = (pooled @ p["sca_w"].astype(f32) + p["sca_b"].astype(f32)).reshape(B, 1, C)

    # ---- pass 2: full block, fully parallel over (batch, row tiles) ----
    out = pl.pallas_call(
        functools.partial(_nafblock_kernel, tile_rows, W, eps),
        out_shape=jax.ShapeDtypeStruct((B, H * W, C), x_nhwc.dtype),
        grid=(B, n_tiles),
        in_specs=[
            pl.BlockSpec((1, n, C), lambda b, i: (b, i, 0)),
            pl.BlockSpec((1, W, C),
                         lambda b, i: (b, jnp.maximum(i * tile_rows - 1, 0), 0)),
            pl.BlockSpec((1, W, C),
                         lambda b, i: (b, jnp.minimum((i + 1) * tile_rows, H - 1), 0)),
            pl.BlockSpec((1, 4, C), lambda b, i: (b, 0, 0)),
            pl.BlockSpec((1, 1, C), lambda b, i: (b, 0, 0)),
            pl.BlockSpec(vecC.shape, lambda b, i: (0, 0)),
            pl.BlockSpec(vec2C.shape, lambda b, i: (0, 0)),
            pl.BlockSpec(w_c2c.shape, lambda b, i: (0, 0, 0)),
            pl.BlockSpec(c2w.shape, lambda b, i: (0, 0)),
            pl.BlockSpec(w_cc.shape, lambda b, i: (0, 0, 0)),
        ],
        out_specs=pl.BlockSpec((1, n, C), lambda b, i: (b, i, 0)),
        compiler_params=pltpu.CompilerParams(
            dimension_semantics=("parallel", "parallel"),
            vmem_limit_bytes=vmem_limit),
    )(xf, xf, xf, emb, att, vecC, vec2C, w_c2c, c2w, w_cc)

    return out.reshape(B, H, W, C), time


def nafblock_pallas(x_nhwc, time, p, tile_rows=None, eps=1e-5):
    """NAFBlock forward.  x_nhwc: (B, H, W, C).  Returns (out_nhwc, time)."""
    B, H, W, C = x_nhwc.shape
    itemsize = jnp.dtype(x_nhwc.dtype).itemsize
    assert W % 8 == 0, "W must be a multiple of 8 (TPU sublane tiling)"
    if itemsize < 4:
        assert W % 16 == 0, "16-bit storage needs W % 16 == 0 (bf16 sublane tiling)"

    cap = _vmem_capacity_bytes()
    if tile_rows is None:
        tile_rows = _pick_tile_rows(H, W, C, itemsize, budget=int(0.40 * cap))
    assert H % tile_rows == 0, "tile_rows must divide H"
    n_tiles = H // tile_rows
    # Split the pass-1 reduction axis in two when possible so both TensorCores
    # (v7x megacore) have work even at batch size 1.
    n_split = 2 if (n_tiles % 2 == 0 and n_tiles >= 2) else 1
    vmem_limit = _vmem_limit_bytes(tile_rows, W, C, itemsize, cap)
    return _nafblock_jit(x_nhwc, time, p, tile_rows, n_split, float(eps), vmem_limit)


# ---------------------------------------------------------------------------
# Pure-JAX reference (same math / same weight layout), NHWC, f32
# ---------------------------------------------------------------------------
def nafblock_ref(x_nhwc, time, p, eps=1e-5):
    f32 = jnp.float32
    x = x_nhwc.astype(f32)
    B, H, W, C = x.shape
    pf = {k: v.astype(f32) for k, v in p.items()}
    t = time.astype(f32)
    Td = t.shape[1]
    tg = t[:, :Td // 2] * t[:, Td // 2:]
    emb = tg @ pf["mlp_w"] + pf["mlp_b"]
    sh_a = emb[:, None, None, 0 * C:1 * C]
    sc_a = emb[:, None, None, 1 * C:2 * C]
    sh_f = emb[:, None, None, 2 * C:3 * C]
    sc_f = emb[:, None, None, 3 * C:4 * C]

    def ln(v, w, b):
        mu = v.mean(-1, keepdims=True)
        var = ((v - mu) ** 2).mean(-1, keepdims=True)
        return (v - mu) * lax.rsqrt(var + eps) * w + b

    h = ln(x, pf["n1_w"], pf["n1_b"]) * (sc_a + 1.0) + sh_a
    h = h @ pf["c1_w"] + pf["c1_b"]
    hp = jnp.pad(h, ((0, 0), (1, 1), (1, 1), (0, 0)))
    acc = jnp.zeros_like(h)
    for k in range(9):
        dy, dx = k // 3, k % 3
        acc = acc + hp[:, dy:dy + H, dx:dx + W, :] * pf["c2_w"][k]
    h = acc + pf["c2_b"]
    h = h[..., :C] * h[..., C:]
    att = h.mean(axis=(1, 2), keepdims=True) @ pf["sca_w"] + pf["sca_b"]
    h = h * att
    h = h @ pf["c3_w"] + pf["c3_b"]
    y = x + h * pf["beta"]

    z = ln(y, pf["n2_w"], pf["n2_b"]) * (sc_f + 1.0) + sh_f
    z = z @ pf["c4_w"] + pf["c4_b"]
    z = z[..., :C] * z[..., C:]
    z = z @ pf["c5_w"] + pf["c5_b"]
    return y + z * pf["gamma"]


# ---------------------------------------------------------------------------
# Deterministic parameter init (shapes follow NAFBlock.__init__, c=C, td=Td)
# ---------------------------------------------------------------------------
def init_params(key, C, Td):
    ks = jax.random.split(key, 16)
    rnd = lambda k, shp: 0.2 * jax.random.normal(k, shp, jnp.float32)
    return {
        "mlp_w": rnd(ks[0], (Td // 2, 4 * C)),   # Linear(time_emb_dim//2, 4c)
        "mlp_b": rnd(ks[1], (1, 4 * C)),
        "n1_w": jnp.ones((1, C), jnp.float32), "n1_b": jnp.zeros((1, C), jnp.float32),
        "n2_w": jnp.ones((1, C), jnp.float32), "n2_b": jnp.zeros((1, C), jnp.float32),
        "c1_w": rnd(ks[2], (C, 2 * C)),  "c1_b": rnd(ks[3], (1, 2 * C)),
        "c2_w": rnd(ks[4], (9, 2 * C)),  "c2_b": rnd(ks[5], (1, 2 * C)),   # depthwise 3x3
        "sca_w": rnd(ks[6], (C, C)),     "sca_b": rnd(ks[7], (1, C)),
        "c3_w": rnd(ks[8], (C, C)),      "c3_b": rnd(ks[9], (1, C)),
        "c4_w": rnd(ks[10], (C, 2 * C)), "c4_b": rnd(ks[11], (1, 2 * C)),
        "c5_w": rnd(ks[12], (C, C)),     "c5_b": rnd(ks[13], (1, C)),
        # PyTorch inits beta/gamma to zeros (block == identity); use nonzero
        # values so the full datapath is exercised.
        "beta": rnd(ks[14], (1, C)),
        "gamma": rnd(ks[15], (1, C)),
    }


if __name__ == "__main__":
    B, C, H, W, Td = 2, 4, 16, 16, 8
    key = jax.random.PRNGKey(0)
    k1, k2, k3 = jax.random.split(key, 3)
    x = jax.random.normal(k1, (B, H, W, C), jnp.float32)          # NHWC
    t = jax.random.normal(k2, (B, Td), jnp.float32)
    params = init_params(k3, C, Td)

    ref = nafblock_ref(x, t, params)

    # f32, explicit row tiling: 2 row tiles per image, exercising the halo
    # handling and the split pass-1 partial sums (n_split=2).
    out, t_out = nafblock_pallas(x, t, params, tile_rows=8)
    out = jax.block_until_ready(out)
    assert out.shape == (B, H, W, C) and t_out.shape == t.shape
    err = float(jnp.max(jnp.abs(out.astype(jnp.float32) - ref)))
    assert err < 2e-3, f"f32 (tiled) max abs err {err}"

    # f32, auto-picked tile size (generation-aware budget; whole image per tile
    # at these shapes).
    out_a, _ = nafblock_pallas(x, t, params)
    out_a = jax.block_until_ready(out_a)
    err_a = float(jnp.max(jnp.abs(out_a.astype(jnp.float32) - ref)))
    assert err_a < 2e-3, f"f32 (auto) max abs err {err_a}"

    # bf16 storage / MXU path (halves HBM traffic & VMEM; LN stats stay f32).
    xb = x.astype(jnp.bfloat16)
    tb = t.astype(jnp.bfloat16)
    pb = jax.tree_util.tree_map(lambda v: v.astype(jnp.bfloat16), params)
    out_b, _ = nafblock_pallas(xb, tb, pb, tile_rows=8)
    out_b = jax.block_until_ready(out_b)
    err_b = float(jnp.max(jnp.abs(out_b.astype(jnp.float32) - ref)))
    tol_b = 0.1 * float(jnp.max(jnp.abs(ref))) + 1e-2
    assert err_b < tol_b, f"bf16 max abs err {err_b} (tol {tol_b})"

    print("KERNEL_OK")
</pallas_src>

<mosaic_0001>
module attributes {stable_mosaic.version = 11 : i64} {
  func.func @_sca_pool_kernel(%arg0: i32, %arg1: i32, %arg2: i32, %arg3: memref<1x128x4xf32, #tpu.memory_space<vmem>>, %arg4: memref<1x16x4xf32, #tpu.memory_space<vmem>>, %arg5: memref<1x16x4xf32, #tpu.memory_space<vmem>>, %arg6: memref<1x4x4xf32, #tpu.memory_space<vmem>>, %arg7: memref<8x4xf32, #tpu.memory_space<vmem>>, %arg8: memref<3x8xf32, #tpu.memory_space<vmem>>, %arg9: memref<2x4x8xf32, #tpu.memory_space<vmem>>, %arg10: memref<9x8xf32, #tpu.memory_space<vmem>>, %arg11: memref<1x1x4xf32, #tpu.memory_space<vmem>>) attributes {dimension_semantics = [#tpu.dimension_semantics<parallel>, #tpu.dimension_semantics<parallel>, #tpu.dimension_semantics<arbitrary>], iteration_bounds = array<i64: 2, 2, 1>, scalar_prefetch = 0 : i64, scratch_operands = 0 : i64, tpu.core_type = #tpu.core_type<tc>, window_params = [{transform_indices = @transform_0, window_bounds = array<i64: 1, 128, 4>}, {transform_indices = @transform_1, window_bounds = array<i64: 1, 16, 4>}, {transform_indices = @transform_2, window_bounds = array<i64: 1, 16, 4>}, {transform_indices = @transform_3, window_bounds = array<i64: 1, 4, 4>}, {pipeline_mode = #tpu.pipeline_mode<synchronous>, transform_indices = @transform_4, window_bounds = array<i64: 8, 4>}, {pipeline_mode = #tpu.pipeline_mode<synchronous>, transform_indices = @transform_5, window_bounds = array<i64: 3, 8>}, {pipeline_mode = #tpu.pipeline_mode<synchronous>, transform_indices = @transform_6, window_bounds = array<i64: 2, 4, 8>}, {pipeline_mode = #tpu.pipeline_mode<synchronous>, transform_indices = @transform_7, window_bounds = array<i64: 9, 8>}, {transform_indices = @transform_8, window_bounds = array<i64: 1, 1, 4>}]} {
    %c1_i32 = arith.constant 1 : i32
    %0 = arith.muli %arg1, %c1_i32 : i32
    %1 = arith.addi %0, %arg2 : i32
    %c0_i32 = arith.constant 0 : i32
    %2 = arith.cmpi eq, %arg2, %c0_i32 : i32
    %3 = arith.extui %2 : i1 to i32
    %c0_i32_0 = arith.constant 0 : i32
    %4 = arith.cmpi ne, %3, %c0_i32_0 : i32
    scf.if %4 {
      %cst_48 = arith.constant 0.000000e+00 : f32
      %160 = vector.broadcast %cst_48 : f32 to vector<1x1x4xf32>
      %c0_49 = arith.constant 0 : index
      %c0_50 = arith.constant 0 : index
      %c0_51 = arith.constant 0 : index
      %161 = vector.load %arg11[%c0_49, %c0_50, %c0_51] : memref<1x1x4xf32, #tpu.memory_space<vmem>>, vector<1x1x4xf32>
      tpu.vector_store %arg11[%c0_49, %c0_50, %c0_51], %160 {strides = array<i32>} : memref<1x1x4xf32, #tpu.memory_space<vmem>>, vector<1x1x4xf32>,
    } else {
    }
    %c0 = arith.constant 0 : index
    %c0_1 = arith.constant 0 : index
    %c0_2 = arith.constant 0 : index
    %5 = vector.load %arg6[%c0, %c0_1, %c0_2] : memref<1x4x4xf32, #tpu.memory_space<vmem>>, vector<1x4x4xf32>
    %6 = vector.shape_cast %5 : vector<1x4x4xf32> to vector<4x4xf32>
    %c0_3 = arith.constant 0 : index
    %c0_4 = arith.constant 0 : index
    %7 = vector.load %arg7[%c0_3, %c0_4] : memref<8x4xf32, #tpu.memory_space<vmem>>, vector<8x4xf32>
    %c0_5 = arith.constant 0 : index
    %c0_6 = arith.constant 0 : index
    %8 = vector.load %arg8[%c0_5, %c0_6] : memref<3x8xf32, #tpu.memory_space<vmem>>, vector<3x8xf32>
    %c0_7 = arith.constant 0 : index
    %c0_8 = arith.constant 0 : index
    %c0_9 = arith.constant 0 : index
    %9 = vector.load %arg4[%c0_7, %c0_8, %c0_9] : memref<1x16x4xf32, #tpu.memory_space<vmem>>, vector<1x16x4xf32>
    %10 = vector.shape_cast %9 : vector<1x16x4xf32> to vector<16x4xf32>
    %c0_10 = arith.constant 0 : index
    %c0_11 = arith.constant 0 : index
    %c0_12 = arith.constant 0 : index
    %11 = vector.load %arg3[%c0_10, %c0_11, %c0_12] : memref<1x128x4xf32, #tpu.memory_space<vmem>>, vector<1x128x4xf32>
    %12 = vector.shape_cast %11 : vector<1x128x4xf32> to vector<128x4xf32>
    %c0_13 = arith.constant 0 : index
    %c0_14 = arith.constant 0 : index
    %c0_15 = arith.constant 0 : index
    %13 = vector.load %arg5[%c0_13, %c0_14, %c0_15] : memref<1x16x4xf32, #tpu.memory_space<vmem>>, vector<1x16x4xf32>
    %14 = vector.shape_cast %13 : vector<1x16x4xf32> to vector<16x4xf32>
    %15 = tpu.concatenate %10, %12, %14 in 0 : vector<16x4xf32>, vector<128x4xf32>, vector<16x4xf32> -> vector<160x4xf32>
    %16 = vector.extract_strided_slice %6 {offsets = [0, 0], sizes = [1, 4], strides = [1, 1]} : vector<4x4xf32> to vector<1x4xf32>
    %17 = vector.extract_strided_slice %6 {offsets = [1, 0], sizes = [1, 4], strides = [1, 1]} : vector<4x4xf32> to vector<1x4xf32>
    %18 = vector.extract_strided_slice %7 {offsets = [0, 0], sizes = [1, 4], strides = [1, 1]} : vector<8x4xf32> to vector<1x4xf32>
    %19 = vector.extract_strided_slice %7 {offsets = [1, 0], sizes = [1, 4], strides = [1, 1]} : vector<8x4xf32> to vector<1x4xf32>
    %c0_16 = arith.constant 0 : index
    %c0_17 = arith.constant 0 : index
    %c0_18 = arith.constant 0 : index
    %20 = vector.load %arg9[%c0_16, %c0_17, %c0_18] : memref<2x4x8xf32, #tpu.memory_space<vmem>>, vector<1x4x8xf32>
    %21 = vector.shape_cast %20 : vector<1x4x8xf32> to vector<4x8xf32>
    %22 = vector.extract_strided_slice %8 {offsets = [0, 0], sizes = [1, 8], strides = [1, 1]} : vector<3x8xf32> to vector<1x8xf32>
    %c0_19 = arith.constant 0 : index
    %c0_20 = arith.constant 0 : index
    %23 = vector.load %arg10[%c0_19, %c0_20] : memref<9x8xf32, #tpu.memory_space<vmem>>, vector<9x8xf32>
    %24 = vector.extract_strided_slice %8 {offsets = [1, 0], sizes = [1, 8], strides = [1, 1]} : vector<3x8xf32> to vector<1x8xf32>
    %c0_i32_21 = arith.constant 0 : i32
    %25 = arith.cmpi eq, %1, %c0_i32_21 : i32
    %c1_i32_22 = arith.constant 1 : i32
    %26 = arith.cmpi eq, %1, %c1_i32_22 : i32
    %cst = arith.constant dense<0.000000e+00> : vector<160xf32>
    %27 = vector.multi_reduction <add>, %15, %cst [1] : vector<160x4xf32> to vector<160xf32>
    %28 = vector.shape_cast %27 : vector<160xf32> to vector<160x1xf32>
    %cst_23 = arith.constant 4.000000e+00 : f32
    %29 = vector.broadcast %cst_23 : f32 to vector<160x1xf32>
    %30 = arith.divf %28, %29 : vector<160x1xf32>
    %31 = vector.broadcast %30 : vector<160x1xf32> to vector<160x4xf32>
    %32 = arith.subf %15, %31 : vector<160x4xf32>
    %33 = arith.mulf %32, %32 : vector<160x4xf32>
    %cst_24 = arith.constant dense<0.000000e+00> : vector<160xf32>
    %34 = vector.multi_reduction <add>, %33, %cst_24 [1] : vector<160x4xf32> to vector<160xf32>
    %35 = vector.shape_cast %34 : vector<160xf32> to vector<160x1xf32>
    %cst_25 = arith.constant 4.000000e+00 : f32
    %36 = vector.broadcast %cst_25 : f32 to vector<160x1xf32>
    %37 = arith.divf %35, %36 : vector<160x1xf32>
    %cst_26 = arith.constant 9.99999974E-6 : f32
    %38 = vector.broadcast %cst_26 : f32 to vector<160x1xf32>
    %39 = arith.addf %37, %38 : vector<160x1xf32>
    %40 = math.rsqrt %39 : vector<160x1xf32>
    %41 = vector.broadcast %40 : vector<160x1xf32> to vector<160x4xf32>
    %42 = arith.mulf %32, %41 : vector<160x4xf32>
    %43 = vector.broadcast %18 : vector<1x4xf32> to vector<160x4xf32>
    %44 = arith.mulf %42, %43 : vector<160x4xf32>
    %45 = vector.broadcast %19 : vector<1x4xf32> to vector<160x4xf32>
    %46 = arith.addf %44, %45 : vector<160x4xf32>
    %cst_27 = arith.constant 1.000000e+00 : f32
    %47 = vector.broadcast %cst_27 : f32 to vector<1x4xf32>
    %48 = arith.addf %17, %47 : vector<1x4xf32>
    %49 = vector.broadcast %48 : vector<1x4xf32> to vector<160x4xf32>
    %50 = arith.mulf %46, %49 : vector<160x4xf32>
    %51 = vector.broadcast %16 : vector<1x4xf32> to vector<160x4xf32>
    %52 = arith.addf %50, %51 : vector<160x4xf32>
    %cst_28 = arith.constant dense<0.000000e+00> : vector<160x8xf32>
    %53 = tpu.matmul %52, %21, %cst_28 {dimension_numbers = #tpu.dot_dimension_numbers<[1], [0], [0], [1], [0, 0, 1, 1], [], []>} : vector<160x4xf32>, vector<4x8xf32>, vector<160x8xf32> -> vector<160x8xf32>
    %54 = vector.broadcast %22 : vector<1x8xf32> to vector<160x8xf32>
    %55 = arith.addf %53, %54 : vector<160x8xf32>
    %56 = tpu.iota {dimensions = array<i32: 0>} : vector<160x1xi32>
    %c16_i32 = arith.constant 16 : i32
    %57 = vector.broadcast %c16_i32 : i32 to vector<160x1xi32>
    %58 = arith.cmpi slt, %56, %57 : vector<160x1xi32>
    %59 = vector.broadcast %25 : i1 to vector<160x1xi1>
    %60 = arith.andi %59, %58 : vector<160x1xi1>
    %c144_i32 = arith.constant 144 : i32
    %61 = vector.broadcast %c144_i32 : i32 to vector<160x1xi32>
    %62 = arith.cmpi sge, %56, %61 : vector<160x1xi32>
    %63 = vector.broadcast %26 : i1 to vector<160x1xi1>
    %64 = arith.andi %63, %62 : vector<160x1xi1>
    %65 = arith.ori %60, %64 : vector<160x1xi1>
    %cst_29 = arith.constant 0.000000e+00 : f32
    %66 = vector.shape_cast %65 : vector<160x1xi1> to vector<160x1xi1>
    %67 = vector.broadcast %66 : vector<160x1xi1> to vector<160x8xi1>
    %68 = vector.broadcast %cst_29 : f32 to vector<160x8xf32>
    %69 = arith.select %67, %68, %55 : vector<160x8xi1>, vector<160x8xf32>
    %70 = tpu.iota {dimensions = array<i32: 0>} : vector<160x1xi32>
    %c16_i32_30 = arith.constant 16 : i32
    %c0_i32_31 = arith.constant 0 : i32
    %71 = arith.cmpi eq, %c16_i32_30, %c0_i32_31 : i32
    %c1_i32_32 = arith.constant 1 : i32
    %72 = arith.select %71, %c1_i32_32, %c16_i32_30 : i32
    %73 = vector.broadcast %72 : i32 to vector<160x1xi32>
    %74 = arith.remsi %70, %73 : vector<160x1xi32>
    %c0_i32_33 = arith.constant 0 : i32
    %75 = vector.broadcast %c0_i32_33 : i32 to vector<160x1xi32>
    %76 = arith.cmpi ne, %74, %75 : vector<160x1xi32>
    %c0_i32_34 = arith.constant 0 : i32
    %77 = vector.broadcast %c0_i32_34 : i32 to vector<160x1xi32>
    %78 = arith.cmpi slt, %74, %77 : vector<160x1xi32>
    %c0_i32_35 = arith.constant 0 : i32
    %79 = arith.cmpi slt, %72, %c0_i32_35 : i32
    %80 = vector.broadcast %79 : i1 to vector<160x1xi1>
    %81 = vector.broadcast %80 : vector<160x1xi1> to vector<160x1xi1>
    %82 = arith.xori %78, %81 : vector<160x1xi1>
    %83 = arith.andi %82, %76 : vector<160x1xi1>
    %84 = vector.broadcast %72 : i32 to vector<160x1xi32>
    %85 = arith.addi %74, %84 : vector<160x1xi32>
    %86 = arith.select %83, %85, %74 : vector<160x1xi1>, vector<160x1xi32>
    %c0_i32_36 = arith.constant 0 : i32
    %87 = vector.broadcast %c0_i32_36 : i32 to vector<160x1xi32>
    %88 = arith.cmpi eq, %86, %87 : vector<160x1xi32>
    %c1_i32_37 = arith.constant 1 : i32
    %89 = tpu.dynamic_rotate %69 by %c1_i32_37 dim 0 : vector<160x8xf32>, i32 -> vector<160x8xf32>
    %cst_38 = arith.constant 0.000000e+00 : f32
    %90 = vector.shape_cast %88 : vector<160x1xi1> to vector<160x1xi1>
    %91 = vector.broadcast %90 : vector<160x1xi1> to vector<160x8xi1>
    %92 = vector.broadcast %cst_38 : f32 to vector<160x8xf32>
    %93 = arith.select %91, %92, %89 : vector<160x8xi1>, vector<160x8xf32>
    %c15_i32 = arith.constant 15 : i32
    %94 = vector.broadcast %c15_i32 : i32 to vector<160x1xi32>
    %95 = arith.cmpi eq, %86, %94 : vector<160x1xi32>
    %c159_i32 = arith.constant 159 : i32
    %96 = tpu.dynamic_rotate %69 by %c159_i32 dim 0 : vector<160x8xf32>, i32 -> vector<160x8xf32>
    %cst_39 = arith.constant 0.000000e+00 : f32
    %97 = vector.shape_cast %95 : vector<160x1xi1> to vector<160x1xi1>
    %98 = vector.broadcast %97 : vector<160x1xi1> to vector<160x8xi1>
    %99 = vector.broadcast %cst_39 : f32 to vector<160x8xf32>
    %100 = arith.select %98, %99, %96 : vector<160x8xi1>, vector<160x8xf32>
    %cst_40 = arith.constant 0.000000e+00 : f32
    %101 = vector.broadcast %cst_40 : f32 to vector<128x8xf32>
    %102 = vector.extract_strided_slice %93 {offsets = [0, 0], sizes = [128, 8], strides = [1, 1]} : vector<160x8xf32> to vector<128x8xf32>
    %103 = vector.extract_strided_slice %23 {offsets = [0, 0], sizes = [1, 8], strides = [1, 1]} : vector<9x8xf32> to vector<1x8xf32>
    %104 = vector.broadcast %103 : vector<1x8xf32> to vector<128x8xf32>
    %105 = arith.mulf %102, %104 : vector<128x8xf32>
    %106 = arith.addf %101, %105 : vector<128x8xf32>
    %107 = vector.extract_strided_slice %69 {offsets = [0, 0], sizes = [128, 8], strides = [1, 1]} : vector<160x8xf32> to vector<128x8xf32>
    %108 = vector.extract_strided_slice %23 {offsets = [1, 0], sizes = [1, 8], strides = [1, 1]} : vector<9x8xf32> to vector<1x8xf32>
    %109 = vector.broadcast %108 : vector<1x8xf32> to vector<128x8xf32>
    %110 = arith.mulf %107, %109 : vector<128x8xf32>
    %111 = arith.addf %106, %110 : vector<128x8xf32>
    %112 = vector.extract_strided_slice %100 {offsets = [0, 0], sizes = [128, 8], strides = [1, 1]} : vector<160x8xf32> to vector<128x8xf32>
    %113 = vector.extract_strided_slice %23 {offsets = [2, 0], sizes = [1, 8], strides = [1, 1]} : vector<9x8xf32> to vector<1x8xf32>
    %114 = vector.broadcast %113 : vector<1x8xf32> to vector<128x8xf32>
    %115 = arith.mulf %112, %114 : vector<128x8xf32>
    %116 = arith.addf %111, %115 : vector<128x8xf32>
    %117 = vector.extract_strided_slice %93 {offsets = [16, 0], sizes = [128, 8], strides = [1, 1]} : vector<160x8xf32> to vector<128x8xf32>
    %118 = vector.extract_strided_slice %23 {offsets = [3, 0], sizes = [1, 8], strides = [1, 1]} : vector<9x8xf32> to vector<1x8xf32>
    %119 = vector.broadcast %118 : vector<1x8xf32> to vector<128x8xf32>
    %120 = arith.mulf %117, %119 : vector<128x8xf32>
    %121 = arith.addf %116, %120 : vector<128x8xf32>
    %122 = vector.extract_strided_slice %69 {offsets = [16, 0], sizes = [128, 8], strides = [1, 1]} : vector<160x8xf32> to vector<128x8xf32>
    %123 = vector.extract_strided_slice %23 {offsets = [4, 0], sizes = [1, 8], strides = [1, 1]} : vector<9x8xf32> to vector<1x8xf32>
    %124 = vector.broadcast %123 : vector<1x8xf32> to vector<128x8xf32>
    %125 = arith.mulf %122, %124 : vector<128x8xf32>
    %126 = arith.addf %121, %125 : vector<128x8xf32>
    %127 = vector.extract_strided_slice %100 {offsets = [16, 0], sizes = [128, 8], strides = [1, 1]} : vector<160x8xf32> to vector<128x8xf32>
    %128 = vector.extract_strided_slice %23 {offsets = [5, 0], sizes = [1, 8], strides = [1, 1]} : vector<9x8xf32> to vector<1x8xf32>
    %129 = vector.broadcast %128 : vector<1x8xf32> to vector<128x8xf32>
    %130 = arith.mulf %127, %129 : vector<128x8xf32>
    %131 = arith.addf %126, %130 : vector<128x8xf32>
    %132 = vector.extract_strided_slice %93 {offsets = [32, 0], sizes = [128, 8], strides = [1, 1]} : vector<160x8xf32> to vector<128x8xf32>
    %133 = vector.extract_strided_slice %23 {offsets = [6, 0], sizes = [1, 8], strides = [1, 1]} : vector<9x8xf32> to vector<1x8xf32>
    %134 = vector.broadcast %133 : vector<1x8xf32> to vector<128x8xf32>
    %135 = arith.mulf %132, %134 : vector<128x8xf32>
    %136 = arith.addf %131, %135 : vector<128x8xf32>
    %137 = vector.extract_strided_slice %69 {offsets = [32, 0], sizes = [128, 8], strides = [1, 1]} : vector<160x8xf32> to vector<128x8xf32>
    %138 = vector.extract_strided_slice %23 {offsets = [7, 0], sizes = [1, 8], strides = [1, 1]} : vector<9x8xf32> to vector<1x8xf32>
    %139 = vector.broadcast %138 : vector<1x8xf32> to vector<128x8xf32>
    %140 = arith.mulf %137, %139 : vector<128x8xf32>
    %141 = arith.addf %136, %140 : vector<128x8xf32>
    %142 = vector.extract_strided_slice %100 {offsets = [32, 0], sizes = [128, 8], strides = [1, 1]} : vector<160x8xf32> to vector<128x8xf32>
    %143 = vector.extract_strided_slice %23 {offsets = [8, 0], sizes = [1, 8], strides = [1, 1]} : vector<9x8xf32> to vector<1x8xf32>
    %144 = vector.broadcast %143 : vector<1x8xf32> to vector<128x8xf32>
    %145 = arith.mulf %142, %144 : vector<128x8xf32>
    %146 = arith.addf %141, %145 : vector<128x8xf32>
    %147 = vector.broadcast %24 : vector<1x8xf32> to vector<128x8xf32>
    %148 = arith.addf %146, %147 : vector<128x8xf32>
    %149 = vector.extract_strided_slice %148 {offsets = [0, 0], sizes = [128, 4], strides = [1, 1]} : vector<128x8xf32> to vector<128x4xf32>
    %150 = vector.extract_strided_slice %148 {offsets = [0, 4], sizes = [128, 4], strides = [1, 1]} : vector<128x8xf32> to vector<128x4xf32>
    %151 = arith.mulf %149, %150 : vector<128x4xf32>
    %c0_41 = arith.constant 0 : index
    %c0_42 = arith.constant 0 : index
    %c0_43 = arith.constant 0 : index
    %152 = vector.load %arg11[%c0_41, %c0_42, %c0_43] : memref<1x1x4xf32, #tpu.memory_space<vmem>>, vector<1x1x4xf32>
    %153 = vector.shape_cast %152 : vector<1x1x4xf32> to vector<1x4xf32>
    %cst_44 = arith.constant dense<0.000000e+00> : vector<4xf32>
    %154 = vector.multi_reduction <add>, %151, %cst_44 [0] : vector<128x4xf32> to vector<4xf32>
    %155 = vector.shape_cast %154 : vector<4xf32> to vector<1x4xf32>
    %156 = arith.addf %153, %155 : vector<1x4xf32>
    %c0_45 = arith.constant 0 : index
    %c0_46 = arith.constant 0 : index
    %c0_47 = arith.constant 0 : index
    %157 = vector.load %arg11[%c0_45, %c0_46, %c0_47] : memref<1x1x4xf32, #tpu.memory_space<vmem>>, vector<1x1x4xf32>
    %158 = vector.shape_cast %157 : vector<1x1x4xf32> to vector<1x4xf32>
    %159 = vector.shape_cast %156 : vector<1x4xf32> to vector<1x1x4xf32>
    tpu.vector_store %arg11[%c0_45, %c0_46, %c0_47], %159 {strides = array<i32>} : memref<1x1x4xf32, #tpu.memory_space<vmem>>, vector<1x1x4xf32>,
    return
  }
  func.func @transform_0(%arg0: i32, %arg1: i32, %arg2: i32) -> (i32, i32, i32) {
    %c1_i32 = arith.constant 1 : i32
    %0 = arith.muli %arg1, %c1_i32 : i32
    %1 = arith.addi %0, %arg2 : i32
    %c0_i32 = arith.constant 0 : i32
    %c0_i32_0 = arith.constant 0 : i32
    return %arg0, %1, %c0_i32 : i32, i32, i32
  }
  func.func @transform_1(%arg0: i32, %arg1: i32, %arg2: i32) -> (i32, i32, i32) {
    %c1_i32 = arith.constant 1 : i32
    %0 = arith.muli %arg1, %c1_i32 : i32
    %1 = arith.addi %0, %arg2 : i32
    %c8_i32 = arith.constant 8 : i32
    %2 = arith.muli %1, %c8_i32 : i32
    %c1_i32_0 = arith.constant 1 : i32
    %3 = arith.subi %2, %c1_i32_0 : i32
    %c0_i32 = arith.constant 0 : i32
    %4 = arith.maxsi %3, %c0_i32 : i32
    %c0_i32_1 = arith.constant 0 : i32
    %c0_i32_2 = arith.constant 0 : i32
    return %arg0, %4, %c0_i32_1 : i32, i32, i32
  }
  func.func @transform_2(%arg0: i32, %arg1: i32, %arg2: i32) -> (i32, i32, i32) {
    %c1_i32 = arith.constant 1 : i32
    %0 = arith.muli %arg1, %c1_i32 : i32
    %1 = arith.addi %0, %arg2 : i32
    %c1_i32_0 = arith.constant 1 : i32
    %2 = arith.addi %1, %c1_i32_0 : i32
    %c8_i32 = arith.constant 8 : i32
    %3 = arith.muli %2, %c8_i32 : i32
    %c15_i32 = arith.constant 15 : i32
    %4 = arith.minsi %3, %c15_i32 : i32
    %c0_i32 = arith.constant 0 : i32
    %c0_i32_1 = arith.constant 0 : i32
    return %arg0, %4, %c0_i32 : i32, i32, i32
  }
  func.func @transform_3(%arg0: i32, %arg1: i32, %arg2: i32) -> (i32, i32, i32) {
    %c0_i32 = arith.constant 0 : i32
    %c0_i32_0 = arith.constant 0 : i32
    %c0_i32_1 = arith.constant 0 : i32
    return %arg0, %c0_i32, %c0_i32_0 : i32, i32, i32
  }
  func.func @transform_4(%arg0: i32, %arg1: i32, %arg2: i32) -> (i32, i32) {
    %c0_i32 = arith.constant 0 : i32
    %c0_i32_0 = arith.constant 0 : i32
    %c0_i32_1 = arith.constant 0 : i32
    return %c0_i32, %c0_i32_0 : i32, i32
  }
  func.func @transform_5(%arg0: i32, %arg1: i32, %arg2: i32) -> (i32, i32) {
    %c0_i32 = arith.constant 0 : i32
    %c0_i32_0 = arith.constant 0 : i32
    %c0_i32_1 = arith.constant 0 : i32
    return %c0_i32, %c0_i32_0 : i32, i32
  }
  func.func @transform_6(%arg0: i32, %arg1: i32, %arg2: i32) -> (i32, i32, i32) {
    %c0_i32 = arith.constant 0 : i32
    %c0_i32_0 = arith.constant 0 : i32
    %c0_i32_1 = arith.constant 0 : i32
    %c0_i32_2 = arith.constant 0 : i32
    return %c0_i32, %c0_i32_0, %c0_i32_1 : i32, i32, i32
  }
  func.func @transform_7(%arg0: i32, %arg1: i32, %arg2: i32) -> (i32, i32) {
    %c0_i32 = arith.constant 0 : i32
    %c0_i32_0 = arith.constant 0 : i32
    %c0_i32_1 = arith.constant 0 : i32
    return %c0_i32, %c0_i32_0 : i32, i32
  }
  func.func @transform_8(%arg0: i32, %arg1: i32, %arg2: i32) -> (i32, i32, i32) {
    %c2_i32 = arith.constant 2 : i32
    %0 = arith.muli %arg0, %c2_i32 : i32
    %1 = arith.addi %0, %arg1 : i32
    %c0_i32 = arith.constant 0 : i32
    %c0_i32_0 = arith.constant 0 : i32
    %c0_i32_1 = arith.constant 0 : i32
    return %1, %c0_i32, %c0_i32_0 : i32, i32, i32
  }
}

module attributes {stable_mosaic.version = 11 : i64} {
  func.func @_nafblock_kernel(%arg0: i32, %arg1: i32, %arg2: memref<1x128x4xf32, #tpu.memory_space<vmem>>, %arg3: memref<1x16x4xf32, #tpu.memory_space<vmem>>, %arg4: memref<1x16x4xf32, #tpu.memory_space<vmem>>, %arg5: memref<1x4x4xf32, #tpu.memory_space<vmem>>, %arg6: memref<1x1x4xf32, #tpu.memory_space<vmem>>, %arg7: memref<8x4xf32, #tpu.memory_space<vmem>>, %arg8: memref<3x8xf32, #tpu.memory_space<vmem>>, %arg9: memref<2x4x8xf32, #tpu.memory_space<vmem>>, %arg10: memref<9x8xf32, #tpu.memory_space<vmem>>, %arg11: memref<2x4x4xf32, #tpu.memory_space<vmem>>, %arg12: memref<1x128x4xf32, #tpu.memory_space<vmem>>) attributes {dimension_semantics = [#tpu.dimension_semantics<parallel>, #tpu.dimension_semantics<parallel>], iteration_bounds = array<i64: 2, 2>, scalar_prefetch = 0 : i64, scratch_operands = 0 : i64, tpu.core_type = #tpu.core_type<tc>, window_params = [{transform_indices = @transform_0, window_bounds = array<i64: 1, 128, 4>}, {transform_indices = @transform_1, window_bounds = array<i64: 1, 16, 4>}, {transform_indices = @transform_2, window_bounds = array<i64: 1, 16, 4>}, {transform_indices = @transform_3, window_bounds = array<i64: 1, 4, 4>}, {transform_indices = @transform_4, window_bounds = array<i64: 1, 1, 4>}, {pipeline_mode = #tpu.pipeline_mode<synchronous>, transform_indices = @transform_5, window_bounds = array<i64: 8, 4>}, {pipeline_mode = #tpu.pipeline_mode<synchronous>, transform_indices = @transform_6, window_bounds = array<i64: 3, 8>}, {pipeline_mode = #tpu.pipeline_mode<synchronous>, transform_indices = @transform_7, window_bounds = array<i64: 2, 4, 8>}, {pipeline_mode = #tpu.pipeline_mode<synchronous>, transform_indices = @transform_8, window_bounds = array<i64: 9, 8>}, {pipeline_mode = #tpu.pipeline_mode<synchronous>, transform_indices = @transform_9, window_bounds = array<i64: 2, 4, 4>}, {transform_indices = @transform_10, window_bounds = array<i64: 1, 128, 4>}]} {
    %c0_i32 = arith.constant 0 : i32
    %0 = arith.cmpi eq, %arg1, %c0_i32 : i32
    %c1_i32 = arith.constant 1 : i32
    %1 = arith.cmpi eq, %arg1, %c1_i32 : i32
    %c0 = arith.constant 0 : index
    %c0_0 = arith.constant 0 : index
    %c0_1 = arith.constant 0 : index
    %2 = vector.load %arg5[%c0, %c0_0, %c0_1] : memref<1x4x4xf32, #tpu.memory_space<vmem>>, vector<1x4x4xf32>
    %3 = vector.shape_cast %2 : vector<1x4x4xf32> to vector<4x4xf32>
    %c0_2 = arith.constant 0 : index
    %c0_3 = arith.constant 0 : index
    %4 = vector.load %arg7[%c0_2, %c0_3] : memref<8x4xf32, #tpu.memory_space<vmem>>, vector<8x4xf32>
    %c0_4 = arith.constant 0 : index
    %c0_5 = arith.constant 0 : index
    %5 = vector.load %arg8[%c0_4, %c0_5] : memref<3x8xf32, #tpu.memory_space<vmem>>, vector<3x8xf32>
    %6 = vector.extract_strided_slice %4 {offsets = [0, 0], sizes = [1, 4], strides = [1, 1]} : vector<8x4xf32> to vector<1x4xf32>
    %7 = vector.extract_strided_slice %4 {offsets = [1, 0], sizes = [1, 4], strides = [1, 1]} : vector<8x4xf32> to vector<1x4xf32>
    %8 = vector.extract_strided_slice %4 {offsets = [2, 0], sizes = [1, 4], strides = [1, 1]} : vector<8x4xf32> to vector<1x4xf32>
    %9 = vector.extract_strided_slice %4 {offsets = [3, 0], sizes = [1, 4], strides = [1, 1]} : vector<8x4xf32> to vector<1x4xf32>
    %10 = vector.extract_strided_slice %4 {offsets = [4, 0], sizes = [1, 4], strides = [1, 1]} : vector<8x4xf32> to vector<1x4xf32>
    %11 = vector.extract_strided_slice %4 {offsets = [5, 0], sizes = [1, 4], strides = [1, 1]} : vector<8x4xf32> to vector<1x4xf32>
    %12 = vector.extract_strided_slice %4 {offsets = [6, 0], sizes = [1, 4], strides = [1, 1]} : vector<8x4xf32> to vector<1x4xf32>
    %13 = vector.extract_strided_slice %4 {offsets = [7, 0], sizes = [1, 4], strides = [1, 1]} : vector<8x4xf32> to vector<1x4xf32>
    %14 = vector.extract_strided_slice %5 {offsets = [0, 0], sizes = [1, 8], strides = [1, 1]} : vector<3x8xf32> to vector<1x8xf32>
    %15 = vector.extract_strided_slice %5 {offsets = [1, 0], sizes = [1, 8], strides = [1, 1]} : vector<3x8xf32> to vector<1x8xf32>
    %16 = vector.extract_strided_slice %5 {offsets = [2, 0], sizes = [1, 8], strides = [1, 1]} : vector<3x8xf32> to vector<1x8xf32>
    %c0_6 = arith.constant 0 : index
    %c0_7 = arith.constant 0 : index
    %c0_8 = arith.constant 0 : index
    %17 = vector.load %arg3[%c0_6, %c0_7, %c0_8] : memref<1x16x4xf32, #tpu.memory_space<vmem>>, vector<1x16x4xf32>
    %18 = vector.shape_cast %17 : vector<1x16x4xf32> to vector<16x4xf32>
    %c0_9 = arith.constant 0 : index
    %c0_10 = arith.constant 0 : index
    %c0_11 = arith.constant 0 : index
    %19 = vector.load %arg2[%c0_9, %c0_10, %c0_11] : memref<1x128x4xf32, #tpu.memory_space<vmem>>, vector<1x128x4xf32>
    %20 = vector.shape_cast %19 : vector<1x128x4xf32> to vector<128x4xf32>
    %c0_12 = arith.constant 0 : index
    %c0_13 = arith.constant 0 : index
    %c0_14 = arith.constant 0 : index
    %21 = vector.load %arg4[%c0_12, %c0_13, %c0_14] : memref<1x16x4xf32, #tpu.memory_space<vmem>>, vector<1x16x4xf32>
    %22 = vector.shape_cast %21 : vector<1x16x4xf32> to vector<16x4xf32>
    %23 = tpu.concatenate %18, %20, %22 in 0 : vector<16x4xf32>, vector<128x4xf32>, vector<16x4xf32> -> vector<160x4xf32>
    %24 = vector.extract_strided_slice %3 {offsets = [0, 0], sizes = [1, 4], strides = [1, 1]} : vector<4x4xf32> to vector<1x4xf32>
    %25 = vector.extract_strided_slice %3 {offsets = [1, 0], sizes = [1, 4], strides = [1, 1]} : vector<4x4xf32> to vector<1x4xf32>
    %c0_15 = arith.constant 0 : index
    %c0_16 = arith.constant 0 : index
    %c0_17 = arith.constant 0 : index
    %26 = vector.load %arg9[%c0_15, %c0_16, %c0_17] : memref<2x4x8xf32, #tpu.memory_space<vmem>>, vector<1x4x8xf32>
    %27 = vector.shape_cast %26 : vector<1x4x8xf32> to vector<4x8xf32>
    %c0_18 = arith.constant 0 : index
    %c0_19 = arith.constant 0 : index
    %28 = vector.load %arg10[%c0_18, %c0_19] : memref<9x8xf32, #tpu.memory_space<vmem>>, vector<9x8xf32>
    %cst = arith.constant dense<0.000000e+00> : vector<160xf32>
    %29 = vector.multi_reduction <add>, %23, %cst [1] : vector<160x4xf32> to vector<160xf32>
    %30 = vector.shape_cast %29 : vector<160xf32> to vector<160x1xf32>
    %cst_20 = arith.constant 4.000000e+00 : f32
    %31 = vector.broadcast %cst_20 : f32 to vector<160x1xf32>
    %32 = arith.divf %30, %31 : vector<160x1xf32>
    %33 = vector.broadcast %32 : vector<160x1xf32> to vector<160x4xf32>
    %34 = arith.subf %23, %33 : vector<160x4xf32>
    %35 = arith.mulf %34, %34 : vector<160x4xf32>
    %cst_21 = arith.constant dense<0.000000e+00> : vector<160xf32>
    %36 = vector.multi_reduction <add>, %35, %cst_21 [1] : vector<160x4xf32> to vector<160xf32>
    %37 = vector.shape_cast %36 : vector<160xf32> to vector<160x1xf32>
    %cst_22 = arith.constant 4.000000e+00 : f32
    %38 = vector.broadcast %cst_22 : f32 to vector<160x1xf32>
    %39 = arith.divf %37, %38 : vector<160x1xf32>
    %cst_23 = arith.constant 9.99999974E-6 : f32
    %40 = vector.broadcast %cst_23 : f32 to vector<160x1xf32>
    %41 = arith.addf %39, %40 : vector<160x1xf32>
    %42 = math.rsqrt %41 : vector<160x1xf32>
    %43 = vector.broadcast %42 : vector<160x1xf32> to vector<160x4xf32>
    %44 = arith.mulf %34, %43 : vector<160x4xf32>
    %45 = vector.broadcast %6 : vector<1x4xf32> to vector<160x4xf32>
    %46 = arith.mulf %44, %45 : vector<160x4xf32>
    %47 = vector.broadcast %7 : vector<1x4xf32> to vector<160x4xf32>
    %48 = arith.addf %46, %47 : vector<160x4xf32>
    %cst_24 = arith.constant 1.000000e+00 : f32
    %49 = vector.broadcast %cst_24 : f32 to vector<1x4xf32>
    %50 = arith.addf %25, %49 : vector<1x4xf32>
    %51 = vector.broadcast %50 : vector<1x4xf32> to vector<160x4xf32>
    %52 = arith.mulf %48, %51 : vector<160x4xf32>
    %53 = vector.broadcast %24 : vector<1x4xf32> to vector<160x4xf32>
    %54 = arith.addf %52, %53 : vector<160x4xf32>
    %cst_25 = arith.constant dense<0.000000e+00> : vector<160x8xf32>
    %55 = tpu.matmul %54, %27, %cst_25 {dimension_numbers = #tpu.dot_dimension_numbers<[1], [0], [0], [1], [0, 0, 1, 1], [], []>} : vector<160x4xf32>, vector<4x8xf32>, vector<160x8xf32> -> vector<160x8xf32>
    %56 = vector.broadcast %14 : vector<1x8xf32> to vector<160x8xf32>
    %57 = arith.addf %55, %56 : vector<160x8xf32>
    %58 = tpu.iota {dimensions = array<i32: 0>} : vector<160x1xi32>
    %c16_i32 = arith.constant 16 : i32
    %59 = vector.broadcast %c16_i32 : i32 to vector<160x1xi32>
    %60 = arith.cmpi slt, %58, %59 : vector<160x1xi32>
    %61 = vector.broadcast %0 : i1 to vector<160x1xi1>
    %62 = arith.andi %61, %60 : vector<160x1xi1>
    %c144_i32 = arith.constant 144 : i32
    %63 = vector.broadcast %c144_i32 : i32 to vector<160x1xi32>
    %64 = arith.cmpi sge, %58, %63 : vector<160x1xi32>
    %65 = vector.broadcast %1 : i1 to vector<160x1xi1>
    %66 = arith.andi %65, %64 : vector<160x1xi1>
    %67 = arith.ori %62, %66 : vector<160x1xi1>
    %cst_26 = arith.constant 0.000000e+00 : f32
    %68 = vector.shape_cast %67 : vector<160x1xi1> to vector<160x1xi1>
    %69 = vector.broadcast %68 : vector<160x1xi1> to vector<160x8xi1>
    %70 = vector.broadcast %cst_26 : f32 to vector<160x8xf32>
    %71 = arith.select %69, %70, %57 : vector<160x8xi1>, vector<160x8xf32>
    %72 = tpu.iota {dimensions = array<i32: 0>} : vector<160x1xi32>
    %c16_i32_27 = arith.constant 16 : i32
    %c0_i32_28 = arith.constant 0 : i32
    %73 = arith.cmpi eq, %c16_i32_27, %c0_i32_28 : i32
    %c1_i32_29 = arith.constant 1 : i32
    %74 = arith.select %73, %c1_i32_29, %c16_i32_27 : i32
    %75 = vector.broadcast %74 : i32 to vector<160x1xi32>
    %76 = arith.remsi %72, %75 : vector<160x1xi32>
    %c0_i32_30 = arith.constant 0 : i32
    %77 = vector.broadcast %c0_i32_30 : i32 to vector<160x1xi32>
    %78 = arith.cmpi ne, %76, %77 : vector<160x1xi32>
    %c0_i32_31 = arith.constant 0 : i32
    %79 = vector.broadcast %c0_i32_31 : i32 to vector<160x1xi32>
    %80 = arith.cmpi slt, %76, %79 : vector<160x1xi32>
    %c0_i32_32 = arith.constant 0 : i32
    %81 = arith.cmpi slt, %74, %c0_i32_32 : i32
    %82 = vector.broadcast %81 : i1 to vector<160x1xi1>
    %83 = vector.broadcast %82 : vector<160x1xi1> to vector<160x1xi1>
    %84 = arith.xori %80, %83 : vector<160x1xi1>
    %85 = arith.andi %84, %78 : vector<160x1xi1>
    %86 = vector.broadcast %74 : i32 to vector<160x1xi32>
    %87 = arith.addi %76, %86 : vector<160x1xi32>
    %88 = arith.select %85, %87, %76 : vector<160x1xi1>, vector<160x1xi32>
    %c0_i32_33 = arith.constant 0 : i32
    %89 = vector.broadcast %c0_i32_33 : i32 to vector<160x1xi32>
    %90 = arith.cmpi eq, %88, %89 : vector<160x1xi32>
    %c1_i32_34 = arith.constant 1 : i32
    %91 = tpu.dynamic_rotate %71 by %c1_i32_34 dim 0 : vector<160x8xf32>, i32 -> vector<160x8xf32>
    %cst_35 = arith.constant 0.000000e+00 : f32
    %92 = vector.shape_cast %90 : vector<160x1xi1> to vector<160x1xi1>
    %93 = vector.broadcast %92 : vector<160x1xi1> to vector<160x8xi1>
    %94 = vector.broadcast %cst_35 : f32 to vector<160x8xf32>
    %95 = arith.select %93, %94, %91 : vector<160x8xi1>, vector<160x8xf32>
    %c15_i32 = arith.constant 15 : i32
    %96 = vector.broadcast %c15_i32 : i32 to vector<160x1xi32>
    %97 = arith.cmpi eq, %88, %96 : vector<160x1xi32>
    %c159_i32 = arith.constant 159 : i32
    %98 = tpu.dynamic_rotate %71 by %c159_i32 dim 0 : vector<160x8xf32>, i32 -> vector<160x8xf32>
    %cst_36 = arith.constant 0.000000e+00 : f32
    %99 = vector.shape_cast %97 : vector<160x1xi1> to vector<160x1xi1>
    %100 = vector.broadcast %99 : vector<160x1xi1> to vector<160x8xi1>
    %101 = vector.broadcast %cst_36 : f32 to vector<160x8xf32>
    %102 = arith.select %100, %101, %98 : vector<160x8xi1>, vector<160x8xf32>
    %cst_37 = arith.constant 0.000000e+00 : f32
    %103 = vector.broadcast %cst_37 : f32 to vector<128x8xf32>
    %104 = vector.extract_strided_slice %95 {offsets = [0, 0], sizes = [128, 8], strides = [1, 1]} : vector<160x8xf32> to vector<128x8xf32>
    %105 = vector.extract_strided_slice %28 {offsets = [0, 0], sizes = [1, 8], strides = [1, 1]} : vector<9x8xf32> to vector<1x8xf32>
    %106 = vector.broadcast %105 : vector<1x8xf32> to vector<128x8xf32>
    %107 = arith.mulf %104, %106 : vector<128x8xf32>
    %108 = arith.addf %103, %107 : vector<128x8xf32>
    %109 = vector.extract_strided_slice %71 {offsets = [0, 0], sizes = [128, 8], strides = [1, 1]} : vector<160x8xf32> to vector<128x8xf32>
    %110 = vector.extract_strided_slice %28 {offsets = [1, 0], sizes = [1, 8], strides = [1, 1]} : vector<9x8xf32> to vector<1x8xf32>
    %111 = vector.broadcast %110 : vector<1x8xf32> to vector<128x8xf32>
    %112 = arith.mulf %109, %111 : vector<128x8xf32>
    %113 = arith.addf %108, %112 : vector<128x8xf32>
    %114 = vector.extract_strided_slice %102 {offsets = [0, 0], sizes = [128, 8], strides = [1, 1]} : vector<160x8xf32> to vector<128x8xf32>
    %115 = vector.extract_strided_slice %28 {offsets = [2, 0], sizes = [1, 8], strides = [1, 1]} : vector<9x8xf32> to vector<1x8xf32>
    %116 = vector.broadcast %115 : vector<1x8xf32> to vector<128x8xf32>
    %117 = arith.mulf %114, %116 : vector<128x8xf32>
    %118 = arith.addf %113, %117 : vector<128x8xf32>
    %119 = vector.extract_strided_slice %95 {offsets = [16, 0], sizes = [128, 8], strides = [1, 1]} : vector<160x8xf32> to vector<128x8xf32>
    %120 = vector.extract_strided_slice %28 {offsets = [3, 0], sizes = [1, 8], strides = [1, 1]} : vector<9x8xf32> to vector<1x8xf32>
    %121 = vector.broadcast %120 : vector<1x8xf32> to vector<128x8xf32>
    %122 = arith.mulf %119, %121 : vector<128x8xf32>
    %123 = arith.addf %118, %122 : vector<128x8xf32>
    %124 = vector.extract_strided_slice %71 {offsets = [16, 0], sizes = [128, 8], strides = [1, 1]} : vector<160x8xf32> to vector<128x8xf32>
    %125 = vector.extract_strided_slice %28 {offsets = [4, 0], sizes = [1, 8], strides = [1, 1]} : vector<9x8xf32> to vector<1x8xf32>
    %126 = vector.broadcast %125 : vector<1x8xf32> to vector<128x8xf32>
    %127 = arith.mulf %124, %126 : vector<128x8xf32>
    %128 = arith.addf %123, %127 : vector<128x8xf32>
    %129 = vector.extract_strided_slice %102 {offsets = [16, 0], sizes = [128, 8], strides = [1, 1]} : vector<160x8xf32> to vector<128x8xf32>
    %130 = vector.extract_strided_slice %28 {offsets = [5, 0], sizes = [1, 8], strides = [1, 1]} : vector<9x8xf32> to vector<1x8xf32>
    %131 = vector.broadcast %130 : vector<1x8xf32> to vector<128x8xf32>
    %132 = arith.mulf %129, %131 : vector<128x8xf32>
    %133 = arith.addf %128, %132 : vector<128x8xf32>
    %134 = vector.extract_strided_slice %95 {offsets = [32, 0], sizes = [128, 8], strides = [1, 1]} : vector<160x8xf32> to vector<128x8xf32>
    %135 = vector.extract_strided_slice %28 {offsets = [6, 0], sizes = [1, 8], strides = [1, 1]} : vector<9x8xf32> to vector<1x8xf32>
    %136 = vector.broadcast %135 : vector<1x8xf32> to vector<128x8xf32>
    %137 = arith.mulf %134, %136 : vector<128x8xf32>
    %138 = arith.addf %133, %137 : vector<128x8xf32>
    %139 = vector.extract_strided_slice %71 {offsets = [32, 0], sizes = [128, 8], strides = [1, 1]} : vector<160x8xf32> to vector<128x8xf32>
    %140 = vector.extract_strided_slice %28 {offsets = [7, 0], sizes = [1, 8], strides = [1, 1]} : vector<9x8xf32> to vector<1x8xf32>
    %141 = vector.broadcast %140 : vector<1x8xf32> to vector<128x8xf32>
    %142 = arith.mulf %139, %141 : vector<128x8xf32>
    %143 = arith.addf %138, %142 : vector<128x8xf32>
    %144 = vector.extract_strided_slice %102 {offsets = [32, 0], sizes = [128, 8], strides = [1, 1]} : vector<160x8xf32> to vector<128x8xf32>
    %145 = vector.extract_strided_slice %28 {offsets = [8, 0], sizes = [1, 8], strides = [1, 1]} : vector<9x8xf32> to vector<1x8xf32>
    %146 = vector.broadcast %145 : vector<1x8xf32> to vector<128x8xf32>
    %147 = arith.mulf %144, %146 : vector<128x8xf32>
    %148 = arith.addf %143, %147 : vector<128x8xf32>
    %149 = vector.broadcast %15 : vector<1x8xf32> to vector<128x8xf32>
    %150 = arith.addf %148, %149 : vector<128x8xf32>
    %151 = vector.extract_strided_slice %150 {offsets = [0, 0], sizes = [128, 4], strides = [1, 1]} : vector<128x8xf32> to vector<128x4xf32>
    %152 = vector.extract_strided_slice %150 {offsets = [0, 4], sizes = [128, 4], strides = [1, 1]} : vector<128x8xf32> to vector<128x4xf32>
    %153 = arith.mulf %151, %152 : vector<128x4xf32>
    %c0_38 = arith.constant 0 : index
    %c0_39 = arith.constant 0 : index
    %c0_40 = arith.constant 0 : index
    %154 = vector.load %arg6[%c0_38, %c0_39, %c0_40] : memref<1x1x4xf32, #tpu.memory_space<vmem>>, vector<1x1x4xf32>
    %155 = vector.shape_cast %154 : vector<1x1x4xf32> to vector<1x4xf32>
    %156 = vector.broadcast %155 : vector<1x4xf32> to vector<128x4xf32>
    %157 = arith.mulf %153, %156 : vector<128x4xf32>
    %c0_41 = arith.constant 0 : index
    %c0_42 = arith.constant 0 : index
    %c0_43 = arith.constant 0 : index
    %158 = vector.load %arg11[%c0_41, %c0_42, %c0_43] : memref<2x4x4xf32, #tpu.memory_space<vmem>>, vector<1x4x4xf32>
    %159 = vector.shape_cast %158 : vector<1x4x4xf32> to vector<4x4xf32>
    %cst_44 = arith.constant dense<0.000000e+00> : vector<128x4xf32>
    %160 = tpu.matmul %157, %159, %cst_44 {dimension_numbers = #tpu.dot_dimension_numbers<[1], [0], [0], [1], [0, 0, 1, 1], [], []>} : vector<128x4xf32>, vector<4x4xf32>, vector<128x4xf32> -> vector<128x4xf32>
    %161 = vector.broadcast %10 : vector<1x4xf32> to vector<128x4xf32>
    %162 = arith.addf %160, %161 : vector<128x4xf32>
    %c0_45 = arith.constant 0 : index
    %c0_46 = arith.constant 0 : index
    %c0_47 = arith.constant 0 : index
    %163 = vector.load %arg2[%c0_45, %c0_46, %c0_47] : memref<1x128x4xf32, #tpu.memory_space<vmem>>, vector<1x128x4xf32>
    %164 = vector.shape_cast %163 : vector<1x128x4xf32> to vector<128x4xf32>
    %165 = vector.broadcast %12 : vector<1x4xf32> to vector<128x4xf32>
    %166 = arith.mulf %162, %165 : vector<128x4xf32>
    %167 = arith.addf %164, %166 : vector<128x4xf32>
    %cst_48 = arith.constant dense<0.000000e+00> : vector<128xf32>
    %168 = vector.multi_reduction <add>, %167, %cst_48 [1] : vector<128x4xf32> to vector<128xf32>
    %169 = vector.shape_cast %168 : vector<128xf32> to vector<128x1xf32>
    %cst_49 = arith.constant 4.000000e+00 : f32
    %170 = vector.broadcast %cst_49 : f32 to vector<128x1xf32>
    %171 = arith.divf %169, %170 : vector<128x1xf32>
    %172 = vector.broadcast %171 : vector<128x1xf32> to vector<128x4xf32>
    %173 = arith.subf %167, %172 : vector<128x4xf32>
    %174 = arith.mulf %173, %173 : vector<128x4xf32>
    %cst_50 = arith.constant dense<0.000000e+00> : vector<128xf32>
    %175 = vector.multi_reduction <add>, %174, %cst_50 [1] : vector<128x4xf32> to vector<128xf32>
    %176 = vector.shape_cast %175 : vector<128xf32> to vector<128x1xf32>
    %cst_51 = arith.constant 4.000000e+00 : f32
    %177 = vector.broadcast %cst_51 : f32 to vector<128x1xf32>
    %178 = arith.divf %176, %177 : vector<128x1xf32>
    %cst_52 = arith.constant 9.99999974E-6 : f32
    %179 = vector.broadcast %cst_52 : f32 to vector<128x1xf32>
    %180 = arith.addf %178, %179 : vector<128x1xf32>
    %181 = math.rsqrt %180 : vector<128x1xf32>
    %182 = vector.broadcast %181 : vector<128x1xf32> to vector<128x4xf32>
    %183 = arith.mulf %173, %182 : vector<128x4xf32>
    %184 = vector.broadcast %8 : vector<1x4xf32> to vector<128x4xf32>
    %185 = arith.mulf %183, %184 : vector<128x4xf32>
    %186 = vector.broadcast %9 : vector<1x4xf32> to vector<128x4xf32>
    %187 = arith.addf %185, %186 : vector<128x4xf32>
    %188 = vector.extract_strided_slice %3 {offsets = [3, 0], sizes = [1, 4], strides = [1, 1]} : vector<4x4xf32> to vector<1x4xf32>
    %cst_53 = arith.constant 1.000000e+00 : f32
    %189 = vector.broadcast %cst_53 : f32 to vector<1x4xf32>
    %190 = arith.addf %188, %189 : vector<1x4xf32>
    %191 = vector.broadcast %190 : vector<1x4xf32> to vector<128x4xf32>
    %192 = arith.mulf %187, %191 : vector<128x4xf32>
    %193 = vector.extract_strided_slice %3 {offsets = [2, 0], sizes = [1, 4], strides = [1, 1]} : vector<4x4xf32> to vector<1x4xf32>
    %194 = vector.broadcast %193 : vector<1x4xf32> to vector<128x4xf32>
    %195 = arith.addf %192, %194 : vector<128x4xf32>
    %c1 = arith.constant 1 : index
    %c0_54 = arith.constant 0 : index
    %c0_55 = arith.constant 0 : index
    %196 = vector.load %arg9[%c1, %c0_54, %c0_55] : memref<2x4x8xf32, #tpu.memory_space<vmem>>, vector<1x4x8xf32>
    %197 = vector.shape_cast %196 : vector<1x4x8xf32> to vector<4x8xf32>
    %cst_56 = arith.constant dense<0.000000e+00> : vector<128x8xf32>
    %198 = tpu.matmul %195, %197, %cst_56 {dimension_numbers = #tpu.dot_dimension_numbers<[1], [0], [0], [1], [0, 0, 1, 1], [], []>} : vector<128x4xf32>, vector<4x8xf32>, vector<128x8xf32> -> vector<128x8xf32>
    %199 = vector.broadcast %16 : vector<1x8xf32> to vector<128x8xf32>
    %200 = arith.addf %198, %199 : vector<128x8xf32>
    %201 = vector.extract_strided_slice %200 {offsets = [0, 0], sizes = [128, 4], strides = [1, 1]} : vector<128x8xf32> to vector<128x4xf32>
    %202 = vector.extract_strided_slice %200 {offsets = [0, 4], sizes = [128, 4], strides = [1, 1]} : vector<128x8xf32> to vector<128x4xf32>
    %203 = arith.mulf %201, %202 : vector<128x4xf32>
    %c1_57 = arith.constant 1 : index
    %c0_58 = arith.constant 0 : index
    %c0_59 = arith.constant 0 : index
    %204 = vector.load %arg11[%c1_57, %c0_58, %c0_59] : memref<2x4x4xf32, #tpu.memory_space<vmem>>, vector<1x4x4xf32>
    %205 = vector.shape_cast %204 : vector<1x4x4xf32> to vector<4x4xf32>
    %cst_60 = arith.constant dense<0.000000e+00> : vector<128x4xf32>
    %206 = tpu.matmul %203, %205, %cst_60 {dimension_numbers = #tpu.dot_dimension_numbers<[1], [0], [0], [1], [0, 0, 1, 1], [], []>} : vector<128x4xf32>, vector<4x4xf32>, vector<128x4xf32> -> vector<128x4xf32>
    %207 = vector.broadcast %11 : vector<1x4xf32> to vector<128x4xf32>
    %208 = arith.addf %206, %207 : vector<128x4xf32>
    %209 = vector.broadcast %13 : vector<1x4xf32> to vector<128x4xf32>
    %210 = arith.mulf %208, %209 : vector<128x4xf32>
    %211 = arith.addf %167, %210 : vector<128x4xf32>
    %c0_61 = arith.constant 0 : index
    %c0_62 = arith.constant 0 : index
    %c0_63 = arith.constant 0 : index
    %212 = vector.load %arg12[%c0_61, %c0_62, %c0_63] : memref<1x128x4xf32, #tpu.memory_space<vmem>>, vector<1x128x4xf32>
    %213 = vector.shape_cast %212 : vector<1x128x4xf32> to vector<128x4xf32>
    %214 = vector.shape_cast %211 : vector<128x4xf32> to vector<1x128x4xf32>
    tpu.vector_store %arg12[%c0_61, %c0_62, %c0_63], %214 {strides = array<i32>} : memref<1x128x4xf32, #tpu.memory_space<vmem>>, vector<1x128x4xf32>,
    return
  }
  func.func @transform_0(%arg0: i32, %arg1: i32) -> (i32, i32, i32) {
    %c0_i32 = arith.constant 0 : i32
    %c0_i32_0 = arith.constant 0 : i32
    return %arg0, %arg1, %c0_i32 : i32, i32, i32
  }
  func.func @transform_1(%arg0: i32, %arg1: i32) -> (i32, i32, i32) {
    %c8_i32 = arith.constant 8 : i32
    %0 = arith.muli %arg1, %c8_i32 : i32
    %c1_i32 = arith.constant 1 : i32
    %1 = arith.subi %0, %c1_i32 : i32
    %c0_i32 = arith.constant 0 : i32
    %2 = arith.maxsi %1, %c0_i32 : i32
    %c0_i32_0 = arith.constant 0 : i32
    %c0_i32_1 = arith.constant 0 : i32
    return %arg0, %2, %c0_i32_0 : i32, i32, i32
  }
  func.func @transform_2(%arg0: i32, %arg1: i32) -> (i32, i32, i32) {
    %c1_i32 = arith.constant 1 : i32
    %0 = arith.addi %arg1, %c1_i32 : i32
    %c8_i32 = arith.constant 8 : i32
    %1 = arith.muli %0, %c8_i32 : i32
    %c15_i32 = arith.constant 15 : i32
    %2 = arith.minsi %1, %c15_i32 : i32
    %c0_i32 = arith.constant 0 : i32
    %c0_i32_0 = arith.constant 0 : i32
    return %arg0, %2, %c0_i32 : i32, i32, i32
  }
  func.func @transform_3(%arg0: i32, %arg1: i32) -> (i32, i32, i32) {
    %c0_i32 = arith.constant 0 : i32
    %c0_i32_0 = arith.constant 0 : i32
    %c0_i32_1 = arith.constant 0 : i32
    return %arg0, %c0_i32, %c0_i32_0 : i32, i32, i32
  }
  func.func @transform_4(%arg0: i32, %arg1: i32) -> (i32, i32, i32) {
    %c0_i32 = arith.constant 0 : i32
    %c0_i32_0 = arith.constant 0 : i32
    %c0_i32_1 = arith.constant 0 : i32
    return %arg0, %c0_i32, %c0_i32_0 : i32, i32, i32
  }
  func.func @transform_5(%arg0: i32, %arg1: i32) -> (i32, i32) {
    %c0_i32 = arith.constant 0 : i32
    %c0_i32_0 = arith.constant 0 : i32
    %c0_i32_1 = arith.constant 0 : i32
    return %c0_i32, %c0_i32_0 : i32, i32
  }
  func.func @transform_6(%arg0: i32, %arg1: i32) -> (i32, i32) {
    %c0_i32 = arith.constant 0 : i32
    %c0_i32_0 = arith.constant 0 : i32
    %c0_i32_1 = arith.constant 0 : i32
    return %c0_i32, %c0_i32_0 : i32, i32
  }
  func.func @transform_7(%arg0: i32, %arg1: i32) -> (i32, i32, i32) {
    %c0_i32 = arith.constant 0 : i32
    %c0_i32_0 = arith.constant 0 : i32
    %c0_i32_1 = arith.constant 0 : i32
    %c0_i32_2 = arith.constant 0 : i32
    return %c0_i32, %c0_i32_0, %c0_i32_1 : i32, i32, i32
  }
  func.func @transform_8(%arg0: i32, %arg1: i32) -> (i32, i32) {
    %c0_i32 = arith.constant 0 : i32
    %c0_i32_0 = arith.constant 0 : i32
    %c0_i32_1 = arith.constant 0 : i32
    return %c0_i32, %c0_i32_0 : i32, i32
  }
  func.func @transform_9(%arg0: i32, %arg1: i32) -> (i32, i32, i32) {
    %c0_i32 = arith.constant 0 : i32
    %c0_i32_0 = arith.constant 0 : i32
    %c0_i32_1 = arith.constant 0 : i32
    %c0_i32_2 = arith.constant 0 : i32
    return %c0_i32, %c0_i32_0, %c0_i32_1 : i32, i32, i32
  }
  func.func @transform_10(%arg0: i32, %arg1: i32) -> (i32, i32, i32) {
    %c0_i32 = arith.constant 0 : i32
    %c0_i32_0 = arith.constant 0 : i32
    return %arg0, %arg1, %c0_i32 : i32, i32, i32
  }
}

</mosaic_0001>

<llo_original>
// kernel: _nafblock_jit.2
$region0: #{_nafblock_jit.2}
  #allocation0 [shape = 'u32[]', space=smem, size = 0x4, offset = 0x4, fixed_abs, tag = 'smem constant byte address 0x4 - core index']
  #allocation1 [shape = 'u32[144,128]{1,0:T(1,128)}', space=vmem, size = 0x12000, scoped, tag = 'internal scratch']
  %s0 = inlined_call_operand.vmem [shape: f32[2,256,4], index: 0, kind: input, shape index: {}, may-alias: {0,1,2}]
  %s1 = inlined_call_operand.vmem [shape: f32[2,256,4], index: 1, kind: input, shape index: {}, may-alias: {0,1,2}]
  %s2 = inlined_call_operand.vmem [shape: f32[2,256,4], index: 2, kind: input, shape index: {}, may-alias: {0,1,2}]
  %s3 = inlined_call_operand.vmem [shape: f32[2,4,4], index: 3, kind: input, shape index: {}]
  %s4 = inlined_call_operand.vmem [shape: f32[8,4], index: 4, kind: input, shape index: {}]
  %s5 = inlined_call_operand.vmem [shape: f32[3,8], index: 5, kind: input, shape index: {}]
  %s6 = inlined_call_operand.vmem [shape: f32[2,4,8], index: 6, kind: input, shape index: {}]
  %s7 = inlined_call_operand.vmem [shape: f32[9,8], index: 7, kind: input, shape index: {}]
  %s8 = inlined_call_operand.vmem [shape: f32[4,1,4], index: 8, kind: output, shape index: {}]
  %s9 = sld [smem:[#allocation0]]
  $region69: #{_nafblock_jit.2} parent=0
    _
  %s11 = ssub.s32 1, %s9
  %s12 = scalar_select 0, %s11, %s9
  loop: start=0, step=1, limit=6
  $region2: #{_nafblock_jit.2} parent=0 // loop_pre_header
    _
  $region3: #{_nafblock_jit.2} parent=0 // loop_header
    %s14 = sphi 0, %s18
    %p15 = scmp.ge.s32.totalorder %s14, 6
    %s21 = sphi 0, %s40
    %s22 = sphi 0, %s36
    %s23 = sphi 0, %s32
    %s24 = sphi 0, %s21
    %s25 = sphi 0, %s22
    %s26 = sphi 0, %s23
    %s27 = sphi 0, %s24
    %s28 = sphi 0, %s25
    %s29 = sphi 0, %s26
    %s47 = sphi 0, %s49
    %s50 = sphi 0, %s47
    %s51 = sphi 0, %s50
    %s67 = sphi 0, %s51
    %s85 = sphi 0, %s87
    %s88 = sphi 0, %s85
    %s89 = sphi 0, %s88
    %s105 = sphi 0, %s89
    %s123 = sphi 0, %s125
    %s126 = sphi 0, %s123
    %s127 = sphi 0, %s126
    %s143 = sphi 0, %s127
    %s149 = sphi 0, %s151
    %s152 = sphi 0, %s149
    %s153 = sphi 0, %s152
    %s169 = sphi 0, %s153
    %s173 = sphi 0, %s173
    %s175 = sphi 0, %s173
    %s176 = sphi 0, %s175
    %s190 = sphi 0, %s176
    %s194 = sphi 0, %s194
    %s196 = sphi 0, %s194
    %s197 = sphi 0, %s196
    %s211 = sphi 0, %s197
    %s215 = sphi 0, %s215
    %s217 = sphi 0, %s215
    %s218 = sphi 0, %s217
    %s232 = sphi 0, %s218
    %s236 = sphi 0, %s236
    %s238 = sphi 0, %s236
    %s239 = sphi 0, %s238
    %s253 = sphi 0, %s239
    %s263 = sphi 0, %s265
    %s266 = sphi 0, %s263
    %s267 = sphi 0, %s266
    %s283 = sphi 0, %s267
  $region4: #{_nafblock_jit.2} parent=0 // loop_header_branch
    %17 = sbr.rel (%p15) target = $region8
  $region5: #{_nafblock_jit.2} parent=0 // loop_body
    %s19 = ssub.s32 %s14, 1
    %s20 = ssub.s32 %s14, 2
    %s30 = sadd.s32 1, %s23
    %p31 = scmp.ge.s32.totalorder %s30, 1
    %s32 = scalar_select %p31, 0, %s30
    %s33 = sadd.s32 1, %s22
    %s34 = scalar_select %p31, %s33, %s22
    %p35 = scmp.ge.s32.totalorder %s34, 2
    %s36 = scalar_select %p35, 0, %s34
    %s37 = sadd.s32 1, %s21
    %s38 = scalar_select %p35, %s37, %s21
    %p39 = scmp.ge.s32.totalorder %s38, 2
    %s40 = scalar_select %p39, 0, %s38
    %s41 = sadd.s32 %s22, %s23
    %s42 = sadd.s32 %s36, %s32
    %s43 = ssub.s32 %s21, %s40
    %s44 = ssub.s32 %s41, %s42
    %s45 = sor.u32 %s43, %s44
    %p46 = scmp.eq.s32.totalorder %s45, 0
    %s48 = sadd.s32 %s47, 1
    %s49 = scalar_select %p46, %s47, %s48
    %p52 = pneg %p46
    %p53 = scmp.eq.s32.totalorder %s14, 3
    %p54 = por %p52, %p53
    %p55 = scmp.ne.s32.totalorder %s47, %s50
    %p56 = scmp.eq.s32.totalorder %s14, 0
    %p57 = por %p55, %p56
    %p58 = scmp.ne.s32.totalorder %s47, %s50
    %p59 = scmp.eq.s32.totalorder %s19, 3
    %p60 = por %p58, %p59
    %p61 = scmp.ne.s32.totalorder %s50, %s51
    %p62 = scmp.eq.s32.totalorder %s19, 0
    %p63 = por %p61, %p62
    %p64 = scmp.ne.s32.totalorder %s50, %s51
    %p65 = scmp.eq.s32.totalorder %s20, 3
    %p66 = por %p64, %p65
    %p68 = scmp.ne.s32.totalorder %s51, %s67
    %p69 = scmp.eq.s32.totalorder %s20, 0
    %p70 = por %p68, %p69
    %s71 = sadd.s32 %s22, %s23
    %s72 = smul.u32 %s71, 8
    %s73 = ssub.s32 %s72, 1
    %p74 = scmp.gt.s32.totalorder %s73, 0
    %s75 = scalar_select %p74, %s73, 0
    %s76 = sadd.s32 %s36, %s32
    %s77 = smul.u32 %s76, 8
    %s78 = ssub.s32 %s77, 1
    %p79 = scmp.gt.s32.totalorder %s78, 0
    %s80 = scalar_select %p79, %s78, 0
    %s81 = ssub.s32 %s21, %s40
    %s82 = ssub.s32 %s75, %s80
    %s83 = sor.u32 %s81, %s82
    %p84 = scmp.eq.s32.totalorder %s83, 0
    %s86 = sadd.s32 %s85, 1
    %s87 = scalar_select %p84, %s85, %s86
    %p90 = pneg %p84
    %p91 = scmp.eq.s32.totalorder %s14, 3
    %p92 = por %p90, %p91
    %p93 = scmp.ne.s32.totalorder %s85, %s88
    %p94 = scmp.eq.s32.totalorder %s14, 0
    %p95 = por %p93, %p94
    %p96 = scmp.ne.s32.totalorder %s85, %s88
    %p97 = scmp.eq.s32.totalorder %s19, 3
    %p98 = por %p96, %p97
    %p99 = scmp.ne.s32.totalorder %s88, %s89
    %p100 = scmp.eq.s32.totalorder %s19, 0
    %p101 = por %p99, %p100
    %p102 = scmp.ne.s32.totalorder %s88, %s89
    %p103 = scmp.eq.s32.totalorder %s20, 3
    %p104 = por %p102, %p103
    %p106 = scmp.ne.s32.totalorder %s89, %s105
    %p107 = scmp.eq.s32.totalorder %s20, 0
    %p108 = por %p106, %p107
    %s109 = sadd.s32 %s22, %s23
    %s110 = sadd.s32 %s109, 1
    %s111 = smul.u32 %s110, 8
    %p112 = scmp.lt.s32.totalorder %s111, 15
    %s113 = scalar_select %p112, %s111, 15
    %s114 = sadd.s32 %s36, %s32
    %s115 = sadd.s32 %s114, 1
    %s116 = smul.u32 %s115, 8
    %p117 = scmp.lt.s32.totalorder %s116, 15
    %s118 = scalar_select %p117, %s116, 15
    %s119 = ssub.s32 %s21, %s40
    %s120 = ssub.s32 %s113, %s118
    %s121 = sor.u32 %s119, %s120
    %p122 = scmp.eq.s32.totalorder %s121, 0
    %s124 = sadd.s32 %s123, 1
    %s125 = scalar_select %p122, %s123, %s124
    %p128 = pneg %p122
    %p129 = scmp.eq.s32.totalorder %s14, 3
    %p130 = por %p128, %p129
    %p131 = scmp.ne.s32.totalorder %s123, %s126
    %p132 = scmp.eq.s32.totalorder %s14, 0
    %p133 = por %p131, %p132
    %p134 = scmp.ne.s32.totalorder %s123, %s126
    %p135 = scmp.eq.s32.totalorder %s19, 3
    %p136 = por %p134, %p135
    %p137 = scmp.ne.s32.totalorder %s126, %s127
    %p138 = scmp.eq.s32.totalorder %s19, 0
    %p139 = por %p137, %p138
    %p140 = scmp.ne.s32.totalorder %s126, %s127
    %p141 = scmp.eq.s32.totalorder %s20, 3
    %p142 = por %p140, %p141
    %p144 = scmp.ne.s32.totalorder %s127, %s143
    %p145 = scmp.eq.s32.totalorder %s20, 0
    %p146 = por %p144, %p145
    %s147 = ssub.s32 %s21, %s40
    %p148 = scmp.eq.s32.totalorder %s147, 0
    %s150 = sadd.s32 %s149, 1
    %s151 = scalar_select %p148, %s149, %s150
    %p154 = pneg %p148
    %p155 = scmp.eq.s32.totalorder %s14, 3
    %p156 = por %p154, %p155
    %p157 = scmp.ne.s32.totalorder %s149, %s152
    %p158 = scmp.eq.s32.totalorder %s14, 0
    %p159 = por %p157, %p158
    %p160 = scmp.ne.s32.totalorder %s149, %s152
    %p161 = scmp.eq.s32.totalorder %s19, 3
    %p162 = por %p160, %p161
    %p163 = scmp.ne.s32.totalorder %s152, %s153
    %p164 = scmp.eq.s32.totalorder %s19, 0
    %p165 = por %p163, %p164
    %p166 = scmp.ne.s32.totalorder %s152, %s153
    %p167 = scmp.eq.s32.totalorder %s20, 3
    %p168 = por %p166, %p167
    %p170 = scmp.ne.s32.totalorder %s153, %s169
    %p171 = scmp.eq.s32.totalorder %s20, 0
    %p172 = por %p170, %p171
    %s174 = sadd.s32 %s173, 1
    %p177 = scmp.eq.s32.totalorder %s14, 3
    %p178 = scmp.ne.s32.totalorder %s173, %s175
    %p179 = scmp.eq.s32.totalorder %s14, 0
    %p180 = por %p178, %p179
    %p181 = scmp.ne.s32.totalorder %s173, %s175
    %p182 = scmp.eq.s32.totalorder %s19, 3
    %p183 = por %p181, %p182
    %p184 = scmp.ne.s32.totalorder %s175, %s176
    %p185 = scmp.eq.s32.totalorder %s19, 0
    %p186 = por %p184, %p185
    %p187 = scmp.ne.s32.totalorder %s175, %s176
    %p188 = scmp.eq.s32.totalorder %s20, 3
    %p189 = por %p187, %p188
    %p191 = scmp.ne.s32.totalorder %s176, %s190
    %p192 = scmp.eq.s32.totalorder %s20, 0
    %p193 = por %p191, %p192
    %s195 = sadd.s32 %s194, 1
    %p198 = scmp.eq.s32.totalorder %s14, 3
    %p199 = scmp.ne.s32.totalorder %s194, %s196
    %p200 = scmp.eq.s32.totalorder %s14, 0
    %p201 = por %p199, %p200
    %p202 = scmp.ne.s32.totalorder %s194, %s196
    %p203 = scmp.eq.s32.totalorder %s19, 3
    %p204 = por %p202, %p203
    %p205 = scmp.ne.s32.totalorder %s196, %s197
    %p206 = scmp.eq.s32.totalorder %s19, 0
    %p207 = por %p205, %p206
    %p208 = scmp.ne.s32.totalorder %s196, %s197
    %p209 = scmp.eq.s32.totalorder %s20, 3
    %p210 = por %p208, %p209
    %p212 = scmp.ne.s32.totalorder %s197, %s211
    %p213 = scmp.eq.s32.totalorder %s20, 0
    %p214 = por %p212, %p213
    %s216 = sadd.s32 %s215, 1
    %p219 = scmp.eq.s32.totalorder %s14, 3
    %p220 = scmp.ne.s32.totalorder %s215, %s217
    %p221 = scmp.eq.s32.totalorder %s14, 0
    %p222 = por %p220, %p221
    %p223 = scmp.ne.s32.totalorder %s215, %s217
    %p224 = scmp.eq.s32.totalorder %s19, 3
    %p225 = por %p223, %p224
    %p226 = scmp.ne.s32.totalorder %s217, %s218
    %p227 = scmp.eq.s32.totalorder %s19, 0
    %p228 = por %p226, %p227
    %p229 = scmp.ne.s32.totalorder %s217, %s218
    %p230 = scmp.eq.s32.totalorder %s20, 3
    %p231 = por %p229, %p230
    %p233 = scmp.ne.s32.totalorder %s218, %s232
    %p234 = scmp.eq.s32.totalorder %s20, 0
    %p235 = por %p233, %p234
    %s237 = sadd.s32 %s236, 1
    %p240 = scmp.eq.s32.totalorder %s14, 3
    %p241 = scmp.ne.s32.totalorder %s236, %s238
    %p242 = scmp.eq.s32.totalorder %s14, 0
    %p243 = por %p241, %p242
    %p244 = scmp.ne.s32.totalorder %s236, %s238
    %p245 = scmp.eq.s32.totalorder %s19, 3
    %p246 = por %p244, %p245
    %p247 = scmp.ne.s32.totalorder %s238, %s239
    %p248 = scmp.eq.s32.totalorder %s19, 0
    %p249 = por %p247, %p248
    %p250 = scmp.ne.s32.totalorder %s238, %s239
    %p251 = scmp.eq.s32.totalorder %s20, 3
    %p252 = por %p250, %p251
    %p254 = scmp.ne.s32.totalorder %s239, %s253
    %p255 = scmp.eq.s32.totalorder %s20, 0
    %p256 = por %p254, %p255
    %s257 = smul.u32 %s21, 2
    %s258 = sadd.s32 %s257, %s22
    %s259 = smul.u32 %s40, 2
    %s260 = sadd.s32 %s259, %s36
    %s261 = ssub.s32 %s258, %s260
    %p262 = scmp.eq.s32.totalorder %s261, 0
    %s264 = sadd.s32 %s263, 1
    %s265 = scalar_select %p262, %s263, %s264
    %p268 = pneg %p262
    %p269 = scmp.eq.s32.totalorder %s14, 3
    %p270 = por %p268, %p269
    %p271 = scmp.ne.s32.totalorder %s263, %s266
    %p272 = scmp.eq.s32.totalorder %s14, 0
    %p273 = por %p271, %p272
    %p274 = scmp.ne.s32.totalorder %s263, %s266
    %p275 = scmp.eq.s32.totalorder %s19, 3
    %p276 = por %p274, %p275
    %p277 = scmp.ne.s32.totalorder %s266, %s267
    %p278 = scmp.eq.s32.totalorder %s19, 0
    %p279 = por %p277, %p278
    %p280 = scmp.ne.s32.totalorder %s266, %s267
    %p281 = scmp.eq.s32.totalorder %s20, 3
    %p282 = por %p280, %p281
    %p284 = scmp.ne.s32.totalorder %s267, %s283
    %p285 = scmp.eq.s32.totalorder %s20, 0
    %p286 = por %p284, %p285
    %p287 = scmp.le.s32.totalorder 1, %s14
    %p288 = scmp.lt.s32.totalorder %s14, 5
    %p289 = pnand %p287, %p288
    %p290 = pneg %p289
    // Predicated region
    $region9: #{_nafblock_jit.2} parent=5 // pred_check
      _
    $region10: #{_nafblock_jit.2} parent=5 // pred_check_branch
      %292 = sbr.rel (%p289) target = $region12
    $region11: #{_nafblock_jit.2} parent=5 // pred_region
      %s293 = ssub.s32 %s14, 1
      // Predicated region
      $region13: #{_nafblock_jit.2} parent=11 // pred_check
        %p294 = pneg %p186
      $region14: #{_nafblock_jit.2} parent=11 // pred_check_branch
        %296 = sbr.rel (%p294) target = $region16
      $region15: #{_nafblock_jit.2} parent=11 // pred_region
        _
      $region16: #{_nafblock_jit.2} parent=11 // pred_fallthru
        _
      // Predicated region
      $region17: #{_nafblock_jit.2} parent=11 // pred_check
        %p297 = pneg %p207
      $region18: #{_nafblock_jit.2} parent=11 // pred_check_branch
        %299 = sbr.rel (%p297) target = $region20
      $region19: #{_nafblock_jit.2} parent=11 // pred_region
        _
      $region20: #{_nafblock_jit.2} parent=11 // pred_fallthru
        _
      // Predicated region
      $region21: #{_nafblock_jit.2} parent=11 // pred_check
        %p300 = pneg %p228
      $region22: #{_nafblock_jit.2} parent=11 // pred_check_branch
        %302 = sbr.rel (%p300) target = $region24
      $region23: #{_nafblock_jit.2} parent=11 // pred_region
        _
      $region24: #{_nafblock_jit.2} parent=11 // pred_fallthru
        _
      // Predicated region
      $region25: #{_nafblock_jit.2} parent=11 // pred_check
        %p303 = pneg %p249
      $region26: #{_nafblock_jit.2} parent=11 // pred_check_branch
        %305 = sbr.rel (%p303) target = $region28
      $region27: #{_nafblock_jit.2} parent=11 // pred_region
        _
      $region28: #{_nafblock_jit.2} parent=11 // pred_fallthru
        _
    $region12: #{_nafblock_jit.2} parent=5 // pred_fallthru
      _
    %p306 = scmp.lt.s32.totalorder %s14, 4
    // Predicated region
    $region29: #{_nafblock_jit.2} parent=5 // pred_check
      %p307 = pneg %p306
    $region30: #{_nafblock_jit.2} parent=5 // pred_check_branch
      %309 = sbr.rel (%p307) target = $region32
    $region31: #{_nafblock_jit.2} parent=5 // pred_region
      // Predicated region
      $region33: #{_nafblock_jit.2} parent=31 // pred_check
        %p310 = pneg %p57
      $region34: #{_nafblock_jit.2} parent=31 // pred_check_branch
        %312 = sbr.rel (%p310) target = $region36
      $region35: #{_nafblock_jit.2} parent=31 // pred_region
        %s313 = sadd.s32 %s22, %s23
        %s314 = smul.u32 16, %s313
        %p315 = scmp.lt.s32.totalorder %s21, 1
        %s316 = scalar_select %p315, %s21, 1
        %p317 = scmp.lt.s32.totalorder %s314, 31
        %s318 = scalar_select %p317, %s314, 31
        %s319 = smul.addr %s316, 32
        %s320 = sadd.s32 %s318, %s319
        %s321 = smul.addr %s320, 8
        %s322 = scalar_lea.vmem %s0, %s321
        %s323 = sadd.s32 %s22, %s23
        %s324 = smul.u32 16, %s323
      $region36: #{_nafblock_jit.2} parent=31 // pred_fallthru
        _
      // Predicated region
      $region37: #{_nafblock_jit.2} parent=31 // pred_check
        %p325 = pneg %p95
      $region38: #{_nafblock_jit.2} parent=31 // pred_check_branch
        %327 = sbr.rel (%p325) target = $region40
      $region39: #{_nafblock_jit.2} parent=31 // pred_region
        %s328 = sadd.s32 %s22, %s23
        %s329 = smul.u32 %s328, 8
        %s330 = ssub.s32 %s329, 1
        %p331 = scmp.gt.s32.totalorder %s330, 0
        %s332 = scalar_select %p331, %s330, 0
        %s333 = smul.u32 2, %s332
        %p334 = scmp.lt.s32.totalorder %s21, 1
        %s335 = scalar_select %p334, %s21, 1
        %p336 = scmp.lt.s32.totalorder %s333, 31
        %s337 = scalar_select %p336, %s333, 31
        %s338 = smul.addr %s335, 32
        %s339 = sadd.s32 %s337, %s338
        %s340 = smul.addr %s339, 8
        %s341 = scalar_lea.vmem %s1, %s340
        %s342 = sadd.s32 %s22, %s23
        %s343 = smul.u32 %s342, 8
        %s344 = ssub.s32 %s343, 1
        %p345 = scmp.gt.s32.totalorder %s344, 0
        %s346 = scalar_select %p345, %s344, 0
        %s347 = smul.u32 2, %s346
      $region40: #{_nafblock_jit.2} parent=31 // pred_fallthru
        _
      // Predicated region
      $region41: #{_nafblock_jit.2} parent=31 // pred_check
        %p348 = pneg %p133
      $region42: #{_nafblock_jit.2} parent=31 // pred_check_branch
        %350 = sbr.rel (%p348) target = $region44
      $region43: #{_nafblock_jit.2} parent=31 // pred_region
        %s351 = sadd.s32 %s22, %s23
        %s352 = sadd.s32 %s351, 1
        %s353 = smul.u32 %s352, 8
        %p354 = scmp.lt.s32.totalorder %s353, 15
        %s355 = scalar_select %p354, %s353, 15
        %s356 = smul.u32 2, %s355
        %p357 = scmp.lt.s32.totalorder %s21, 1
        %s358 = scalar_select %p357, %s21, 1
        %p359 = scmp.lt.s32.totalorder %s356, 31
        %s360 = scalar_select %p359, %s356, 31
        %s361 = smul.addr %s358, 32
        %s362 = sadd.s32 %s360, %s361
        %s363 = smul.addr %s362, 8
        %s364 = scalar_lea.vmem %s2, %s363
        %s365 = sadd.s32 %s22, %s23
        %s366 = sadd.s32 %s365, 1
        %s367 = smul.u32 %s366, 8
        %p368 = scmp.lt.s32.totalorder %s367, 15
        %s369 = scalar_select %p368, %s367, 15
        %s370 = smul.u32 2, %s369
      $region44: #{_nafblock_jit.2} parent=31 // pred_fallthru
        _
      // Predicated region
      $region45: #{_nafblock_jit.2} parent=31 // pred_check
        %p371 = pneg %p159
      $region46: #{_nafblock_jit.2} parent=31 // pred_check_branch
        %373 = sbr.rel (%p371) target = $region48
      $region47: #{_nafblock_jit.2} parent=31 // pred_region
        %p374 = scmp.lt.s32.totalorder %s21, 1
        %s375 = scalar_select %p374, %s21, 1
        %s376 = smul.addr %s375, 4
        %s377 = scalar_lea.vmem %s3, %s376
      $region48: #{_nafblock_jit.2} parent=31 // pred_fallthru
        _
    $region32: #{_nafblock_jit.2} parent=5 // pred_fallthru
      _
    %p378 = scmp.le.s32.totalorder 1, %s14
    %p379 = scmp.lt.s32.totalorder %s14, 5
    %p380 = pnand %p378, %p379
    %p381 = pneg %p380
    // Predicated region
    $region49: #{_nafblock_jit.2} parent=5 // pred_check
      _
    $region50: #{_nafblock_jit.2} parent=5 // pred_check_branch
      %383 = sbr.rel (%p380) target = $region52
    $region51: #{_nafblock_jit.2} parent=5 // pred_region
      %s384 = ssub.s32 %s14, 1
      %s385 = sadd.s32 %s25, %s26
      %s386 = smul.u32 16, %s385
      %p387 = scmp.lt.s32.totalorder %s24, 1
      %s388 = scalar_select %p387, %s24, 1
      %p389 = scmp.lt.s32.totalorder %s386, 31
      %s390 = scalar_select %p389, %s386, 31
      %s391 = smul.addr %s388, 32
      %s392 = sadd.s32 %s390, %s391
      %s393 = smul.addr %s392, 8
      %s394 = scalar_lea.vmem %s0, %s393
      %p395 = pneg %p63
      %p396 = pneg %p60
      %s397 = sadd.s32 %s25, %s26
      %s398 = smul.u32 %s397, 8
      %s399 = ssub.s32 %s398, 1
      %p400 = scmp.gt.s32.totalorder %s399, 0
      %s401 = scalar_select %p400, %s399, 0
      %s402 = smul.u32 2, %s401
      %p403 = scmp.lt.s32.totalorder %s24, 1
      %s404 = scalar_select %p403, %s24, 1
      %p405 = scmp.lt.s32.totalorder %s402, 31
      %s406 = scalar_select %p405, %s402, 31
      %s407 = smul.addr %s404, 32
      %s408 = sadd.s32 %s406, %s407
      %s409 = smul.addr %s408, 8
      %s410 = scalar_lea.vmem %s1, %s409
      %p411 = pneg %p101
      %p412 = pneg %p98
      %s413 = sadd.s32 %s25, %s26
      %s414 = sadd.s32 %s413, 1
      %s415 = smul.u32 %s414, 8
      %p416 = scmp.lt.s32.totalorder %s415, 15
      %s417 = scalar_select %p416, %s415, 15
      %s418 = smul.u32 2, %s417
      %p419 = scmp.lt.s32.totalorder %s24, 1
      %s420 = scalar_select %p419, %s24, 1
      %p421 = scmp.lt.s32.totalorder %s418, 31
      %s422 = scalar_select %p421, %s418, 31
      %s423 = smul.addr %s420, 32
      %s424 = sadd.s32 %s422, %s423
      %s425 = smul.addr %s424, 8
      %s426 = scalar_lea.vmem %s2, %s425
      %p427 = pneg %p139
      %p428 = pneg %p136
      %p429 = scmp.lt.s32.totalorder %s24, 1
      %s430 = scalar_select %p429, %s24, 1
      %s431 = smul.addr %s430, 4
      %s432 = scalar_lea.vmem %s3, %s431
      %p433 = pneg %p165
      %p434 = pneg %p162
      %p435 = pneg %p186
      %p436 = pneg %p183
      %p437 = pneg %p207
      %p438 = pneg %p204
      %p439 = pneg %p228
      %p440 = pneg %p225
      %p441 = pneg %p249
      %p442 = pneg %p246
      %p443 = pneg %p279
      %p444 = pneg %p276
      %s445 = smul.u32 %s24, 2
      %s446 = sadd.s32 %s445, %s25
      %p447 = scmp.lt.s32.totalorder %s446, 3
      %s448 = scalar_select %p447, %s446, 3
      %s449 = scalar_lea.vmem %s8, %s448
      %s450 = sadd.s32 %s25, %s26
      %s451 = smul.u32 16, %s450
      %p452 = scmp.lt.s32.totalorder %s24, 1
      %s453 = scalar_select %p452, %s24, 1
      %p454 = scmp.lt.s32.totalorder %s451, 31
      %s455 = scalar_select %p454, %s451, 31
      %s456 = smul.addr %s453, 32
      %s457 = sadd.s32 %s455, %s456
      %s458 = smul.addr %s457, 8
      %s459 = scalar_lea.vmem %s0, %s458
      %s460 = sadd.s32 %s25, %s26
      %s461 = smul.u32 16, %s460
      %s462 = sadd.s32 %s25, %s26
      %s463 = smul.u32 %s462, 8
      %s464 = ssub.s32 %s463, 1
      %p465 = scmp.gt.s32.totalorder %s464, 0
      %s466 = scalar_select %p465, %s464, 0
      %s467 = smul.u32 2, %s466
      %p468 = scmp.lt.s32.totalorder %s24, 1
      %s469 = scalar_select %p468, %s24, 1
      %p470 = scmp.lt.s32.totalorder %s467, 31
      %s471 = scalar_select %p470, %s467, 31
      %s472 = smul.addr %s469, 32
      %s473 = sadd.s32 %s471, %s472
      %s474 = smul.addr %s473, 8
      %s475 = scalar_lea.vmem %s1, %s474
      %s476 = sadd.s32 %s25, %s26
      %s477 = smul.u32 %s476, 8
      %s478 = ssub.s32 %s477, 1
      %p479 = scmp.gt.s32.totalorder %s478, 0
      %s480 = scalar_select %p479, %s478, 0
      %s481 = smul.u32 2, %s480
      %s482 = sadd.s32 %s25, %s26
      %s483 = sadd.s32 %s482, 1
      %s484 = smul.u32 %s483, 8
      %p485 = scmp.lt.s32.totalorder %s484, 15
      %s486 = scalar_select %p485, %s484, 15
      %s487 = smul.u32 2, %s486
      %p488 = scmp.lt.s32.totalorder %s24, 1
      %s489 = scalar_select %p488, %s24, 1
      %p490 = scmp.lt.s32.totalorder %s487, 31
      %s491 = scalar_select %p490, %s487, 31
      %s492 = smul.addr %s489, 32
      %s493 = sadd.s32 %s491, %s492
      %s494 = smul.addr %s493, 8
      %s495 = scalar_lea.vmem %s2, %s494
      %s496 = sadd.s32 %s25, %s26
      %s497 = sadd.s32 %s496, 1
      %s498 = smul.u32 %s497, 8
      %p499 = scmp.lt.s32.totalorder %s498, 15
      %s500 = scalar_select %p499, %s498, 15
      %s501 = smul.u32 2, %s500
      %p502 = scmp.lt.s32.totalorder %s24, 1
      %s503 = scalar_select %p502, %s24, 1
      %s504 = smul.addr %s503, 4
      %s505 = scalar_lea.vmem %s3, %s504
      %s506 = smul.u32 %s24, 2
      %s507 = sadd.s32 %s506, %s25
      %p508 = scmp.lt.s32.totalorder %s507, 3
      %s509 = scalar_select %p508, %s507, 3
      %s510 = scalar_lea.vmem %s8, %s509
      %s511 = smul.u32 %s24, 2
      %s512 = sadd.s32 %s511, %s25
      %s513 = sadd.s32 %s25, %s26
      %p514 = scmp.eq.s32.totalorder %s26, 0
      // Predicated region
      $region53: #{_nafblock_jit.2} parent=51 // pred_check
        %p515 = pneg %p514
      $region54: #{_nafblock_jit.2} parent=51 // pred_check_branch
        %517 = sbr.rel (%p515) target = $region56
      $region55: #{_nafblock_jit.2} parent=51 // pred_region
        %vm518 = vcmask 24576
        %519 = vst.msk [vmem:[%s510] sm:$0x1] %vm518, 0.0
      $region56: #{_nafblock_jit.2} parent=51 // pred_fallthru
        _
      %v520 = vld [vmem:[%s505] sm:$0xf]
      %v521 = vld [vmem:[%s4] sm:$0xff]
      %v522 = vld [vmem:[%s5] sm:$0x7]
      %v523 = vld [vmem:[%s475] sm:$0xff]
      %v524 = vld [vmem:[%s475 + $0x8] sm:$0xff]
      %v525 = vld [vmem:[%s459] sm:$0xff]
      %v526 = vld [vmem:[%s459 + $0x8] sm:$0xff]
      %v527 = vld [vmem:[%s459 + $0x10] sm:$0xff]
      %v528 = vld [vmem:[%s459 + $0x18] sm:$0xff]
      %v529 = vld [vmem:[%s459 + $0x20] sm:$0xff]
      %v530 = vld [vmem:[%s459 + $0x28] sm:$0xff]
      %v531 = vld [vmem:[%s459 + $0x30] sm:$0xff]
      %v532 = vld [vmem:[%s459 + $0x38] sm:$0xff]
      %v533 = vld [vmem:[%s459 + $0x40] sm:$0xff]
      %v534 = vld [vmem:[%s459 + $0x48] sm:$0xff]
      %v535 = vld [vmem:[%s459 + $0x50] sm:$0xff]
      %v536 = vld [vmem:[%s459 + $0x58] sm:$0xff]
      %v537 = vld [vmem:[%s459 + $0x60] sm:$0xff]
      %v538 = vld [vmem:[%s459 + $0x68] sm:$0xff]
      %v539 = vld [vmem:[%s459 + $0x70] sm:$0xff]
      %v540 = vld [vmem:[%s459 + $0x78] sm:$0xff]
      %v541 = vld [vmem:[%s495] sm:$0xff]
      %v542 = vld [vmem:[%s495 + $0x8] sm:$0xff]
      %v543 = vld [vmem:[%s6] sm:$0xf]
      %v544 = vld [vmem:[%s7] sm:$0xff]
      %v545 = vld [vmem:[%s7 + $0x8] sm:$0x1]
      %p546 = scmp.eq.s32.totalorder %s513, 0
      %p547 = scmp.eq.s32.totalorder %s513, 1
      %vm548 = vcmask 31744
      %v549 = vsel %vm548, %v523, 0.0
      %550 = vadd.xlane.f32.xlu0 %v549
      %v551 = vpop.xlane.xlu0 %550
      %v552 = vsel %vm548, %v524, 0.0
      %553 = vadd.xlane.f32.xlu0 %v552
      %v554 = vpop.xlane.xlu0 %553
      %v555 = vsel %vm548, %v525, 0.0
      %556 = vadd.xlane.f32.xlu0 %v555
      %v557 = vpop.xlane.xlu0 %556
      %v558 = vsel %vm548, %v526, 0.0
      %559 = vadd.xlane.f32.xlu0 %v558
      %v560 = vpop.xlane.xlu0 %559
      %v561 = vsel %vm548, %v527, 0.0
      %562 = vadd.xlane.f32.xlu0 %v561
      %v563 = vpop.xlane.xlu0 %562
      %v564 = vsel %vm548, %v528, 0.0
      %565 = vadd.xlane.f32.xlu0 %v564
      %v566 = vpop.xlane.xlu0 %565
      %v567 = vsel %vm548, %v529, 0.0
      %568 = vadd.xlane.f32.xlu0 %v567
      %v569 = vpop.xlane.xlu0 %568
      %v570 = vsel %vm548, %v530, 0.0
      %571 = vadd.xlane.f32.xlu0 %v570
      %v572 = vpop.xlane.xlu0 %571
      %v573 = vsel %vm548, %v531, 0.0
      %574 = vadd.xlane.f32.xlu0 %v573
      %v575 = vpop.xlane.xlu0 %574
      %v576 = vsel %vm548, %v532, 0.0
      %577 = vadd.xlane.f32.xlu0 %v576
      %v578 = vpop.xlane.xlu0 %577
      %v579 = vsel %vm548, %v533, 0.0
      %580 = vadd.xlane.f32.xlu0 %v579
      %v581 = vpop.xlane.xlu0 %580
      %v582 = vsel %vm548, %v534, 0.0
      %583 = vadd.xlane.f32.xlu0 %v582
      %v584 = vpop.xlane.xlu0 %583
      %v585 = vsel %vm548, %v535, 0.0
      %586 = vadd.xlane.f32.xlu0 %v585
      %v587 = vpop.xlane.xlu0 %586
      %v588 = vsel %vm548, %v536, 0.0
      %589 = vadd.xlane.f32.xlu0 %v588
      %v590 = vpop.xlane.xlu0 %589
      %v591 = vsel %vm548, %v537, 0.0
      %592 = vadd.xlane.f32.xlu0 %v591
      %v593 = vpop.xlane.xlu0 %592
      %v594 = vsel %vm548, %v538, 0.0
      %595 = vadd.xlane.f32.xlu0 %v594
      %v596 = vpop.xlane.xlu0 %595
      %v597 = vsel %vm548, %v539, 0.0
      %598 = vadd.xlane.f32.xlu0 %v597
      %v599 = vpop.xlane.xlu0 %598
      %v600 = vsel %vm548, %v540, 0.0
      %601 = vadd.xlane.f32.xlu0 %v600
      %v602 = vpop.xlane.xlu0 %601
      %v603 = vsel %vm548, %v541, 0.0
      %604 = vadd.xlane.f32.xlu0 %v603
      %v605 = vpop.xlane.xlu0 %604
      %v606 = vsel %vm548, %v542, 0.0
      %607 = vadd.xlane.f32.xlu0 %v606
      %v608 = vpop.xlane.xlu0 %607
      %v609 = vrcp.pop 4.0
      %v610 = vmul.f32 %v551, %v609
      %v611 = vmul.f32 %v554, %v609
      %v612 = vmul.f32 %v557, %v609
      %v613 = vmul.f32 %v560, %v609
      %v614 = vmul.f32 %v563, %v609
      %v615 = vmul.f32 %v566, %v609
      %v616 = vmul.f32 %v569, %v609
      %v617 = vmul.f32 %v572, %v609
      %v618 = vmul.f32 %v575, %v609
      %v619 = vmul.f32 %v578, %v609
      %v620 = vmul.f32 %v581, %v609
      %v621 = vmul.f32 %v584, %v609
      %v622 = vmul.f32 %v587, %v609
      %v623 = vmul.f32 %v590, %v609
      %v624 = vmul.f32 %v593, %v609
      %v625 = vmul.f32 %v596, %v609
      %v626 = vmul.f32 %v599, %v609
      %v627 = vmul.f32 %v602, %v609
      %v628 = vmul.f32 %v605, %v609
      %v629 = vmul.f32 %v608, %v609
      %v630 = vsub.f32 %v523, %v610
      %v631 = vsub.f32 %v524, %v611
      %v632 = vsub.f32 %v525, %v612
      %v633 = vsub.f32 %v526, %v613
      %v634 = vsub.f32 %v527, %v614
      %v635 = vsub.f32 %v528, %v615
      %v636 = vsub.f32 %v529, %v616
      %v637 = vsub.f32 %v530, %v617
      %v638 = vsub.f32 %v531, %v618
      %v639 = vsub.f32 %v532, %v619
      %v640 = vsub.f32 %v533, %v620
      %v641 = vsub.f32 %v534, %v621
      %v642 = vsub.f32 %v535, %v622
      %v643 = vsub.f32 %v536, %v623
      %v644 = vsub.f32 %v537, %v624
      %v645 = vsub.f32 %v538, %v625
      %v646 = vsub.f32 %v539, %v626
      %v647 = vsub.f32 %v540, %v627
      %v648 = vsub.f32 %v541, %v628
      %v649 = vsub.f32 %v542, %v629
      %v650 = vmul.f32 %v630, %v630
      %v651 = vmul.f32 %v631, %v631
      %v652 = vmul.f32 %v632, %v632
      %v653 = vmul.f32 %v633, %v633
      %v654 = vmul.f32 %v634, %v634
      %v655 = vmul.f32 %v635, %v635
      %v656 = vmul.f32 %v636, %v636
      %v657 = vmul.f32 %v637, %v637
      %v658 = vmul.f32 %v638, %v638
      %v659 = vmul.f32 %v639, %v639
      %v660 = vmul.f32 %v640, %v640
      %v661 = vmul.f32 %v641, %v641
      %v662 = vmul.f32 %v642, %v642
      %v663 = vmul.f32 %v643, %v643
      %v664 = vmul.f32 %v644, %v644
      %v665 = vmul.f32 %v645, %v645
      %v666 = vmul.f32 %v646, %v646
      %v667 = vmul.f32 %v647, %v647
      %v668 = vmul.f32 %v648, %v648
      %v669 = vmul.f32 %v649, %v649
      %v670 = vsel %vm548, %v650, 0.0
      %671 = vadd.xlane.f32.xlu0 %v670
      %v672 = vpop.xlane.xlu0 %671
      %v673 = vsel %vm548, %v651, 0.0
      %674 = vadd.xlane.f32.xlu0 %v673
      %v675 = vpop.xlane.xlu0 %674
      %v676 = vsel %vm548, %v652, 0.0
      %677 = vadd.xlane.f32.xlu0 %v676
      %v678 = vpop.xlane.xlu0 %677
      %v679 = vsel %vm548, %v653, 0.0
      %680 = vadd.xlane.f32.xlu0 %v679
      %v681 = vpop.xlane.xlu0 %680
      %v682 = vsel %vm548, %v654, 0.0
      %683 = vadd.xlane.f32.xlu0 %v682
      %v684 = vpop.xlane.xlu0 %683
      %v685 = vsel %vm548, %v655, 0.0
      %686 = vadd.xlane.f32.xlu0 %v685
      %v687 = vpop.xlane.xlu0 %686
      %v688 = vsel %vm548, %v656, 0.0
      %689 = vadd.xlane.f32.xlu0 %v688
      %v690 = vpop.xlane.xlu0 %689
      %v691 = vsel %vm548, %v657, 0.0
      %692 = vadd.xlane.f32.xlu0 %v691
      %v693 = vpop.xlane.xlu0 %692
      %v694 = vsel %vm548, %v658, 0.0
      %695 = vadd.xlane.f32.xlu0 %v694
      %v696 = vpop.xlane.xlu0 %695
      %v697 = vsel %vm548, %v659, 0.0
      %698 = vadd.xlane.f32.xlu0 %v697
      %v699 = vpop.xlane.xlu0 %698
      %v700 = vsel %vm548, %v660, 0.0
      %701 = vadd.xlane.f32.xlu0 %v700
      %v702 = vpop.xlane.xlu0 %701
      %v703 = vsel %vm548, %v661, 0.0
      %704 = vadd.xlane.f32.xlu0 %v703
      %v705 = vpop.xlane.xlu0 %704
      %v706 = vsel %vm548, %v662, 0.0
      %707 = vadd.xlane.f32.xlu0 %v706
      %v708 = vpop.xlane.xlu0 %707
      %v709 = vsel %vm548, %v663, 0.0
      %710 = vadd.xlane.f32.xlu0 %v709
      %v711 = vpop.xlane.xlu0 %710
      %v712 = vsel %vm548, %v664, 0.0
      %713 = vadd.xlane.f32.xlu0 %v712
      %v714 = vpop.xlane.xlu0 %713
      %v715 = vsel %vm548, %v665, 0.0
      %716 = vadd.xlane.f32.xlu0 %v715
      %v717 = vpop.xlane.xlu0 %716
      %v718 = vsel %vm548, %v666, 0.0
      %719 = vadd.xlane.f32.xlu0 %v718
      %v720 = vpop.xlane.xlu0 %719
      %v721 = vsel %vm548, %v667, 0.0
      %722 = vadd.xlane.f32.xlu0 %v721
      %v723 = vpop.xlane.xlu0 %722
      %v724 = vsel %vm548, %v668, 0.0
      %725 = vadd.xlane.f32.xlu0 %v724
      %v726 = vpop.xlane.xlu0 %725
      %v727 = vsel %vm548, %v669, 0.0
      %728 = vadd.xlane.f32.xlu0 %v727
      %v729 = vpop.xlane.xlu0 %728
      %v730 = vmul.f32 %v672, %v609
      %v731 = vmul.f32 %v675, %v609
      %v732 = vmul.f32 %v678, %v609
      %v733 = vmul.f32 %v681, %v609
      %v734 = vmul.f32 %v684, %v609
      %v735 = vmul.f32 %v687, %v609
      %v736 = vmul.f32 %v690, %v609
      %v737 = vmul.f32 %v693, %v609
      %v738 = vmul.f32 %v696, %v609
      %v739 = vmul.f32 %v699, %v609
      %v740 = vmul.f32 %v702, %v609
      %v741 = vmul.f32 %v705, %v609
      %v742 = vmul.f32 %v708, %v609
      %v743 = vmul.f32 %v711, %v609
      %v744 = vmul.f32 %v714, %v609
      %v745 = vmul.f32 %v717, %v609
      %v746 = vmul.f32 %v720, %v609
      %v747 = vmul.f32 %v723, %v609
      %v748 = vmul.f32 %v726, %v609
      %v749 = vmul.f32 %v729, %v609
      %v750 = vadd.f32 %v730, 1e-05
      %v751 = vadd.f32 %v731, 1e-05
      %v752 = vadd.f32 %v732, 1e-05
      %v753 = vadd.f32 %v733, 1e-05
      %v754 = vadd.f32 %v734, 1e-05
      %v755 = vadd.f32 %v735, 1e-05
      %v756 = vadd.f32 %v736, 1e-05
      %v757 = vadd.f32 %v737, 1e-05
      %v758 = vadd.f32 %v738, 1e-05
      %v759 = vadd.f32 %v739, 1e-05
      %v760 = vadd.f32 %v740, 1e-05
      %v761 = vadd.f32 %v741, 1e-05
      %v762 = vadd.f32 %v742, 1e-05
      %v763 = vadd.f32 %v743, 1e-05
      %v764 = vadd.f32 %v744, 1e-05
      %v765 = vadd.f32 %v745, 1e-05
      %v766 = vadd.f32 %v746, 1e-05
      %v767 = vadd.f32 %v747, 1e-05
      %v768 = vadd.f32 %v748, 1e-05
      %v769 = vadd.f32 %v749, 1e-05
      %v770 = vrsqrt.pop %v750
      %v771 = vrsqrt.pop %v751
      %v772 = vrsqrt.pop %v752
      %v773 = vrsqrt.pop %v753
      %v774 = vrsqrt.pop %v754
      %v775 = vrsqrt.pop %v755
      %v776 = vrsqrt.pop %v756
      %v777 = vrsqrt.pop %v757
      %v778 = vrsqrt.pop %v758
      %v779 = vrsqrt.pop %v759
      %v780 = vrsqrt.pop %v760
      %v781 = vrsqrt.pop %v761
      %v782 = vrsqrt.pop %v762
      %v783 = vrsqrt.pop %v763
      %v784 = vrsqrt.pop %v764
      %v785 = vrsqrt.pop %v765
      %v786 = vrsqrt.pop %v766
      %v787 = vrsqrt.pop %v767
      %v788 = vrsqrt.pop %v768
      %v789 = vrsqrt.pop %v769
      %v790 = vmul.f32 %v630, %v770
      %v791 = vmul.f32 %v631, %v771
      %v792 = vmul.f32 %v632, %v772
      %v793 = vmul.f32 %v633, %v773
      %v794 = vmul.f32 %v634, %v774
      %v795 = vmul.f32 %v635, %v775
      %v796 = vmul.f32 %v636, %v776
      %v797 = vmul.f32 %v637, %v777
      %v798 = vmul.f32 %v638, %v778
      %v799 = vmul.f32 %v639, %v779
      %v800 = vmul.f32 %v640, %v780
      %v801 = vmul.f32 %v641, %v781
      %v802 = vmul.f32 %v642, %v782
      %v803 = vmul.f32 %v643, %v783
      %v804 = vmul.f32 %v644, %v784
      %v805 = vmul.f32 %v645, %v785
      %v806 = vmul.f32 %v646, %v786
      %v807 = vmul.f32 %v647, %v787
      %v808 = vmul.f32 %v648, %v788
      %v809 = vmul.f32 %v649, %v789
      %v810 = vlaneseq
      %v811 = vshrl.u32 %v810, 7
      %v812 = vsub.s32 0, %v811
      %v813 = vrot.slane %v521, %v812
      %v814 = vmul.f32 %v790, %v813
      %v815 = vmul.f32 %v791, %v813
      %v816 = vmul.f32 %v792, %v813
      %v817 = vmul.f32 %v793, %v813
      %v818 = vmul.f32 %v794, %v813
      %v819 = vmul.f32 %v795, %v813
      %v820 = vmul.f32 %v796, %v813
      %v821 = vmul.f32 %v797, %v813
      %v822 = vmul.f32 %v798, %v813
      %v823 = vmul.f32 %v799, %v813
      %v824 = vmul.f32 %v800, %v813
      %v825 = vmul.f32 %v801, %v813
      %v826 = vmul.f32 %v802, %v813
      %v827 = vmul.f32 %v803, %v813
      %v828 = vmul.f32 %v804, %v813
      %v829 = vmul.f32 %v805, %v813
      %v830 = vmul.f32 %v806, %v813
      %v831 = vmul.f32 %v807, %v813
      %v832 = vmul.f32 %v808, %v813
      %v833 = vmul.f32 %v809, %v813
      %v834 = vlaneseq
      %v835 = vshrl.u32 %v834, 7
      %v836 = vsub.s32 1, %v835
      %v837 = vrot.slane %v521, %v836
      %v838 = vadd.f32 %v814, %v837
      %v839 = vadd.f32 %v815, %v837
      %v840 = vadd.f32 %v816, %v837
      %v841 = vadd.f32 %v817, %v837
      %v842 = vadd.f32 %v818, %v837
      %v843 = vadd.f32 %v819, %v837
      %v844 = vadd.f32 %v820, %v837
      %v845 = vadd.f32 %v821, %v837
      %v846 = vadd.f32 %v822, %v837
      %v847 = vadd.f32 %v823, %v837
      %v848 = vadd.f32 %v824, %v837
      %v849 = vadd.f32 %v825, %v837
      %v850 = vadd.f32 %v826, %v837
      %v851 = vadd.f32 %v827, %v837
      %v852 = vadd.f32 %v828, %v837
      %v853 = vadd.f32 %v829, %v837
      %v854 = vadd.f32 %v830, %v837
      %v855 = vadd.f32 %v831, %v837
      %v856 = vadd.f32 %v832, %v837
      %v857 = vadd.f32 %v833, %v837
      %v858 = vadd.f32 %v520, 1.0
      %v859 = vlaneseq
      %v860 = vshrl.u32 %v859, 7
      %v861 = vsub.s32 1, %v860
      %v862 = vrot.slane %v858, %v861
      %v863 = vmul.f32 %v838, %v862
      %v864 = vmul.f32 %v839, %v862
      %v865 = vmul.f32 %v840, %v862
      %v866 = vmul.f32 %v841, %v862
      %v867 = vmul.f32 %v842, %v862
      %v868 = vmul.f32 %v843, %v862
      %v869 = vmul.f32 %v844, %v862
      %v870 = vmul.f32 %v845, %v862
      %v871 = vmul.f32 %v846, %v862
      %v872 = vmul.f32 %v847, %v862
      %v873 = vmul.f32 %v848, %v862
      %v874 = vmul.f32 %v849, %v862
      %v875 = vmul.f32 %v850, %v862
      %v876 = vmul.f32 %v851, %v862
      %v877 = vmul.f32 %v852, %v862
      %v878 = vmul.f32 %v853, %v862
      %v879 = vmul.f32 %v854, %v862
      %v880 = vmul.f32 %v855, %v862
      %v881 = vmul.f32 %v856, %v862
      %v882 = vmul.f32 %v857, %v862
      %v883 = vlaneseq
      %v884 = vshrl.u32 %v883, 7
      %v885 = vsub.s32 0, %v884
      %v886 = vrot.slane %v520, %v885
      %v887 = vadd.f32 %v863, %v886
      %v888 = vadd.f32 %v864, %v886
      %v889 = vadd.f32 %v865, %v886
      %v890 = vadd.f32 %v866, %v886
      %v891 = vadd.f32 %v867, %v886
      %v892 = vadd.f32 %v868, %v886
      %v893 = vadd.f32 %v869, %v886
      %v894 = vadd.f32 %v870, %v886
      %v895 = vadd.f32 %v871, %v886
      %v896 = vadd.f32 %v872, %v886
      %v897 = vadd.f32 %v873, %v886
      %v898 = vadd.f32 %v874, %v886
      %v899 = vadd.f32 %v875, %v886
      %v900 = vadd.f32 %v876, %v886
      %v901 = vadd.f32 %v877, %v886
      %v902 = vadd.f32 %v878, %v886
      %v903 = vadd.f32 %v879, %v886
      %v904 = vadd.f32 %v880, %v886
      %v905 = vadd.f32 %v881, %v886
      %v906 = vadd.f32 %v882, %v886
      %v907 = vlaneseq
      %v908 = vshrl.u32 %v907, 7
      %v909 = vsub.s32 0, %v908
      %v910 = vrot.slane %v522, %v909
      %v912 = vsel %vm548, %v887, 0
      %v915 = vsel %vm548, %v888, 0
      %v918 = vsel %vm548, %v889, 0
      %v921 = vsel %vm548, %v890, 0
      %v924 = vsel %vm548, %v891, 0
      %v927 = vsel %vm548, %v892, 0
      %v930 = vsel %vm548, %v893, 0
      %v933 = vsel %vm548, %v894, 0
      %v936 = vsel %vm548, %v895, 0
      %v939 = vsel %vm548, %v896, 0
      %v942 = vsel %vm548, %v897, 0
      %v945 = vsel %vm548, %v898, 0
      %v948 = vsel %vm548, %v899, 0
      %v951 = vsel %vm548, %v900, 0
      %v954 = vsel %vm548, %v901, 0
      %v957 = vsel %vm548, %v902, 0
      %v960 = vsel %vm548, %v903, 0
      %v963 = vsel %vm548, %v904, 0
      %v966 = vsel %vm548, %v905, 0
      %v969 = vsel %vm548, %v906, 0
      %vm971 = vcmask 1043456
      %v973 = vsel %vm971, %v543, 0
      %975 = vmatprep.subr.mxu0 0.0
      %976 = vmatpush1.msra.mxu0 0.0
      %977 = vmatprep.subr.mxu0 0.0
      %978 = vmatpush1.msra.mxu0 0.0
      %979 = vmatprep.subr.mxu0 0.0
      %980 = vmatpush1.msra.mxu0 0.0
      %981 = vmatprep.subr.mxu0 0.0
      %982 = vmatpush1.msra.mxu0 0.0
      %983 = vmatprep.subr.mxu0 0.0
      %984 = vmatpush1.msra.mxu0 0.0
      %985 = vmatprep.subr.mxu0 0.0
      %986 = vmatpush1.msra.mxu0 0.0
      %987 = vmatprep.subr.mxu0 0.0
      %988 = vmatpush1.msra.mxu0 0.0
      %989 = vmatprep.subr.mxu0 0.0
      %990 = vmatpush1.msra.mxu0 0.0
      %991 = vmatprep.subr.mxu0 0.0
      %992 = vmatpush1.msra.mxu0 0.0
      %993 = vmatprep.subr.mxu0 0.0
      %994 = vmatpush1.msra.mxu0 0.0
      %995 = vmatprep.subr.mxu0 0.0
      %996 = vmatpush1.msra.mxu0 0.0
      %997 = vmatprep.subr.mxu0 0.0
      %998 = vmatpush1.msra.mxu0 0.0
      %999 = vmatprep.subr.mxu0 0.0
      %1000 = vmatpush1.msra.mxu0 0.0
      %1001 = vmatprep.subr.mxu0 0.0
      %1002 = vmatpush1.msra.mxu0 0.0
      %1003 = vmatprep.subr.mxu0 0.0
      %1004 = vmatpush1.msra.mxu0 0.0
      %1005 = vmatprep.subr.mxu0 0.0
      %1006 = vmatpush1.msra.mxu0 %v973
      %1007 = vmatprep.subr.mxu0 0.0
      %1008 = vmatpush2.msra.mxu0 0.0
      %1009 = vmatprep.subr.mxu0 0.0
      %1010 = vmatpush2.msra.mxu0 0.0
      %1011 = vmatprep.subr.mxu0 0.0
      %1012 = vmatpush2.msra.mxu0 0.0
      %1013 = vmatprep.subr.mxu0 0.0
      %1014 = vmatpush2.msra.mxu0 0.0
      %1015 = vmatprep.subr.mxu0 0.0
      %1016 = vmatpush2.msra.mxu0 0.0
      %1017 = vmatprep.subr.mxu0 0.0
      %1018 = vmatpush2.msra.mxu0 0.0
      %1019 = vmatprep.subr.mxu0 0.0
      %1020 = vmatpush2.msra.mxu0 0.0
      %1021 = vmatprep.subr.mxu0 0.0
      %1022 = vmatpush2.msra.mxu0 0.0
      %1023 = vmatprep.subr.mxu0 0.0
      %1024 = vmatpush2.msra.mxu0 0.0
      %1025 = vmatprep.subr.mxu0 0.0
      %1026 = vmatpush2.msra.mxu0 0.0
      %1027 = vmatprep.subr.mxu0 0.0
      %1028 = vmatpush2.msra.mxu0 0.0
      %1029 = vmatprep.subr.mxu0 0.0
      %1030 = vmatpush2.msra.mxu0 0.0
      %1031 = vmatprep.subr.mxu0 0.0
      %1032 = vmatpush2.msra.mxu0 0.0
      %1033 = vmatprep.subr.mxu0 0.0
      %1034 = vmatpush2.msra.mxu0 0.0
      %1035 = vmatprep.subr.mxu0 0.0
      %1036 = vmatpush2.msra.mxu0 0.0
      %1037 = vmatprep.subr.mxu0 0.0
      %1038 = vmatpush2.msra.mxu0 0.0
      %1039 = vmatprep.mubr.f32.mxu0 0.0
      %1040 = vmatmul.mubr.f32.gmra.mxu0 %v912
      %v1041 = vpop.f32.mrf.mxu0
      %v1042 = vadd.f32 %v910, %v1041
      %v1043 = vpop.f32.mrf.mxu0
      %1044 = vmatprep.mubr.f32.mxu0 0.0
      %1045 = vmatmul.mubr.f32.gmra.mxu0 %v915
      %v1046 = vpop.f32.mrf.mxu0
      %v1047 = vadd.f32 %v910, %v1046
      %v1048 = vpop.f32.mrf.mxu0
      %1049 = vmatprep.mubr.f32.mxu0 0.0
      %1050 = vmatmul.mubr.f32.gmra.mxu0 %v918
      %v1051 = vpop.f32.mrf.mxu0
      %v1052 = vadd.f32 %v910, %v1051
      %v1053 = vpop.f32.mrf.mxu0
      %1054 = vmatprep.mubr.f32.mxu0 0.0
      %1055 = vmatmul.mubr.f32.gmra.mxu0 %v921
      %v1056 = vpop.f32.mrf.mxu0
      %v1057 = vadd.f32 %v910, %v1056
      %v1058 = vpop.f32.mrf.mxu0
      %1059 = vmatprep.mubr.f32.mxu0 0.0
      %1060 = vmatmul.mubr.f32.gmra.mxu0 %v924
      %v1061 = vpop.f32.mrf.mxu0
      %v1062 = vadd.f32 %v910, %v1061
      %v1063 = vpop.f32.mrf.mxu0
      %1064 = vmatprep.mubr.f32.mxu0 0.0
      %1065 = vmatmul.mubr.f32.gmra.mxu0 %v927
      %v1066 = vpop.f32.mrf.mxu0
      %v1067 = vadd.f32 %v910, %v1066
      %v1068 = vpop.f32.mrf.mxu0
      %1069 = vmatprep.mubr.f32.mxu0 0.0
      %1070 = vmatmul.mubr.f32.gmra.mxu0 %v930
      %v1071 = vpop.f32.mrf.mxu0
      %v1072 = vadd.f32 %v910, %v1071
      %v1073 = vpop.f32.mrf.mxu0
      %1074 = vmatprep.mubr.f32.mxu0 0.0
      %1075 = vmatmul.mubr.f32.gmra.mxu0 %v933
      %v1076 = vpop.f32.mrf.mxu0
      %v1077 = vadd.f32 %v910, %v1076
      %v1078 = vpop.f32.mrf.mxu0
      %1079 = vmatprep.mubr.f32.mxu0 0.0
      %1080 = vmatmul.mubr.f32.gmra.mxu0 %v936
      %v1081 = vpop.f32.mrf.mxu0
      %v1082 = vadd.f32 %v910, %v1081
      %v1083 = vpop.f32.mrf.mxu0
      %1084 = vmatprep.mubr.f32.mxu0 0.0
      %1085 = vmatmul.mubr.f32.gmra.mxu0 %v939
      %v1086 = vpop.f32.mrf.mxu0
      %v1087 = vadd.f32 %v910, %v1086
      %v1088 = vpop.f32.mrf.mxu0
      %1089 = vmatprep.mubr.f32.mxu0 0.0
      %1090 = vmatmul.mubr.f32.gmra.mxu0 %v942
      %v1091 = vpop.f32.mrf.mxu0
      %v1092 = vadd.f32 %v910, %v1091
      %v1093 = vpop.f32.mrf.mxu0
      %1094 = vmatprep.mubr.f32.mxu0 0.0
      %1095 = vmatmul.mubr.f32.gmra.mxu0 %v945
      %v1096 = vpop.f32.mrf.mxu0
      %v1097 = vadd.f32 %v910, %v1096
      %v1098 = vpop.f32.mrf.mxu0
      %1099 = vmatprep.mubr.f32.mxu0 0.0
      %1100 = vmatmul.mubr.f32.gmra.mxu0 %v948
      %v1101 = vpop.f32.mrf.mxu0
      %v1102 = vadd.f32 %v910, %v1101
      %v1103 = vpop.f32.mrf.mxu0
      %1104 = vmatprep.mubr.f32.mxu0 0.0
      %1105 = vmatmul.mubr.f32.gmra.mxu0 %v951
      %v1106 = vpop.f32.mrf.mxu0
      %v1107 = vadd.f32 %v910, %v1106
      %v1108 = vpop.f32.mrf.mxu0
      %1109 = vmatprep.mubr.f32.mxu0 0.0
      %1110 = vmatmul.mubr.f32.gmra.mxu0 %v954
      %v1111 = vpop.f32.mrf.mxu0
      %v1112 = vadd.f32 %v910, %v1111
      %v1113 = vpop.f32.mrf.mxu0
      %1114 = vmatprep.mubr.f32.mxu0 0.0
      %1115 = vmatmul.mubr.f32.gmra.mxu0 %v957
      %v1116 = vpop.f32.mrf.mxu0
      %v1117 = vadd.f32 %v910, %v1116
      %v1118 = vpop.f32.mrf.mxu0
      %1119 = vmatprep.mubr.f32.mxu0 0.0
      %1120 = vmatmul.mubr.f32.gmra.mxu0 %v960
      %v1121 = vpop.f32.mrf.mxu0
      %v1122 = vadd.f32 %v910, %v1121
      %v1123 = vpop.f32.mrf.mxu0
      %1124 = vmatprep.mubr.f32.mxu0 0.0
      %1125 = vmatmul.mubr.f32.gmra.mxu0 %v963
      %v1126 = vpop.f32.mrf.mxu0
      %v1127 = vadd.f32 %v910, %v1126
      %v1128 = vpop.f32.mrf.mxu0
      %1129 = vmatprep.mubr.f32.mxu0 0.0
      %1130 = vmatmul.mubr.f32.gmra.mxu0 %v966
      %v1131 = vpop.f32.mrf.mxu0
      %v1132 = vadd.f32 %v910, %v1131
      %v1133 = vpop.f32.mrf.mxu0
      %1134 = vmatprep.mubr.f32.mxu0 0.0
      %1135 = vmatmul.mubr.f32.gmra.mxu0 %v969
      %v1136 = vpop.f32.mrf.mxu0
      %v1137 = vadd.f32 %v910, %v1136
      %v1138 = vpop.f32.mrf.mxu0
      %1139 = vdwg.mxu0
      %v1140 = vlaneseq
      %v1141 = vshrl.u32 %v1140, 7
      %v1142 = vadd.s32 %v1141, 8
      %v1143 = vadd.s32 %v1141, 16
      %v1144 = vadd.s32 %v1141, 24
      %v1145 = vadd.s32 %v1141, 32
      %v1146 = vadd.s32 %v1141, 40
      %v1147 = vadd.s32 %v1141, 48
      %v1148 = vadd.s32 %v1141, 56
      %v1149 = vadd.s32 %v1141, 64
      %v1150 = vadd.s32 %v1141, 72
      %v1151 = vadd.s32 %v1141, 80
      %v1152 = vadd.s32 %v1141, 88
      %v1153 = vadd.s32 %v1141, 96
      %v1154 = vadd.s32 %v1141, 104
      %v1155 = vadd.s32 %v1141, 112
      %v1156 = vadd.s32 %v1141, 120
      %v1157 = vadd.s32 %v1141, 128
      %v1158 = vadd.s32 %v1141, 136
      %v1159 = vadd.s32 %v1141, 144
      %v1160 = vadd.s32 %v1141, 152
      %vm1161 = vcmp.lt.s32.totalorder %v1141, 16
      %vm1162 = vcmp.lt.s32.totalorder %v1142, 16
      %vm1163 = vcmp.lt.s32.totalorder %v1143, 16
      %vm1164 = vcmp.lt.s32.totalorder %v1144, 16
      %vm1165 = vcmp.lt.s32.totalorder %v1145, 16
      %vm1166 = vcmp.lt.s32.totalorder %v1146, 16
      %vm1167 = vcmp.lt.s32.totalorder %v1147, 16
      %vm1168 = vcmp.lt.s32.totalorder %v1148, 16
      %vm1169 = vcmp.lt.s32.totalorder %v1149, 16
      %vm1170 = vcmp.lt.s32.totalorder %v1150, 16
      %vm1171 = vcmp.lt.s32.totalorder %v1151, 16
      %vm1172 = vcmp.lt.s32.totalorder %v1152, 16
      %vm1173 = vcmp.lt.s32.totalorder %v1153, 16
      %vm1174 = vcmp.lt.s32.totalorder %v1154, 16
      %vm1175 = vcmp.lt.s32.totalorder %v1155, 16
      %vm1176 = vcmp.lt.s32.totalorder %v1156, 16
      %vm1177 = vcmp.lt.s32.totalorder %v1157, 16
      %vm1178 = vcmp.lt.s32.totalorder %v1158, 16
      %vm1179 = vcmp.lt.s32.totalorder %v1159, 16
      %vm1180 = vcmp.lt.s32.totalorder %v1160, 16
      %s1181 = scalar_select %p546, 1, 0
      %v1182 = vstv %s1181
      %vm1183 = vcmp.eq.s32.totalorder %v1182, 1
      %vm1184 = vmand %vm1183, %vm1161
      %vm1185 = vmand %vm1183, %vm1162
      %vm1186 = vmand %vm1183, %vm1163
      %vm1187 = vmand %vm1183, %vm1164
      %vm1188 = vmand %vm1183, %vm1165
      %vm1189 = vmand %vm1183, %vm1166
      %vm1190 = vmand %vm1183, %vm1167
      %vm1191 = vmand %vm1183, %vm1168
      %vm1192 = vmand %vm1183, %vm1169
      %vm1193 = vmand %vm1183, %vm1170
      %vm1194 = vmand %vm1183, %vm1171
      %vm1195 = vmand %vm1183, %vm1172
      %vm1196 = vmand %vm1183, %vm1173
      %vm1197 = vmand %vm1183, %vm1174
      %vm1198 = vmand %vm1183, %vm1175
      %vm1199 = vmand %vm1183, %vm1176
      %vm1200 = vmand %vm1183, %vm1177
      %vm1201 = vmand %vm1183, %vm1178
      %vm1202 = vmand %vm1183, %vm1179
      %vm1203 = vmand %vm1183, %vm1180
      %vm1204 = vcmp.ge.s32.totalorder %v1141, 144
      %vm1205 = vcmp.ge.s32.totalorder %v1142, 144
      %vm1206 = vcmp.ge.s32.totalorder %v1143, 144
      %vm1207 = vcmp.ge.s32.totalorder %v1144, 144
      %vm1208 = vcmp.ge.s32.totalorder %v1145, 144
      %vm1209 = vcmp.ge.s32.totalorder %v1146, 144
      %vm1210 = vcmp.ge.s32.totalorder %v1147, 144
      %vm1211 = vcmp.ge.s32.totalorder %v1148, 144
      %vm1212 = vcmp.ge.s32.totalorder %v1149, 144
      %vm1213 = vcmp.ge.s32.totalorder %v1150, 144
      %vm1214 = vcmp.ge.s32.totalorder %v1151, 144
      %vm1215 = vcmp.ge.s32.totalorder %v1152, 144
      %vm1216 = vcmp.ge.s32.totalorder %v1153, 144
      %vm1217 = vcmp.ge.s32.totalorder %v1154, 144
      %vm1218 = vcmp.ge.s32.totalorder %v1155, 144
      %vm1219 = vcmp.ge.s32.totalorder %v1156, 144
      %vm1220 = vcmp.ge.s32.totalorder %v1157, 144
      %vm1221 = vcmp.ge.s32.totalorder %v1158, 144
      %vm1222 = vcmp.ge.s32.totalorder %v1159, 144
      %vm1223 = vcmp.ge.s32.totalorder %v1160, 144
      %s1224 = scalar_select %p547, 1, 0
      %v1225 = vstv %s1224
      %vm1226 = vcmp.eq.s32.totalorder %v1225, 1
      %vm1227 = vmand %vm1226, %vm1204
      %vm1228 = vmand %vm1226, %vm1205
      %vm1229 = vmand %vm1226, %vm1206
      %vm1230 = vmand %vm1226, %vm1207
      %vm1231 = vmand %vm1226, %vm1208
      %vm1232 = vmand %vm1226, %vm1209
      %vm1233 = vmand %vm1226, %vm1210
      %vm1234 = vmand %vm1226, %vm1211
      %vm1235 = vmand %vm1226, %vm1212
      %vm1236 = vmand %vm1226, %vm1213
      %vm1237 = vmand %vm1226, %vm1214
      %vm1238 = vmand %vm1226, %vm1215
      %vm1239 = vmand %vm1226, %vm1216
      %vm1240 = vmand %vm1226, %vm1217
      %vm1241 = vmand %vm1226, %vm1218
      %vm1242 = vmand %vm1226, %vm1219
      %vm1243 = vmand %vm1226, %vm1220
      %vm1244 = vmand %vm1226, %vm1221
      %vm1245 = vmand %vm1226, %vm1222
      %vm1246 = vmand %vm1226, %vm1223
      %vm1247 = vmor %vm1184, %vm1227
      %vm1248 = vmor %vm1185, %vm1228
      %vm1249 = vmor %vm1186, %vm1229
      %vm1250 = vmor %vm1187, %vm1230
      %vm1251 = vmor %vm1188, %vm1231
      %vm1252 = vmor %vm1189, %vm1232
      %vm1253 = vmor %vm1190, %vm1233
      %vm1254 = vmor %vm1191, %vm1234
      %vm1255 = vmor %vm1192, %vm1235
      %vm1256 = vmor %vm1193, %vm1236
      %vm1257 = vmor %vm1194, %vm1237
      %vm1258 = vmor %vm1195, %vm1238
      %vm1259 = vmor %vm1196, %vm1239
      %vm1260 = vmor %vm1197, %vm1240
      %vm1261 = vmor %vm1198, %vm1241
      %vm1262 = vmor %vm1199, %vm1242
      %vm1263 = vmor %vm1200, %vm1243
      %vm1264 = vmor %vm1201, %vm1244
      %vm1265 = vmor %vm1202, %vm1245
      %vm1266 = vmor %vm1203, %vm1246
      %v1267 = vsel %vm1247, 1, 0
      %v1268 = vsel %vm1248, 1, 0
      %v1269 = vsel %vm1249, 1, 0
      %v1270 = vsel %vm1250, 1, 0
      %v1271 = vsel %vm1251, 1, 0
      %v1272 = vsel %vm1252, 1, 0
      %v1273 = vsel %vm1253, 1, 0
      %v1274 = vsel %vm1254, 1, 0
      %v1275 = vsel %vm1255, 1, 0
      %v1276 = vsel %vm1256, 1, 0
      %v1277 = vsel %vm1257, 1, 0
      %v1278 = vsel %vm1258, 1, 0
      %v1279 = vsel %vm1259, 1, 0
      %v1280 = vsel %vm1260, 1, 0
      %v1281 = vsel %vm1261, 1, 0
      %v1282 = vsel %vm1262, 1, 0
      %v1283 = vsel %vm1263, 1, 0
      %v1284 = vsel %vm1264, 1, 0
      %v1285 = vsel %vm1265, 1, 0
      %v1286 = vsel %vm1266, 1, 0
      %vm1287 = vcmp.eq.s32.totalorder %v1267, 1
      %vm1288 = vcmp.eq.s32.totalorder %v1268, 1
      %vm1289 = vcmp.eq.s32.totalorder %v1269, 1
      %vm1290 = vcmp.eq.s32.totalorder %v1270, 1
      %vm1291 = vcmp.eq.s32.totalorder %v1271, 1
      %vm1292 = vcmp.eq.s32.totalorder %v1272, 1
      %vm1293 = vcmp.eq.s32.totalorder %v1273, 1
      %vm1294 = vcmp.eq.s32.totalorder %v1274, 1
      %vm1295 = vcmp.eq.s32.totalorder %v1275, 1
      %vm1296 = vcmp.eq.s32.totalorder %v1276, 1
      %vm1297 = vcmp.eq.s32.totalorder %v1277, 1
      %vm1298 = vcmp.eq.s32.totalorder %v1278, 1
      %vm1299 = vcmp.eq.s32.totalorder %v1279, 1
      %vm1300 = vcmp.eq.s32.totalorder %v1280, 1
      %vm1301 = vcmp.eq.s32.totalorder %v1281, 1
      %vm1302 = vcmp.eq.s32.totalorder %v1282, 1
      %vm1303 = vcmp.eq.s32.totalorder %v1283, 1
      %vm1304 = vcmp.eq.s32.totalorder %v1284, 1
      %vm1305 = vcmp.eq.s32.totalorder %v1285, 1
      %vm1306 = vcmp.eq.s32.totalorder %v1286, 1
      %v1307 = vsel %vm1287, 0.0, %v1042
      %v1308 = vsel %vm1288, 0.0, %v1047
      %v1309 = vsel %vm1289, 0.0, %v1052
      %v1310 = vsel %vm1290, 0.0, %v1057
      %v1311 = vsel %vm1291, 0.0, %v1062
      %v1312 = vsel %vm1292, 0.0, %v1067
      %v1313 = vsel %vm1293, 0.0, %v1072
      %v1314 = vsel %vm1294, 0.0, %v1077
      %v1315 = vsel %vm1295, 0.0, %v1082
      %v1316 = vsel %vm1296, 0.0, %v1087
      %v1317 = vsel %vm1297, 0.0, %v1092
      %v1318 = vsel %vm1298, 0.0, %v1097
      %v1319 = vsel %vm1299, 0.0, %v1102
      %v1320 = vsel %vm1300, 0.0, %v1107
      %v1321 = vsel %vm1301, 0.0, %v1112
      %v1322 = vsel %vm1302, 0.0, %v1117
      %v1323 = vsel %vm1303, 0.0, %v1122
      %v1324 = vsel %vm1304, 0.0, %v1127
      %v1325 = vsel %vm1305, 0.0, %v1132
      %v1326 = vsel %vm1306, 0.0, %v1137
      %vm1327 = vcmp.lt.s32.totalorder %v1141, 0
      %v1328 = vsub.s32 0, %v1141
      %v1329 = vsel %vm1327, %v1328, %v1141
      %v1330 = vshrl.u32 %v1329, 4
      %v1331 = vand.u32 %v1329, 15
      %v1332 = vsub.s32 0, %v1331
      %v1333 = vsel %vm1327, %v1332, %v1331
      %vm1334 = vcmp.lt.s32.totalorder %v1142, 0
      %v1335 = vsub.s32 0, %v1142
      %v1336 = vsel %vm1334, %v1335, %v1142
      %v1337 = vshrl.u32 %v1336, 4
      %v1338 = vand.u32 %v1336, 15
      %v1339 = vsub.s32 0, %v1338
      %v1340 = vsel %vm1334, %v1339, %v1338
      %vm1341 = vcmp.lt.s32.totalorder %v1143, 0
      %v1342 = vsub.s32 0, %v1143
      %v1343 = vsel %vm1341, %v1342, %v1143
      %v1344 = vshrl.u32 %v1343, 4
      %v1345 = vand.u32 %v1343, 15
      %v1346 = vsub.s32 0, %v1345
      %v1347 = vsel %vm1341, %v1346, %v1345
      %vm1348 = vcmp.lt.s32.totalorder %v1144, 0
      %v1349 = vsub.s32 0, %v1144
      %v1350 = vsel %vm1348, %v1349, %v1144
      %v1351 = vshrl.u32 %v1350, 4
      %v1352 = vand.u32 %v1350, 15
      %v1353 = vsub.s32 0, %v1352
      %v1354 = vsel %vm1348, %v1353, %v1352
      %vm1355 = vcmp.lt.s32.totalorder %v1145, 0
      %v1356 = vsub.s32 0, %v1145
      %v1357 = vsel %vm1355, %v1356, %v1145
      %v1358 = vshrl.u32 %v1357, 4
      %v1359 = vand.u32 %v1357, 15
      %v1360 = vsub.s32 0, %v1359
      %v1361 = vsel %vm1355, %v1360, %v1359
      %vm1362 = vcmp.lt.s32.totalorder %v1146, 0
      %v1363 = vsub.s32 0, %v1146
      %v1364 = vsel %vm1362, %v1363, %v1146
      %v1365 = vshrl.u32 %v1364, 4
      %v1366 = vand.u32 %v1364, 15
      %v1367 = vsub.s32 0, %v1366
      %v1368 = vsel %vm1362, %v1367, %v1366
      %vm1369 = vcmp.lt.s32.totalorder %v1147, 0
      %v1370 = vsub.s32 0, %v1147
      %v1371 = vsel %vm1369, %v1370, %v1147
      %v1372 = vshrl.u32 %v1371, 4
      %v1373 = vand.u32 %v1371, 15
      %v1374 = vsub.s32 0, %v1373
      %v1375 = vsel %vm1369, %v1374, %v1373
      %vm1376 = vcmp.lt.s32.totalorder %v1148, 0
      %v1377 = vsub.s32 0, %v1148
      %v1378 = vsel %vm1376, %v1377, %v1148
      %v1379 = vshrl.u32 %v1378, 4
      %v1380 = vand.u32 %v1378, 15
      %v1381 = vsub.s32 0, %v1380
      %v1382 = vsel %vm1376, %v1381, %v1380
      %vm1383 = vcmp.lt.s32.totalorder %v1149, 0
      %v1384 = vsub.s32 0, %v1149
      %v1385 = vsel %vm1383, %v1384, %v1149
      %v1386 = vshrl.u32 %v1385, 4
      %v1387 = vand.u32 %v1385, 15
      %v1388 = vsub.s32 0, %v1387
      %v1389 = vsel %vm1383, %v1388, %v1387
      %vm1390 = vcmp.lt.s32.totalorder %v1150, 0
      %v1391 = vsub.s32 0, %v1150
      %v1392 = vsel %vm1390, %v1391, %v1150
      %v1393 = vshrl.u32 %v1392, 4
      %v1394 = vand.u32 %v1392, 15
      %v1395 = vsub.s32 0, %v1394
      %v1396 = vsel %vm1390, %v1395, %v1394
      %vm1397 = vcmp.lt.s32.totalorder %v1151, 0
      %v1398 = vsub.s32 0, %v1151
      %v1399 = vsel %vm1397, %v1398, %v1151
      %v1400 = vshrl.u32 %v1399, 4
      %v1401 = vand.u32 %v1399, 15
      %v1402 = vsub.s32 0, %v1401
      %v1403 = vsel %vm1397, %v1402, %v1401
      %vm1404 = vcmp.lt.s32.totalorder %v1152, 0
      %v1405 = vsub.s32 0, %v1152
      %v1406 = vsel %vm1404, %v1405, %v1152
      %v1407 = vshrl.u32 %v1406, 4
      %v1408 = vand.u32 %v1406, 15
      %v1409 = vsub.s32 0, %v1408
      %v1410 = vsel %vm1404, %v1409, %v1408
      %vm1411 = vcmp.lt.s32.totalorder %v1153, 0
      %v1412 = vsub.s32 0, %v1153
      %v1413 = vsel %vm1411, %v1412, %v1153
      %v1414 = vshrl.u32 %v1413, 4
      %v1415 = vand.u32 %v1413, 15
      %v1416 = vsub.s32 0, %v1415
      %v1417 = vsel %vm1411, %v1416, %v1415
      %vm1418 = vcmp.lt.s32.totalorder %v1154, 0
      %v1419 = vsub.s32 0, %v1154
      %v1420 = vsel %vm1418, %v1419, %v1154
      %v1421 = vshrl.u32 %v1420, 4
      %v1422 = vand.u32 %v1420, 15
      %v1423 = vsub.s32 0, %v1422
      %v1424 = vsel %vm1418, %v1423, %v1422
      %vm1425 = vcmp.lt.s32.totalorder %v1155, 0
      %v1426 = vsub.s32 0, %v1155
      %v1427 = vsel %vm1425, %v1426, %v1155
      %v1428 = vshrl.u32 %v1427, 4
      %v1429 = vand.u32 %v1427, 15
      %v1430 = vsub.s32 0, %v1429
      %v1431 = vsel %vm1425, %v1430, %v1429
      %vm1432 = vcmp.lt.s32.totalorder %v1156, 0
      %v1433 = vsub.s32 0, %v1156
      %v1434 = vsel %vm1432, %v1433, %v1156
      %v1435 = vshrl.u32 %v1434, 4
      %v1436 = vand.u32 %v1434, 15
      %v1437 = vsub.s32 0, %v1436
      %v1438 = vsel %vm1432, %v1437, %v1436
      %vm1439 = vcmp.lt.s32.totalorder %v1157, 0
      %v1440 = vsub.s32 0, %v1157
      %v1441 = vsel %vm1439, %v1440, %v1157
      %v1442 = vshrl.u32 %v1441, 4
      %v1443 = vand.u32 %v1441, 15
      %v1444 = vsub.s32 0, %v1443
      %v1445 = vsel %vm1439, %v1444, %v1443
      %vm1446 = vcmp.lt.s32.totalorder %v1158, 0
      %v1447 = vsub.s32 0, %v1158
      %v1448 = vsel %vm1446, %v1447, %v1158
      %v1449 = vshrl.u32 %v1448, 4
      %v1450 = vand.u32 %v1448, 15
      %v1451 = vsub.s32 0, %v1450
      %v1452 = vsel %vm1446, %v1451, %v1450
      %vm1453 = vcmp.lt.s32.totalorder %v1159, 0
      %v1454 = vsub.s32 0, %v1159
      %v1455 = vsel %vm1453, %v1454, %v1159
      %v1456 = vshrl.u32 %v1455, 4
      %v1457 = vand.u32 %v1455, 15
      %v1458 = vsub.s32 0, %v1457
      %v1459 = vsel %vm1453, %v1458, %v1457
      %vm1460 = vcmp.lt.s32.totalorder %v1160, 0
      %v1461 = vsub.s32 0, %v1160
      %v1462 = vsel %vm1460, %v1461, %v1160
      %v1463 = vshrl.u32 %v1462, 4
      %v1464 = vand.u32 %v1462, 15
      %v1465 = vsub.s32 0, %v1464
      %v1466 = vsel %vm1460, %v1465, %v1464
      %vm1467 = vcmp.ne.s32.totalorder %v1333, 0
      %vm1468 = vcmp.ne.s32.totalorder %v1340, 0
      %vm1469 = vcmp.ne.s32.totalorder %v1347, 0
      %vm1470 = vcmp.ne.s32.totalorder %v1354, 0
      %vm1471 = vcmp.ne.s32.totalorder %v1361, 0
      %vm1472 = vcmp.ne.s32.totalorder %v1368, 0
      %vm1473 = vcmp.ne.s32.totalorder %v1375, 0
      %vm1474 = vcmp.ne.s32.totalorder %v1382, 0
      %vm1475 = vcmp.ne.s32.totalorder %v1389, 0
      %vm1476 = vcmp.ne.s32.totalorder %v1396, 0
      %vm1477 = vcmp.ne.s32.totalorder %v1403, 0
      %vm1478 = vcmp.ne.s32.totalorder %v1410, 0
      %vm1479 = vcmp.ne.s32.totalorder %v1417, 0
      %vm1480 = vcmp.ne.s32.totalorder %v1424, 0
      %vm1481 = vcmp.ne.s32.totalorder %v1431, 0
      %vm1482 = vcmp.ne.s32.totalorder %v1438, 0
      %vm1483 = vcmp.ne.s32.totalorder %v1445, 0
      %vm1484 = vcmp.ne.s32.totalorder %v1452, 0
      %vm1485 = vcmp.ne.s32.totalorder %v1459, 0
      %vm1486 = vcmp.ne.s32.totalorder %v1466, 0
      %vm1487 = vcmp.lt.s32.totalorder %v1333, 0
      %vm1488 = vcmp.lt.s32.totalorder %v1340, 0
      %vm1489 = vcmp.lt.s32.totalorder %v1347, 0
      %vm1490 = vcmp.lt.s32.totalorder %v1354, 0
      %vm1491 = vcmp.lt.s32.totalorder %v1361, 0
      %vm1492 = vcmp.lt.s32.totalorder %v1368, 0
      %vm1493 = vcmp.lt.s32.totalorder %v1375, 0
      %vm1494 = vcmp.lt.s32.totalorder %v1382, 0
      %vm1495 = vcmp.lt.s32.totalorder %v1389, 0
      %vm1496 = vcmp.lt.s32.totalorder %v1396, 0
      %vm1497 = vcmp.lt.s32.totalorder %v1403, 0
      %vm1498 = vcmp.lt.s32.totalorder %v1410, 0
      %vm1499 = vcmp.lt.s32.totalorder %v1417, 0
      %vm1500 = vcmp.lt.s32.totalorder %v1424, 0
      %vm1501 = vcmp.lt.s32.totalorder %v1431, 0
      %vm1502 = vcmp.lt.s32.totalorder %v1438, 0
      %vm1503 = vcmp.lt.s32.totalorder %v1445, 0
      %vm1504 = vcmp.lt.s32.totalorder %v1452, 0
      %vm1505 = vcmp.lt.s32.totalorder %v1459, 0
      %vm1506 = vcmp.lt.s32.totalorder %v1466, 0
      %vm1507 = vmand %vm1487, %vm1467
      %vm1508 = vmand %vm1488, %vm1468
      %vm1509 = vmand %vm1489, %vm1469
      %vm1510 = vmand %vm1490, %vm1470
      %vm1511 = vmand %vm1491, %vm1471
      %vm1512 = vmand %vm1492, %vm1472
      %vm1513 = vmand %vm1493, %vm1473
      %vm1514 = vmand %vm1494, %vm1474
      %vm1515 = vmand %vm1495, %vm1475
      %vm1516 = vmand %vm1496, %vm1476
      %vm1517 = vmand %vm1497, %vm1477
      %vm1518 = vmand %vm1498, %vm1478
      %vm1519 = vmand %vm1499, %vm1479
      %vm1520 = vmand %vm1500, %vm1480
      %vm1521 = vmand %vm1501, %vm1481
      %vm1522 = vmand %vm1502, %vm1482
      %vm1523 = vmand %vm1503, %vm1483
      %vm1524 = vmand %vm1504, %vm1484
      %vm1525 = vmand %vm1505, %vm1485
      %vm1526 = vmand %vm1506, %vm1486
      %v1527 = vadd.s32 %v1333, 16
      %v1528 = vadd.s32 %v1340, 16
      %v1529 = vadd.s32 %v1347, 16
      %v1530 = vadd.s32 %v1354, 16
      %v1531 = vadd.s32 %v1361, 16
      %v1532 = vadd.s32 %v1368, 16
      %v1533 = vadd.s32 %v1375, 16
      %v1534 = vadd.s32 %v1382, 16
      %v1535 = vadd.s32 %v1389, 16
      %v1536 = vadd.s32 %v1396, 16
      %v1537 = vadd.s32 %v1403, 16
      %v1538 = vadd.s32 %v1410, 16
      %v1539 = vadd.s32 %v1417, 16
      %v1540 = vadd.s32 %v1424, 16
      %v1541 = vadd.s32 %v1431, 16
      %v1542 = vadd.s32 %v1438, 16
      %v1543 = vadd.s32 %v1445, 16
      %v1544 = vadd.s32 %v1452, 16
      %v1545 = vadd.s32 %v1459, 16
      %v1546 = vadd.s32 %v1466, 16
      %v1547 = vsel %vm1507, %v1527, %v1333
      %v1548 = vsel %vm1508, %v1528, %v1340
      %v1549 = vsel %vm1509, %v1529, %v1347
      %v1550 = vsel %vm1510, %v1530, %v1354
      %v1551 = vsel %vm1511, %v1531, %v1361
      %v1552 = vsel %vm1512, %v1532, %v1368
      %v1553 = vsel %vm1513, %v1533, %v1375
      %v1554 = vsel %vm1514, %v1534, %v1382
      %v1555 = vsel %vm1515, %v1535, %v1389
      %v1556 = vsel %vm1516, %v1536, %v1396
      %v1557 = vsel %vm1517, %v1537, %v1403
      %v1558 = vsel %vm1518, %v1538, %v1410
      %v1559 = vsel %vm1519, %v1539, %v1417
      %v1560 = vsel %vm1520, %v1540, %v1424
      %v1561 = vsel %vm1521, %v1541, %v1431
      %v1562 = vsel %vm1522, %v1542, %v1438
      %v1563 = vsel %vm1523, %v1543, %v1445
      %v1564 = vsel %vm1524, %v1544, %v1452
      %v1565 = vsel %vm1525, %v1545, %v1459
      %v1566 = vsel %vm1526, %v1546, %v1466
      %vm1567 = vcmp.eq.s32.totalorder %v1547, 0
      %vm1568 = vcmp.eq.s32.totalorder %v1548, 0
      %vm1569 = vcmp.eq.s32.totalorder %v1549, 0
      %vm1570 = vcmp.eq.s32.totalorder %v1550, 0
      %vm1571 = vcmp.eq.s32.totalorder %v1551, 0
      %vm1572 = vcmp.eq.s32.totalorder %v1552, 0
      %vm1573 = vcmp.eq.s32.totalorder %v1553, 0
      %vm1574 = vcmp.eq.s32.totalorder %v1554, 0
      %vm1575 = vcmp.eq.s32.totalorder %v1555, 0
      %vm1576 = vcmp.eq.s32.totalorder %v1556, 0
      %vm1577 = vcmp.eq.s32.totalorder %v1557, 0
      %vm1578 = vcmp.eq.s32.totalorder %v1558, 0
      %vm1579 = vcmp.eq.s32.totalorder %v1559, 0
      %vm1580 = vcmp.eq.s32.totalorder %v1560, 0
      %vm1581 = vcmp.eq.s32.totalorder %v1561, 0
      %vm1582 = vcmp.eq.s32.totalorder %v1562, 0
      %vm1583 = vcmp.eq.s32.totalorder %v1563, 0
      %vm1584 = vcmp.eq.s32.totalorder %v1564, 0
      %vm1585 = vcmp.eq.s32.totalorder %v1565, 0
      %vm1586 = vcmp.eq.s32.totalorder %v1566, 0
      %v1587 = vrot.slane %v1307, 7
      %v1588 = vrot.slane %v1308, 7
      %v1589 = vrot.slane %v1309, 7
      %v1590 = vrot.slane %v1310, 7
      %v1591 = vrot.slane %v1311, 7
      %v1592 = vrot.slane %v1312, 7
      %v1593 = vrot.slane %v1313, 7
      %v1594 = vrot.slane %v1314, 7
      %v1595 = vrot.slane %v1315, 7
      %v1596 = vrot.slane %v1316, 7
      %v1597 = vrot.slane %v1317, 7
      %v1598 = vrot.slane %v1318, 7
      %v1599 = vrot.slane %v1319, 7
      %v1600 = vrot.slane %v1320, 7
      %v1601 = vrot.slane %v1321, 7
      %v1602 = vrot.slane %v1322, 7
      %v1603 = vrot.slane %v1323, 7
      %v1604 = vrot.slane %v1324, 7
      %v1605 = vrot.slane %v1325, 7
      %v1606 = vrot.slane %v1326, 7
      %vm1607 = vcmp.lt.s32.totalorder %v1141, 1
      %v1608 = vsel %vm1607, %v1605, %v1606
      %v1609 = vsel %vm1607, %v1604, %v1605
      %v1610 = vsel %vm1607, %v1603, %v1604
      %v1611 = vsel %vm1607, %v1602, %v1603
      %v1612 = vsel %vm1607, %v1601, %v1602
      %v1613 = vsel %vm1607, %v1600, %v1601
      %v1614 = vsel %vm1607, %v1599, %v1600
      %v1615 = vsel %vm1607, %v1598, %v1599
      %v1616 = vsel %vm1607, %v1597, %v1598
      %v1617 = vsel %vm1607, %v1596, %v1597
      %v1618 = vsel %vm1607, %v1595, %v1596
      %v1619 = vsel %vm1607, %v1594, %v1595
      %v1620 = vsel %vm1607, %v1593, %v1594
      %v1621 = vsel %vm1607, %v1592, %v1593
      %v1622 = vsel %vm1607, %v1591, %v1592
      %v1623 = vsel %vm1607, %v1590, %v1591
      %v1624 = vsel %vm1607, %v1589, %v1590
      %v1625 = vsel %vm1607, %v1588, %v1589
      %v1626 = vsel %vm1607, %v1587, %v1588
      %v1627 = vsel %vm1607, %v1606, %v1587
      %v1628 = vsel %vm1567, 1, 0
      %v1629 = vsel %vm1568, 1, 0
      %v1630 = vsel %vm1569, 1, 0
      %v1631 = vsel %vm1570, 1, 0
      %v1632 = vsel %vm1571, 1, 0
      %v1633 = vsel %vm1572, 1, 0
      %v1634 = vsel %vm1573, 1, 0
      %v1635 = vsel %vm1574, 1, 0
      %v1636 = vsel %vm1575, 1, 0
      %v1637 = vsel %vm1576, 1, 0
      %v1638 = vsel %vm1577, 1, 0
      %v1639 = vsel %vm1578, 1, 0
      %v1640 = vsel %vm1579, 1, 0
      %v1641 = vsel %vm1580, 1, 0
      %v1642 = vsel %vm1581, 1, 0
      %v1643 = vsel %vm1582, 1, 0
      %v1644 = vsel %vm1583, 1, 0
      %v1645 = vsel %vm1584, 1, 0
      %v1646 = vsel %vm1585, 1, 0
      %v1647 = vsel %vm1586, 1, 0
      %vm1648 = vcmp.eq.s32.totalorder %v1628, 1
      %vm1649 = vcmp.eq.s32.totalorder %v1629, 1
      %vm1650 = vcmp.eq.s32.totalorder %v1630, 1
      %vm1651 = vcmp.eq.s32.totalorder %v1631, 1
      %vm1652 = vcmp.eq.s32.totalorder %v1632, 1
      %vm1653 = vcmp.eq.s32.totalorder %v1633, 1
      %vm1654 = vcmp.eq.s32.totalorder %v1634, 1
      %vm1655 = vcmp.eq.s32.totalorder %v1635, 1
      %vm1656 = vcmp.eq.s32.totalorder %v1636, 1
      %vm1657 = vcmp.eq.s32.totalorder %v1637, 1
      %vm1658 = vcmp.eq.s32.totalorder %v1638, 1
      %vm1659 = vcmp.eq.s32.totalorder %v1639, 1
      %vm1660 = vcmp.eq.s32.totalorder %v1640, 1
      %vm1661 = vcmp.eq.s32.totalorder %v1641, 1
      %vm1662 = vcmp.eq.s32.totalorder %v1642, 1
      %vm1663 = vcmp.eq.s32.totalorder %v1643, 1
      %vm1664 = vcmp.eq.s32.totalorder %v1644, 1
      %vm1665 = vcmp.eq.s32.totalorder %v1645, 1
      %vm1666 = vcmp.eq.s32.totalorder %v1646, 1
      %vm1667 = vcmp.eq.s32.totalorder %v1647, 1
      %v1668 = vsel %vm1648, 0.0, %v1627
      %v1669 = vsel %vm1649, 0.0, %v1626
      %v1670 = vsel %vm1650, 0.0, %v1625
      %v1671 = vsel %vm1651, 0.0, %v1624
      %v1672 = vsel %vm1652, 0.0, %v1623
      %v1673 = vsel %vm1653, 0.0, %v1622
      %v1674 = vsel %vm1654, 0.0, %v1621
      %v1675 = vsel %vm1655, 0.0, %v1620
      %v1676 = vsel %vm1656, 0.0, %v1619
      %v1677 = vsel %vm1657, 0.0, %v1618
      %v1678 = vsel %vm1658, 0.0, %v1617
      %v1679 = vsel %vm1659, 0.0, %v1616
      %v1680 = vsel %vm1660, 0.0, %v1615
      %v1681 = vsel %vm1661, 0.0, %v1614
      %v1682 = vsel %vm1662, 0.0, %v1613
      %v1683 = vsel %vm1663, 0.0, %v1612
      %v1684 = vsel %vm1664, 0.0, %v1611
      %v1685 = vsel %vm1665, 0.0, %v1610
      %v1686 = vsel %vm1666, 0.0, %v1609
      %v1687 = vsel %vm1667, 0.0, %v1608
      %vm1688 = vcmp.eq.s32.totalorder %v1547, 15
      %vm1689 = vcmp.eq.s32.totalorder %v1548, 15
      %vm1690 = vcmp.eq.s32.totalorder %v1549, 15
      %vm1691 = vcmp.eq.s32.totalorder %v1550, 15
      %vm1692 = vcmp.eq.s32.totalorder %v1551, 15
      %vm1693 = vcmp.eq.s32.totalorder %v1552, 15
      %vm1694 = vcmp.eq.s32.totalorder %v1553, 15
      %vm1695 = vcmp.eq.s32.totalorder %v1554, 15
      %vm1696 = vcmp.eq.s32.totalorder %v1555, 15
      %vm1697 = vcmp.eq.s32.totalorder %v1556, 15
      %vm1698 = vcmp.eq.s32.totalorder %v1557, 15
      %vm1699 = vcmp.eq.s32.totalorder %v1558, 15
      %vm1700 = vcmp.eq.s32.totalorder %v1559, 15
      %vm1701 = vcmp.eq.s32.totalorder %v1560, 15
      %vm1702 = vcmp.eq.s32.totalorder %v1561, 15
      %vm1703 = vcmp.eq.s32.totalorder %v1562, 15
      %vm1704 = vcmp.eq.s32.totalorder %v1563, 15
      %vm1705 = vcmp.eq.s32.totalorder %v1564, 15
      %vm1706 = vcmp.eq.s32.totalorder %v1565, 15
      %vm1707 = vcmp.eq.s32.totalorder %v1566, 15
      %v1708 = vrot.slane %v1307, 1
      %v1709 = vrot.slane %v1308, 1
      %v1710 = vrot.slane %v1309, 1
      %v1711 = vrot.slane %v1310, 1
      %v1712 = vrot.slane %v1311, 1
      %v1713 = vrot.slane %v1312, 1
      %v1714 = vrot.slane %v1313, 1
      %v1715 = vrot.slane %v1314, 1
      %v1716 = vrot.slane %v1315, 1
      %v1717 = vrot.slane %v1316, 1
      %v1718 = vrot.slane %v1317, 1
      %v1719 = vrot.slane %v1318, 1
      %v1720 = vrot.slane %v1319, 1
      %v1721 = vrot.slane %v1320, 1
      %v1722 = vrot.slane %v1321, 1
      %v1723 = vrot.slane %v1322, 1
      %v1724 = vrot.slane %v1323, 1
      %v1725 = vrot.slane %v1324, 1
      %v1726 = vrot.slane %v1325, 1
      %v1727 = vrot.slane %v1326, 1
      %vm1728 = vcmp.lt.s32.totalorder %v1141, 7
      %v1729 = vsel %vm1728, %v1726, %v1727
      %v1730 = vsel %vm1728, %v1725, %v1726
      %v1731 = vsel %vm1728, %v1724, %v1725
      %v1732 = vsel %vm1728, %v1723, %v1724
      %v1733 = vsel %vm1728, %v1722, %v1723
      %v1734 = vsel %vm1728, %v1721, %v1722
      %v1735 = vsel %vm1728, %v1720, %v1721
      %v1736 = vsel %vm1728, %v1719, %v1720
      %v1737 = vsel %vm1728, %v1718, %v1719
      %v1738 = vsel %vm1728, %v1717, %v1718
      %v1739 = vsel %vm1728, %v1716, %v1717
      %v1740 = vsel %vm1728, %v1715, %v1716
      %v1741 = vsel %vm1728, %v1714, %v1715
      %v1742 = vsel %vm1728, %v1713, %v1714
      %v1743 = vsel %vm1728, %v1712, %v1713
      %v1744 = vsel %vm1728, %v1711, %v1712
      %v1745 = vsel %vm1728, %v1710, %v1711
      %v1746 = vsel %vm1728, %v1709, %v1710
      %v1747 = vsel %vm1728, %v1708, %v1709
      %v1748 = vsel %vm1728, %v1727, %v1708
      %v1749 = vsel %vm1688, 1, 0
      %v1750 = vsel %vm1689, 1, 0
      %v1751 = vsel %vm1690, 1, 0
      %v1752 = vsel %vm1691, 1, 0
      %v1753 = vsel %vm1692, 1, 0
      %v1754 = vsel %vm1693, 1, 0
      %v1755 = vsel %vm1694, 1, 0
      %v1756 = vsel %vm1695, 1, 0
      %v1757 = vsel %vm1696, 1, 0
      %v1758 = vsel %vm1697, 1, 0
      %v1759 = vsel %vm1698, 1, 0
      %v1760 = vsel %vm1699, 1, 0
      %v1761 = vsel %vm1700, 1, 0
      %v1762 = vsel %vm1701, 1, 0
      %v1763 = vsel %vm1702, 1, 0
      %v1764 = vsel %vm1703, 1, 0
      %v1765 = vsel %vm1704, 1, 0
      %v1766 = vsel %vm1705, 1, 0
      %v1767 = vsel %vm1706, 1, 0
      %v1768 = vsel %vm1707, 1, 0
      %vm1769 = vcmp.eq.s32.totalorder %v1749, 1
      %vm1770 = vcmp.eq.s32.totalorder %v1750, 1
      %vm1771 = vcmp.eq.s32.totalorder %v1751, 1
      %vm1772 = vcmp.eq.s32.totalorder %v1752, 1
      %vm1773 = vcmp.eq.s32.totalorder %v1753, 1
      %vm1774 = vcmp.eq.s32.totalorder %v1754, 1
      %vm1775 = vcmp.eq.s32.totalorder %v1755, 1
      %vm1776 = vcmp.eq.s32.totalorder %v1756, 1
      %vm1777 = vcmp.eq.s32.totalorder %v1757, 1
      %vm1778 = vcmp.eq.s32.totalorder %v1758, 1
      %vm1779 = vcmp.eq.s32.totalorder %v1759, 1
      %vm1780 = vcmp.eq.s32.totalorder %v1760, 1
      %vm1781 = vcmp.eq.s32.totalorder %v1761, 1
      %vm1782 = vcmp.eq.s32.totalorder %v1762, 1
      %vm1783 = vcmp.eq.s32.totalorder %v1763, 1
      %vm1784 = vcmp.eq.s32.totalorder %v1764, 1
      %vm1785 = vcmp.eq.s32.totalorder %v1765, 1
      %vm1786 = vcmp.eq.s32.totalorder %v1766, 1
      %vm1787 = vcmp.eq.s32.totalorder %v1767, 1
      %vm1788 = vcmp.eq.s32.totalorder %v1768, 1
      %v1789 = vsel %vm1769, 0.0, %v1747
      %v1790 = vsel %vm1770, 0.0, %v1746
      %v1791 = vsel %vm1771, 0.0, %v1745
      %v1792 = vsel %vm1772, 0.0, %v1744
      %v1793 = vsel %vm1773, 0.0, %v1743
      %v1794 = vsel %vm1774, 0.0, %v1742
      %v1795 = vsel %vm1775, 0.0, %v1741
      %v1796 = vsel %vm1776, 0.0, %v1740
      %v1797 = vsel %vm1777, 0.0, %v1739
      %v1798 = vsel %vm1778, 0.0, %v1738
      %v1799 = vsel %vm1779, 0.0, %v1737
      %v1800 = vsel %vm1780, 0.0, %v1736
      %v1801 = vsel %vm1781, 0.0, %v1735
      %v1802 = vsel %vm1782, 0.0, %v1734
      %v1803 = vsel %vm1783, 0.0, %v1733
      %v1804 = vsel %vm1784, 0.0, %v1732
      %v1805 = vsel %vm1785, 0.0, %v1731
      %v1806 = vsel %vm1786, 0.0, %v1730
      %v1807 = vsel %vm1787, 0.0, %v1729
      %v1808 = vsel %vm1788, 0.0, %v1748
      %v1809 = vlaneseq
      %v1810 = vshrl.u32 %v1809, 7
      %v1811 = vsub.s32 0, %v1810
      %v1812 = vrot.slane %v544, %v1811
      %v1813 = vmul.f32 %v1668, %v1812
      %v1814 = vmul.f32 %v1669, %v1812
      %v1815 = vmul.f32 %v1670, %v1812
      %v1816 = vmul.f32 %v1671, %v1812
      %v1817 = vmul.f32 %v1672, %v1812
      %v1818 = vmul.f32 %v1673, %v1812
      %v1819 = vmul.f32 %v1674, %v1812
      %v1820 = vmul.f32 %v1675, %v1812
      %v1821 = vmul.f32 %v1676, %v1812
      %v1822 = vmul.f32 %v1677, %v1812
      %v1823 = vmul.f32 %v1678, %v1812
      %v1824 = vmul.f32 %v1679, %v1812
      %v1825 = vmul.f32 %v1680, %v1812
      %v1826 = vmul.f32 %v1681, %v1812
      %v1827 = vmul.f32 %v1682, %v1812
      %v1828 = vmul.f32 %v1683, %v1812
      %v1829 = vadd.f32 %v1813, 0.0
      %v1830 = vadd.f32 %v1814, 0.0
      %v1831 = vadd.f32 %v1815, 0.0
      %v1832 = vadd.f32 %v1816, 0.0
      %v1833 = vadd.f32 %v1817, 0.0
      %v1834 = vadd.f32 %v1818, 0.0
      %v1835 = vadd.f32 %v1819, 0.0
      %v1836 = vadd.f32 %v1820, 0.0
      %v1837 = vadd.f32 %v1821, 0.0
      %v1838 = vadd.f32 %v1822, 0.0
      %v1839 = vadd.f32 %v1823, 0.0
      %v1840 = vadd.f32 %v1824, 0.0
      %v1841 = vadd.f32 %v1825, 0.0
      %v1842 = vadd.f32 %v1826, 0.0
      %v1843 = vadd.f32 %v1827, 0.0
      %v1844 = vadd.f32 %v1828, 0.0
      %v1845 = vlaneseq
      %v1846 = vshrl.u32 %v1845, 7
      %v1847 = vsub.s32 1, %v1846
      %v1848 = vrot.slane %v544, %v1847
      %v1849 = vmul.f32 %v1307, %v1848
      %v1850 = vmul.f32 %v1308, %v1848
      %v1851 = vmul.f32 %v1309, %v1848
      %v1852 = vmul.f32 %v1310, %v1848
      %v1853 = vmul.f32 %v1311, %v1848
      %v1854 = vmul.f32 %v1312, %v1848
      %v1855 = vmul.f32 %v1313, %v1848
      %v1856 = vmul.f32 %v1314, %v1848
      %v1857 = vmul.f32 %v1315, %v1848
      %v1858 = vmul.f32 %v1316, %v1848
      %v1859 = vmul.f32 %v1317, %v1848
      %v1860 = vmul.f32 %v1318, %v1848
      %v1861 = vmul.f32 %v1319, %v1848
      %v1862 = vmul.f32 %v1320, %v1848
      %v1863 = vmul.f32 %v1321, %v1848
      %v1864 = vmul.f32 %v1322, %v1848
      %v1865 = vadd.f32 %v1829, %v1849
      %v1866 = vadd.f32 %v1830, %v1850
      %v1867 = vadd.f32 %v1831, %v1851
      %v1868 = vadd.f32 %v1832, %v1852
      %v1869 = vadd.f32 %v1833, %v1853
      %v1870 = vadd.f32 %v1834, %v1854
      %v1871 = vadd.f32 %v1835, %v1855
      %v1872 = vadd.f32 %v1836, %v1856
      %v1873 = vadd.f32 %v1837, %v1857
      %v1874 = vadd.f32 %v1838, %v1858
      %v1875 = vadd.f32 %v1839, %v1859
      %v1876 = vadd.f32 %v1840, %v1860
      %v1877 = vadd.f32 %v1841, %v1861
      %v1878 = vadd.f32 %v1842, %v1862
      %v1879 = vadd.f32 %v1843, %v1863
      %v1880 = vadd.f32 %v1844, %v1864
      %v1881 = vlaneseq
      %v1882 = vshrl.u32 %v1881, 7
      %v1883 = vsub.s32 2, %v1882
      %v1884 = vrot.slane %v544, %v1883
      %v1885 = vmul.f32 %v1789, %v1884
      %v1886 = vmul.f32 %v1790, %v1884
      %v1887 = vmul.f32 %v1791, %v1884
      %v1888 = vmul.f32 %v1792, %v1884
      %v1889 = vmul.f32 %v1793, %v1884
      %v1890 = vmul.f32 %v1794, %v1884
      %v1891 = vmul.f32 %v1795, %v1884
      %v1892 = vmul.f32 %v1796, %v1884
      %v1893 = vmul.f32 %v1797, %v1884
      %v1894 = vmul.f32 %v1798, %v1884
      %v1895 = vmul.f32 %v1799, %v1884
      %v1896 = vmul.f32 %v1800, %v1884
      %v1897 = vmul.f32 %v1801, %v1884
      %v1898 = vmul.f32 %v1802, %v1884
      %v1899 = vmul.f32 %v1803, %v1884
      %v1900 = vmul.f32 %v1804, %v1884
      %v1901 = vadd.f32 %v1865, %v1885
      %v1902 = vadd.f32 %v1866, %v1886
      %v1903 = vadd.f32 %v1867, %v1887
      %v1904 = vadd.f32 %v1868, %v1888
      %v1905 = vadd.f32 %v1869, %v1889
      %v1906 = vadd.f32 %v1870, %v1890
      %v1907 = vadd.f32 %v1871, %v1891
      %v1908 = vadd.f32 %v1872, %v1892
      %v1909 = vadd.f32 %v1873, %v1893
      %v1910 = vadd.f32 %v1874, %v1894
      %v1911 = vadd.f32 %v1875, %v1895
      %v1912 = vadd.f32 %v1876, %v1896
      %v1913 = vadd.f32 %v1877, %v1897
      %v1914 = vadd.f32 %v1878, %v1898
      %v1915 = vadd.f32 %v1879, %v1899
      %v1916 = vadd.f32 %v1880, %v1900
      %v1917 = vlaneseq
      %v1918 = vshrl.u32 %v1917, 7
      %v1919 = vsub.s32 3, %v1918
      %v1920 = vrot.slane %v544, %v1919
      %v1921 = vmul.f32 %v1670, %v1920
      %v1922 = vmul.f32 %v1671, %v1920
      %v1923 = vmul.f32 %v1672, %v1920
      %v1924 = vmul.f32 %v1673, %v1920
      %v1925 = vmul.f32 %v1674, %v1920
      %v1926 = vmul.f32 %v1675, %v1920
      %v1927 = vmul.f32 %v1676, %v1920
      %v1928 = vmul.f32 %v1677, %v1920
      %v1929 = vmul.f32 %v1678, %v1920
      %v1930 = vmul.f32 %v1679, %v1920
      %v1931 = vmul.f32 %v1680, %v1920
      %v1932 = vmul.f32 %v1681, %v1920
      %v1933 = vmul.f32 %v1682, %v1920
      %v1934 = vmul.f32 %v1683, %v1920
      %v1935 = vmul.f32 %v1684, %v1920
      %v1936 = vmul.f32 %v1685, %v1920
      %v1937 = vadd.f32 %v1901, %v1921
      %v1938 = vadd.f32 %v1902, %v1922
      %v1939 = vadd.f32 %v1903, %v1923
      %v1940 = vadd.f32 %v1904, %v1924
      %v1941 = vadd.f32 %v1905, %v1925
      %v1942 = vadd.f32 %v1906, %v1926
      %v1943 = vadd.f32 %v1907, %v1927
      %v1944 = vadd.f32 %v1908, %v1928
      %v1945 = vadd.f32 %v1909, %v1929
      %v1946 = vadd.f32 %v1910, %v1930
      %v1947 = vadd.f32 %v1911, %v1931
      %v1948 = vadd.f32 %v1912, %v1932
      %v1949 = vadd.f32 %v1913, %v1933
      %v1950 = vadd.f32 %v1914, %v1934
      %v1951 = vadd.f32 %v1915, %v1935
      %v1952 = vadd.f32 %v1916, %v1936
      %v1953 = vlaneseq
      %v1954 = vshrl.u32 %v1953, 7
      %v1955 = vsub.s32 4, %v1954
      %v1956 = vrot.slane %v544, %v1955
      %v1957 = vmul.f32 %v1309, %v1956
      %v1958 = vmul.f32 %v1310, %v1956
      %v1959 = vmul.f32 %v1311, %v1956
      %v1960 = vmul.f32 %v1312, %v1956
      %v1961 = vmul.f32 %v1313, %v1956
      %v1962 = vmul.f32 %v1314, %v1956
      %v1963 = vmul.f32 %v1315, %v1956
      %v1964 = vmul.f32 %v1316, %v1956
      %v1965 = vmul.f32 %v1317, %v1956
      %v1966 = vmul.f32 %v1318, %v1956
      %v1967 = vmul.f32 %v1319, %v1956
      %v1968 = vmul.f32 %v1320, %v1956
      %v1969 = vmul.f32 %v1321, %v1956
      %v1970 = vmul.f32 %v1322, %v1956
      %v1971 = vmul.f32 %v1323, %v1956
      %v1972 = vmul.f32 %v1324, %v1956
      %v1973 = vadd.f32 %v1937, %v1957
      %v1974 = vadd.f32 %v1938, %v1958
      %v1975 = vadd.f32 %v1939, %v1959
      %v1976 = vadd.f32 %v1940, %v1960
      %v1977 = vadd.f32 %v1941, %v1961
      %v1978 = vadd.f32 %v1942, %v1962
      %v1979 = vadd.f32 %v1943, %v1963
      %v1980 = vadd.f32 %v1944, %v1964
      %v1981 = vadd.f32 %v1945, %v1965
      %v1982 = vadd.f32 %v1946, %v1966
      %v1983 = vadd.f32 %v1947, %v1967
      %v1984 = vadd.f32 %v1948, %v1968
      %v1985 = vadd.f32 %v1949, %v1969
      %v1986 = vadd.f32 %v1950, %v1970
      %v1987 = vadd.f32 %v1951, %v1971
      %v1988 = vadd.f32 %v1952, %v1972
      %v1989 = vlaneseq
      %v1990 = vshrl.u32 %v1989, 7
      %v1991 = vsub.s32 5, %v1990
      %v1992 = vrot.slane %v544, %v1991
      %v1993 = vmul.f32 %v1791, %v1992
      %v1994 = vmul.f32 %v1792, %v1992
      %v1995 = vmul.f32 %v1793, %v1992
      %v1996 = vmul.f32 %v1794, %v1992
      %v1997 = vmul.f32 %v1795, %v1992
      %v1998 = vmul.f32 %v1796, %v1992
      %v1999 = vmul.f32 %v1797, %v1992
      %v2000 = vmul.f32 %v1798, %v1992
      %v2001 = vmul.f32 %v1799, %v1992
      %v2002 = vmul.f32 %v1800, %v1992
      %v2003 = vmul.f32 %v1801, %v1992
      %v2004 = vmul.f32 %v1802, %v1992
      %v2005 = vmul.f32 %v1803, %v1992
      %v2006 = vmul.f32 %v1804, %v1992
      %v2007 = vmul.f32 %v1805, %v1992
      %v2008 = vmul.f32 %v1806, %v1992
      %v2009 = vadd.f32 %v1973, %v1993
      %v2010 = vadd.f32 %v1974, %v1994
      %v2011 = vadd.f32 %v1975, %v1995
      %v2012 = vadd.f32 %v1976, %v1996
      %v2013 = vadd.f32 %v1977, %v1997
      %v2014 = vadd.f32 %v1978, %v1998
      %v2015 = vadd.f32 %v1979, %v1999
      %v2016 = vadd.f32 %v1980, %v2000
      %v2017 = vadd.f32 %v1981, %v2001
      %v2018 = vadd.f32 %v1982, %v2002
      %v2019 = vadd.f32 %v1983, %v2003
      %v2020 = vadd.f32 %v1984, %v2004
      %v2021 = vadd.f32 %v1985, %v2005
      %v2022 = vadd.f32 %v1986, %v2006
      %v2023 = vadd.f32 %v1987, %v2007
      %v2024 = vadd.f32 %v1988, %v2008
      %v2025 = vlaneseq
      %v2026 = vshrl.u32 %v2025, 7
      %v2027 = vsub.s32 6, %v2026
      %v2028 = vrot.slane %v544, %v2027
      %v2029 = vmul.f32 %v1672, %v2028
      %v2030 = vmul.f32 %v1673, %v2028
      %v2031 = vmul.f32 %v1674, %v2028
      %v2032 = vmul.f32 %v1675, %v2028
      %v2033 = vmul.f32 %v1676, %v2028
      %v2034 = vmul.f32 %v1677, %v2028
      %v2035 = vmul.f32 %v1678, %v2028
      %v2036 = vmul.f32 %v1679, %v2028
      %v2037 = vmul.f32 %v1680, %v2028
      %v2038 = vmul.f32 %v1681, %v2028
      %v2039 = vmul.f32 %v1682, %v2028
      %v2040 = vmul.f32 %v1683, %v2028
      %v2041 = vmul.f32 %v1684, %v2028
      %v2042 = vmul.f32 %v1685, %v2028
      %v2043 = vmul.f32 %v1686, %v2028
      %v2044 = vmul.f32 %v1687, %v2028
      %v2045 = vadd.f32 %v2009, %v2029
      %v2046 = vadd.f32 %v2010, %v2030
      %v2047 = vadd.f32 %v2011, %v2031
      %v2048 = vadd.f32 %v2012, %v2032
      %v2049 = vadd.f32 %v2013, %v2033
      %v2050 = vadd.f32 %v2014, %v2034
      %v2051 = vadd.f32 %v2015, %v2035
      %v2052 = vadd.f32 %v2016, %v2036
      %v2053 = vadd.f32 %v2017, %v2037
      %v2054 = vadd.f32 %v2018, %v2038
      %v2055 = vadd.f32 %v2019, %v2039
      %v2056 = vadd.f32 %v2020, %v2040
      %v2057 = vadd.f32 %v2021, %v2041
      %v2058 = vadd.f32 %v2022, %v2042
      %v2059 = vadd.f32 %v2023, %v2043
      %v2060 = vadd.f32 %v2024, %v2044
      %v2061 = vlaneseq
      %v2062 = vshrl.u32 %v2061, 7
      %v2063 = vsub.s32 7, %v2062
      %v2064 = vrot.slane %v544, %v2063
      %v2065 = vmul.f32 %v1311, %v2064
      %v2066 = vmul.f32 %v1312, %v2064
      %v2067 = vmul.f32 %v1313, %v2064
      %v2068 = vmul.f32 %v1314, %v2064
      %v2069 = vmul.f32 %v1315, %v2064
      %v2070 = vmul.f32 %v1316, %v2064
      %v2071 = vmul.f32 %v1317, %v2064
      %v2072 = vmul.f32 %v1318, %v2064
      %v2073 = vmul.f32 %v1319, %v2064
      %v2074 = vmul.f32 %v1320, %v2064
      %v2075 = vmul.f32 %v1321, %v2064
      %v2076 = vmul.f32 %v1322, %v2064
      %v2077 = vmul.f32 %v1323, %v2064
      %v2078 = vmul.f32 %v1324, %v2064
      %v2079 = vmul.f32 %v1325, %v2064
      %v2080 = vmul.f32 %v1326, %v2064
      %v2081 = vadd.f32 %v2045, %v2065
      %v2082 = vadd.f32 %v2046, %v2066
      %v2083 = vadd.f32 %v2047, %v2067
      %v2084 = vadd.f32 %v2048, %v2068
      %v2085 = vadd.f32 %v2049, %v2069
      %v2086 = vadd.f32 %v2050, %v2070
      %v2087 = vadd.f32 %v2051, %v2071
      %v2088 = vadd.f32 %v2052, %v2072
      %v2089 = vadd.f32 %v2053, %v2073
      %v2090 = vadd.f32 %v2054, %v2074
      %v2091 = vadd.f32 %v2055, %v2075
      %v2092 = vadd.f32 %v2056, %v2076
      %v2093 = vadd.f32 %v2057, %v2077
      %v2094 = vadd.f32 %v2058, %v2078
      %v2095 = vadd.f32 %v2059, %v2079
      %v2096 = vadd.f32 %v2060, %v2080
      %v2097 = vlaneseq
      %v2098 = vshrl.u32 %v2097, 7
      %v2099 = vsub.s32 0, %v2098
      %v2100 = vrot.slane %v545, %v2099
      %v2101 = vmul.f32 %v1793, %v2100
      %v2102 = vmul.f32 %v1794, %v2100
      %v2103 = vmul.f32 %v1795, %v2100
      %v2104 = vmul.f32 %v1796, %v2100
      %v2105 = vmul.f32 %v1797, %v2100
      %v2106 = vmul.f32 %v1798, %v2100
      %v2107 = vmul.f32 %v1799, %v2100
      %v2108 = vmul.f32 %v1800, %v2100
      %v2109 = vmul.f32 %v1801, %v2100
      %v2110 = vmul.f32 %v1802, %v2100
      %v2111 = vmul.f32 %v1803, %v2100
      %v2112 = vmul.f32 %v1804, %v2100
      %v2113 = vmul.f32 %v1805, %v2100
      %v2114 = vmul.f32 %v1806, %v2100
      %v2115 = vmul.f32 %v1807, %v2100
      %v2116 = vmul.f32 %v1808, %v2100
      %v2117 = vadd.f32 %v2081, %v2101
      %v2118 = vadd.f32 %v2082, %v2102
      %v2119 = vadd.f32 %v2083, %v2103
      %v2120 = vadd.f32 %v2084, %v2104
      %v2121 = vadd.f32 %v2085, %v2105
      %v2122 = vadd.f32 %v2086, %v2106
      %v2123 = vadd.f32 %v2087, %v2107
      %v2124 = vadd.f32 %v2088, %v2108
      %v2125 = vadd.f32 %v2089, %v2109
      %v2126 = vadd.f32 %v2090, %v2110
      %v2127 = vadd.f32 %v2091, %v2111
      %v2128 = vadd.f32 %v2092, %v2112
      %v2129 = vadd.f32 %v2093, %v2113
      %v2130 = vadd.f32 %v2094, %v2114
      %v2131 = vadd.f32 %v2095, %v2115
      %v2132 = vadd.f32 %v2096, %v2116
      %v2133 = vlaneseq
      %v2134 = vshrl.u32 %v2133, 7
      %v2135 = vsub.s32 1, %v2134
      %v2136 = vrot.slane %v522, %v2135
      %v2137 = vadd.f32 %v2117, %v2136
      %v2138 = vadd.f32 %v2118, %v2136
      %v2139 = vadd.f32 %v2119, %v2136
      %v2140 = vadd.f32 %v2120, %v2136
      %v2141 = vadd.f32 %v2121, %v2136
      %v2142 = vadd.f32 %v2122, %v2136
      %v2143 = vadd.f32 %v2123, %v2136
      %v2144 = vadd.f32 %v2124, %v2136
      %v2145 = vadd.f32 %v2125, %v2136
      %v2146 = vadd.f32 %v2126, %v2136
      %v2147 = vadd.f32 %v2127, %v2136
      %v2148 = vadd.f32 %v2128, %v2136
      %v2149 = vadd.f32 %v2129, %v2136
      %v2150 = vadd.f32 %v2130, %v2136
      %v2151 = vadd.f32 %v2131, %v2136
      %v2152 = vadd.f32 %v2132, %v2136
      %2169 = vrot.lane.b32.xlu0 %v2137, 124
      %v2170 = vpop.permute.xlu0 %2169
      %2171 = vrot.lane.b32.xlu0 %v2138, 124
      %v2172 = vpop.permute.xlu0 %2171
      %2173 = vrot.lane.b32.xlu0 %v2139, 124
      %v2174 = vpop.permute.xlu0 %2173
      %2175 = vrot.lane.b32.xlu0 %v2140, 124
      %v2176 = vpop.permute.xlu0 %2175
      %2177 = vrot.lane.b32.xlu0 %v2141, 124
      %v2178 = vpop.permute.xlu0 %2177
      %2179 = vrot.lane.b32.xlu0 %v2142, 124
      %v2180 = vpop.permute.xlu0 %2179
      %2181 = vrot.lane.b32.xlu0 %v2143, 124
      %v2182 = vpop.permute.xlu0 %2181
      %2183 = vrot.lane.b32.xlu0 %v2144, 124
      %v2184 = vpop.permute.xlu0 %2183
      %2185 = vrot.lane.b32.xlu0 %v2145, 124
      %v2186 = vpop.permute.xlu0 %2185
      %2187 = vrot.lane.b32.xlu0 %v2146, 124
      %v2188 = vpop.permute.xlu0 %2187
      %2189 = vrot.lane.b32.xlu0 %v2147, 124
      %v2190 = vpop.permute.xlu0 %2189
      %2191 = vrot.lane.b32.xlu0 %v2148, 124
      %v2192 = vpop.permute.xlu0 %2191
      %2193 = vrot.lane.b32.xlu0 %v2149, 124
      %v2194 = vpop.permute.xlu0 %2193
      %2195 = vrot.lane.b32.xlu0 %v2150, 124
      %v2196 = vpop.permute.xlu0 %2195
      %2197 = vrot.lane.b32.xlu0 %v2151, 124
      %v2198 = vpop.permute.xlu0 %2197
      %2199 = vrot.lane.b32.xlu0 %v2152, 124
      %v2200 = vpop.permute.xlu0 %2199
      %v2217 = vmul.f32 %v2137, %v2170
      %v2218 = vmul.f32 %v2138, %v2172
      %v2219 = vmul.f32 %v2139, %v2174
      %v2220 = vmul.f32 %v2140, %v2176
      %v2221 = vmul.f32 %v2141, %v2178
      %v2222 = vmul.f32 %v2142, %v2180
      %v2223 = vmul.f32 %v2143, %v2182
      %v2224 = vmul.f32 %v2144, %v2184
      %v2225 = vmul.f32 %v2145, %v2186
      %v2226 = vmul.f32 %v2146, %v2188
      %v2227 = vmul.f32 %v2147, %v2190
      %v2228 = vmul.f32 %v2148, %v2192
      %v2229 = vmul.f32 %v2149, %v2194
      %v2230 = vmul.f32 %v2150, %v2196
      %v2231 = vmul.f32 %v2151, %v2198
      %v2232 = vmul.f32 %v2152, %v2200
      %v2233 = vld [vmem:[%s510] sm:$0x1]
      %v2234 = vsel %vm548, %v2217, 0.0
      %v2235 = vsel %vm548, %v2218, 0.0
      %v2236 = vadd.f32 %v2234, %v2235
      %v2237 = vsel %vm548, %v2219, 0.0
      %v2238 = vadd.f32 %v2236, %v2237
      %v2239 = vsel %vm548, %v2220, 0.0
      %v2240 = vadd.f32 %v2238, %v2239
      %v2241 = vsel %vm548, %v2221, 0.0
      %v2242 = vadd.f32 %v2240, %v2241
      %v2243 = vsel %vm548, %v2222, 0.0
      %v2244 = vadd.f32 %v2242, %v2243
      %v2245 = vsel %vm548, %v2223, 0.0
      %v2246 = vadd.f32 %v2244, %v2245
      %v2247 = vsel %vm548, %v2224, 0.0
      %v2248 = vadd.f32 %v2246, %v2247
      %v2249 = vsel %vm548, %v2225, 0.0
      %v2250 = vadd.f32 %v2248, %v2249
      %v2251 = vsel %vm548, %v2226, 0.0
      %v2252 = vadd.f32 %v2250, %v2251
      %v2253 = vsel %vm548, %v2227, 0.0
      %v2254 = vadd.f32 %v2252, %v2253
      %v2255 = vsel %vm548, %v2228, 0.0
      %v2256 = vadd.f32 %v2254, %v2255
      %v2257 = vsel %vm548, %v2229, 0.0
      %v2258 = vadd.f32 %v2256, %v2257
      %v2259 = vsel %vm548, %v2230, 0.0
      %v2260 = vadd.f32 %v2258, %v2259
      %v2261 = vsel %vm548, %v2231, 0.0
      %v2262 = vadd.f32 %v2260, %v2261
      %v2263 = vsel %vm548, %v2232, 0.0
      %v2264 = vadd.f32 %v2262, %v2263
      %v2265 = vrot.slane %v2264, 4
      %v2266 = vadd.f32 %v2264, %v2265
      %v2267 = vrot.slane %v2266, 2
      %v2268 = vadd.f32 %v2266, %v2267
      %v2269 = vrot.slane %v2268, 1
      %v2270 = vadd.f32 %v2268, %v2269
      %v2271 = vadd.f32 %v2233, %v2270
      %vm2272 = vcmask 24576
      %2273 = vst.msk [vmem:[%s510] sm:$0x1] %vm2272, %v2271
      %s2274 = smul.u32 %s24, 2
      %s2275 = sadd.s32 %s2274, %s25
      %p2276 = scmp.lt.s32.totalorder %s2275, 3
      %s2277 = scalar_select %p2276, %s2275, 3
      %s2278 = scalar_lea.vmem %s8, %s2277
      // Predicated region
      $region57: #{_nafblock_jit.2} parent=51 // pred_check
        %p2279 = pneg %p276
      $region58: #{_nafblock_jit.2} parent=51 // pred_check_branch
        %2281 = sbr.rel (%p2279) target = $region60
      $region59: #{_nafblock_jit.2} parent=51 // pred_region
        %s2282 = smul.u32 %s24, 2
        %s2283 = sadd.s32 %s2282, %s25
      $region60: #{_nafblock_jit.2} parent=51 // pred_fallthru
        _
    $region52: #{_nafblock_jit.2} parent=5 // pred_fallthru
      _
    %p2284 = scmp.le.s32.totalorder 2, %s14
    // Predicated region
    $region61: #{_nafblock_jit.2} parent=5 // pred_check
      %p2285 = pneg %p2284
    $region62: #{_nafblock_jit.2} parent=5 // pred_check_branch
      %2287 = sbr.rel (%p2285) target = $region64
    $region63: #{_nafblock_jit.2} parent=5 // pred_region
      %s2288 = ssub.s32 %s14, 2
      // Predicated region
      $region65: #{_nafblock_jit.2} parent=63 // pred_check
        %p2289 = pneg %p282
      $region66: #{_nafblock_jit.2} parent=63 // pred_check_branch
        %2291 = sbr.rel (%p2289) target = $region68
      $region67: #{_nafblock_jit.2} parent=63 // pred_region
        %s2292 = smul.u32 %s27, 2
        %s2293 = sadd.s32 %s2292, %s28
        %p2294 = scmp.lt.s32.totalorder %s2293, 3
        %s2295 = scalar_select %p2294, %s2293, 3
        %s2296 = scalar_lea.vmem %s8, %s2295
      $region68: #{_nafblock_jit.2} parent=63 // pred_fallthru
        _
    $region64: #{_nafblock_jit.2} parent=5 // pred_fallthru
      _
  $region6: #{_nafblock_jit.2} parent=0 // loop_footer
    %s18 = sadd.s32 1, %s14
  $region7: #{_nafblock_jit.2} parent=0 // loop_footer_branch
    %13 = sbr.rel target = $region3
  $region8: #{_nafblock_jit.2} parent=0 // loop_exit
    _

// kernel: _nafblock_jit.3
$region0: #{_nafblock_jit.3}
  #allocation0 [shape = 'u32[]', space=smem, size = 0x4, offset = 0x4, fixed_abs, tag = 'smem constant byte address 0x4 - core index']
  #allocation1 [shape = 'u32[144,128]{1,0:T(1,128)}', space=vmem, size = 0x12000, scoped, tag = 'internal scratch']
  %s0 = inlined_call_operand.vmem [shape: f32[2,256,4], index: 0, kind: input, shape index: {}, may-alias: {0,1,2}]
  %s1 = inlined_call_operand.vmem [shape: f32[2,256,4], index: 1, kind: input, shape index: {}, may-alias: {0,1,2}]
  %s2 = inlined_call_operand.vmem [shape: f32[2,256,4], index: 2, kind: input, shape index: {}, may-alias: {0,1,2}]
  %s3 = inlined_call_operand.vmem [shape: f32[2,4,4], index: 3, kind: input, shape index: {}]
  %s4 = inlined_call_operand.vmem [shape: f32[2,1,4], index: 4, kind: input, shape index: {}]
  %s5 = inlined_call_operand.vmem [shape: f32[8,4], index: 5, kind: input, shape index: {}]
  %s6 = inlined_call_operand.vmem [shape: f32[3,8], index: 6, kind: input, shape index: {}]
  %s7 = inlined_call_operand.vmem [shape: f32[2,4,8], index: 7, kind: input, shape index: {}]
  %s8 = inlined_call_operand.vmem [shape: f32[9,8], index: 8, kind: input, shape index: {}]
  %s9 = inlined_call_operand.vmem [shape: f32[2,4,4], index: 9, kind: input, shape index: {}]
  %s10 = inlined_call_operand.vmem [shape: f32[2,256,4], index: 10, kind: output, shape index: {}]
  %s11 = sld [smem:[#allocation0]]
  $region73: #{_nafblock_jit.3} parent=0
    _
  %s13 = ssub.s32 1, %s11
  %s14 = scalar_select 0, %s13, %s11
  loop: start=0, step=1, limit=6
  $region2: #{_nafblock_jit.3} parent=0 // loop_pre_header
    _
  $region3: #{_nafblock_jit.3} parent=0 // loop_header
    %s16 = sphi 0, %s20
    %p17 = scmp.ge.s32.totalorder %s16, 6
    %s23 = sphi 0, %s35
    %s24 = sphi 0, %s31
    %s25 = sphi 0, %s23
    %s26 = sphi 0, %s24
    %s27 = sphi 0, %s25
    %s28 = sphi 0, %s26
    %s40 = sphi 0, %s42
    %s43 = sphi 0, %s40
    %s44 = sphi 0, %s43
    %s60 = sphi 0, %s44
    %s76 = sphi 0, %s78
    %s79 = sphi 0, %s76
    %s80 = sphi 0, %s79
    %s96 = sphi 0, %s80
    %s112 = sphi 0, %s114
    %s115 = sphi 0, %s112
    %s116 = sphi 0, %s115
    %s132 = sphi 0, %s116
    %s138 = sphi 0, %s140
    %s141 = sphi 0, %s138
    %s142 = sphi 0, %s141
    %s158 = sphi 0, %s142
    %s164 = sphi 0, %s166
    %s167 = sphi 0, %s164
    %s168 = sphi 0, %s167
    %s184 = sphi 0, %s168
    %s188 = sphi 0, %s188
    %s190 = sphi 0, %s188
    %s191 = sphi 0, %s190
    %s205 = sphi 0, %s191
    %s209 = sphi 0, %s209
    %s211 = sphi 0, %s209
    %s212 = sphi 0, %s211
    %s226 = sphi 0, %s212
    %s230 = sphi 0, %s230
    %s232 = sphi 0, %s230
    %s233 = sphi 0, %s232
    %s247 = sphi 0, %s233
    %s251 = sphi 0, %s251
    %s253 = sphi 0, %s251
    %s254 = sphi 0, %s253
    %s268 = sphi 0, %s254
    %s272 = sphi 0, %s272
    %s274 = sphi 0, %s272
    %s275 = sphi 0, %s274
    %s289 = sphi 0, %s275
    %s297 = sphi 0, %s299
    %s300 = sphi 0, %s297
    %s301 = sphi 0, %s300
    %s317 = sphi 0, %s301
  $region4: #{_nafblock_jit.3} parent=0 // loop_header_branch
    %19 = sbr.rel (%p17) target = $region8
  $region5: #{_nafblock_jit.3} parent=0 // loop_body
    %s21 = ssub.s32 %s16, 1
    %s22 = ssub.s32 %s16, 2
    %s29 = sadd.s32 1, %s24
    %p30 = scmp.ge.s32.totalorder %s29, 2
    %s31 = scalar_select %p30, 0, %s29
    %s32 = sadd.s32 1, %s23
    %s33 = scalar_select %p30, %s32, %s23
    %p34 = scmp.ge.s32.totalorder %s33, 2
    %s35 = scalar_select %p34, 0, %s33
    %s36 = ssub.s32 %s23, %s35
    %s37 = ssub.s32 %s24, %s31
    %s38 = sor.u32 %s36, %s37
    %p39 = scmp.eq.s32.totalorder %s38, 0
    %s41 = sadd.s32 %s40, 1
    %s42 = scalar_select %p39, %s40, %s41
    %p45 = pneg %p39
    %p46 = scmp.eq.s32.totalorder %s16, 3
    %p47 = por %p45, %p46
    %p48 = scmp.ne.s32.totalorder %s40, %s43
    %p49 = scmp.eq.s32.totalorder %s16, 0
    %p50 = por %p48, %p49
    %p51 = scmp.ne.s32.totalorder %s40, %s43
    %p52 = scmp.eq.s32.totalorder %s21, 3
    %p53 = por %p51, %p52
    %p54 = scmp.ne.s32.totalorder %s43, %s44
    %p55 = scmp.eq.s32.totalorder %s21, 0
    %p56 = por %p54, %p55
    %p57 = scmp.ne.s32.totalorder %s43, %s44
    %p58 = scmp.eq.s32.totalorder %s22, 3
    %p59 = por %p57, %p58
    %p61 = scmp.ne.s32.totalorder %s44, %s60
    %p62 = scmp.eq.s32.totalorder %s22, 0
    %p63 = por %p61, %p62
    %s64 = smul.u32 %s24, 8
    %s65 = ssub.s32 %s64, 1
    %p66 = scmp.gt.s32.totalorder %s65, 0
    %s67 = scalar_select %p66, %s65, 0
    %s68 = smul.u32 %s31, 8
    %s69 = ssub.s32 %s68, 1
    %p70 = scmp.gt.s32.totalorder %s69, 0
    %s71 = scalar_select %p70, %s69, 0
    %s72 = ssub.s32 %s23, %s35
    %s73 = ssub.s32 %s67, %s71
    %s74 = sor.u32 %s72, %s73
    %p75 = scmp.eq.s32.totalorder %s74, 0
    %s77 = sadd.s32 %s76, 1
    %s78 = scalar_select %p75, %s76, %s77
    %p81 = pneg %p75
    %p82 = scmp.eq.s32.totalorder %s16, 3
    %p83 = por %p81, %p82
    %p84 = scmp.ne.s32.totalorder %s76, %s79
    %p85 = scmp.eq.s32.totalorder %s16, 0
    %p86 = por %p84, %p85
    %p87 = scmp.ne.s32.totalorder %s76, %s79
    %p88 = scmp.eq.s32.totalorder %s21, 3
    %p89 = por %p87, %p88
    %p90 = scmp.ne.s32.totalorder %s79, %s80
    %p91 = scmp.eq.s32.totalorder %s21, 0
    %p92 = por %p90, %p91
    %p93 = scmp.ne.s32.totalorder %s79, %s80
    %p94 = scmp.eq.s32.totalorder %s22, 3
    %p95 = por %p93, %p94
    %p97 = scmp.ne.s32.totalorder %s80, %s96
    %p98 = scmp.eq.s32.totalorder %s22, 0
    %p99 = por %p97, %p98
    %s100 = sadd.s32 %s24, 1
    %s101 = smul.u32 %s100, 8
    %p102 = scmp.lt.s32.totalorder %s101, 15
    %s103 = scalar_select %p102, %s101, 15
    %s104 = sadd.s32 %s31, 1
    %s105 = smul.u32 %s104, 8
    %p106 = scmp.lt.s32.totalorder %s105, 15
    %s107 = scalar_select %p106, %s105, 15
    %s108 = ssub.s32 %s23, %s35
    %s109 = ssub.s32 %s103, %s107
    %s110 = sor.u32 %s108, %s109
    %p111 = scmp.eq.s32.totalorder %s110, 0
    %s113 = sadd.s32 %s112, 1
    %s114 = scalar_select %p111, %s112, %s113
    %p117 = pneg %p111
    %p118 = scmp.eq.s32.totalorder %s16, 3
    %p119 = por %p117, %p118
    %p120 = scmp.ne.s32.totalorder %s112, %s115
    %p121 = scmp.eq.s32.totalorder %s16, 0
    %p122 = por %p120, %p121
    %p123 = scmp.ne.s32.totalorder %s112, %s115
    %p124 = scmp.eq.s32.totalorder %s21, 3
    %p125 = por %p123, %p124
    %p126 = scmp.ne.s32.totalorder %s115, %s116
    %p127 = scmp.eq.s32.totalorder %s21, 0
    %p128 = por %p126, %p127
    %p129 = scmp.ne.s32.totalorder %s115, %s116
    %p130 = scmp.eq.s32.totalorder %s22, 3
    %p131 = por %p129, %p130
    %p133 = scmp.ne.s32.totalorder %s116, %s132
    %p134 = scmp.eq.s32.totalorder %s22, 0
    %p135 = por %p133, %p134
    %s136 = ssub.s32 %s23, %s35
    %p137 = scmp.eq.s32.totalorder %s136, 0
    %s139 = sadd.s32 %s138, 1
    %s140 = scalar_select %p137, %s138, %s139
    %p143 = pneg %p137
    %p144 = scmp.eq.s32.totalorder %s16, 3
    %p145 = por %p143, %p144
    %p146 = scmp.ne.s32.totalorder %s138, %s141
    %p147 = scmp.eq.s32.totalorder %s16, 0
    %p148 = por %p146, %p147
    %p149 = scmp.ne.s32.totalorder %s138, %s141
    %p150 = scmp.eq.s32.totalorder %s21, 3
    %p151 = por %p149, %p150
    %p152 = scmp.ne.s32.totalorder %s141, %s142
    %p153 = scmp.eq.s32.totalorder %s21, 0
    %p154 = por %p152, %p153
    %p155 = scmp.ne.s32.totalorder %s141, %s142
    %p156 = scmp.eq.s32.totalorder %s22, 3
    %p157 = por %p155, %p156
    %p159 = scmp.ne.s32.totalorder %s142, %s158
    %p160 = scmp.eq.s32.totalorder %s22, 0
    %p161 = por %p159, %p160
    %s162 = ssub.s32 %s23, %s35
    %p163 = scmp.eq.s32.totalorder %s162, 0
    %s165 = sadd.s32 %s164, 1
    %s166 = scalar_select %p163, %s164, %s165
    %p169 = pneg %p163
    %p170 = scmp.eq.s32.totalorder %s16, 3
    %p171 = por %p169, %p170
    %p172 = scmp.ne.s32.totalorder %s164, %s167
    %p173 = scmp.eq.s32.totalorder %s16, 0
    %p174 = por %p172, %p173
    %p175 = scmp.ne.s32.totalorder %s164, %s167
    %p176 = scmp.eq.s32.totalorder %s21, 3
    %p177 = por %p175, %p176
    %p178 = scmp.ne.s32.totalorder %s167, %s168
    %p179 = scmp.eq.s32.totalorder %s21, 0
    %p180 = por %p178, %p179
    %p181 = scmp.ne.s32.totalorder %s167, %s168
    %p182 = scmp.eq.s32.totalorder %s22, 3
    %p183 = por %p181, %p182
    %p185 = scmp.ne.s32.totalorder %s168, %s184
    %p186 = scmp.eq.s32.totalorder %s22, 0
    %p187 = por %p185, %p186
    %s189 = sadd.s32 %s188, 1
    %p192 = scmp.eq.s32.totalorder %s16, 3
    %p193 = scmp.ne.s32.totalorder %s188, %s190
    %p194 = scmp.eq.s32.totalorder %s16, 0
    %p195 = por %p193, %p194
    %p196 = scmp.ne.s32.totalorder %s188, %s190
    %p197 = scmp.eq.s32.totalorder %s21, 3
    %p198 = por %p196, %p197
    %p199 = scmp.ne.s32.totalorder %s190, %s191
    %p200 = scmp.eq.s32.totalorder %s21, 0
    %p201 = por %p199, %p200
    %p202 = scmp.ne.s32.totalorder %s190, %s191
    %p203 = scmp.eq.s32.totalorder %s22, 3
    %p204 = por %p202, %p203
    %p206 = scmp.ne.s32.totalorder %s191, %s205
    %p207 = scmp.eq.s32.totalorder %s22, 0
    %p208 = por %p206, %p207
    %s210 = sadd.s32 %s209, 1
    %p213 = scmp.eq.s32.totalorder %s16, 3
    %p214 = scmp.ne.s32.totalorder %s209, %s211
    %p215 = scmp.eq.s32.totalorder %s16, 0
    %p216 = por %p214, %p215
    %p217 = scmp.ne.s32.totalorder %s209, %s211
    %p218 = scmp.eq.s32.totalorder %s21, 3
    %p219 = por %p217, %p218
    %p220 = scmp.ne.s32.totalorder %s211, %s212
    %p221 = scmp.eq.s32.totalorder %s21, 0
    %p222 = por %p220, %p221
    %p223 = scmp.ne.s32.totalorder %s211, %s212
    %p224 = scmp.eq.s32.totalorder %s22, 3
    %p225 = por %p223, %p224
    %p227 = scmp.ne.s32.totalorder %s212, %s226
    %p228 = scmp.eq.s32.totalorder %s22, 0
    %p229 = por %p227, %p228
    %s231 = sadd.s32 %s230, 1
    %p234 = scmp.eq.s32.totalorder %s16, 3
    %p235 = scmp.ne.s32.totalorder %s230, %s232
    %p236 = scmp.eq.s32.totalorder %s16, 0
    %p237 = por %p235, %p236
    %p238 = scmp.ne.s32.totalorder %s230, %s232
    %p239 = scmp.eq.s32.totalorder %s21, 3
    %p240 = por %p238, %p239
    %p241 = scmp.ne.s32.totalorder %s232, %s233
    %p242 = scmp.eq.s32.totalorder %s21, 0
    %p243 = por %p241, %p242
    %p244 = scmp.ne.s32.totalorder %s232, %s233
    %p245 = scmp.eq.s32.totalorder %s22, 3
    %p246 = por %p244, %p245
    %p248 = scmp.ne.s32.totalorder %s233, %s247
    %p249 = scmp.eq.s32.totalorder %s22, 0
    %p250 = por %p248, %p249
    %s252 = sadd.s32 %s251, 1
    %p255 = scmp.eq.s32.totalorder %s16, 3
    %p256 = scmp.ne.s32.totalorder %s251, %s253
    %p257 = scmp.eq.s32.totalorder %s16, 0
    %p258 = por %p256, %p257
    %p259 = scmp.ne.s32.totalorder %s251, %s253
    %p260 = scmp.eq.s32.totalorder %s21, 3
    %p261 = por %p259, %p260
    %p262 = scmp.ne.s32.totalorder %s253, %s254
    %p263 = scmp.eq.s32.totalorder %s21, 0
    %p264 = por %p262, %p263
    %p265 = scmp.ne.s32.totalorder %s253, %s254
    %p266 = scmp.eq.s32.totalorder %s22, 3
    %p267 = por %p265, %p266
    %p269 = scmp.ne.s32.totalorder %s254, %s268
    %p270 = scmp.eq.s32.totalorder %s22, 0
    %p271 = por %p269, %p270
    %s273 = sadd.s32 %s272, 1
    %p276 = scmp.eq.s32.totalorder %s16, 3
    %p277 = scmp.ne.s32.totalorder %s272, %s274
    %p278 = scmp.eq.s32.totalorder %s16, 0
    %p279 = por %p277, %p278
    %p280 = scmp.ne.s32.totalorder %s272, %s274
    %p281 = scmp.eq.s32.totalorder %s21, 3
    %p282 = por %p280, %p281
    %p283 = scmp.ne.s32.totalorder %s274, %s275
    %p284 = scmp.eq.s32.totalorder %s21, 0
    %p285 = por %p283, %p284
    %p286 = scmp.ne.s32.totalorder %s274, %s275
    %p287 = scmp.eq.s32.totalorder %s22, 3
    %p288 = por %p286, %p287
    %p290 = scmp.ne.s32.totalorder %s275, %s289
    %p291 = scmp.eq.s32.totalorder %s22, 0
    %p292 = por %p290, %p291
    %s293 = ssub.s32 %s23, %s35
    %s294 = ssub.s32 %s24, %s31
    %s295 = sor.u32 %s293, %s294
    %p296 = scmp.eq.s32.totalorder %s295, 0
    %s298 = sadd.s32 %s297, 1
    %s299 = scalar_select %p296, %s297, %s298
    %p302 = pneg %p296
    %p303 = scmp.eq.s32.totalorder %s16, 3
    %p304 = por %p302, %p303
    %p305 = scmp.ne.s32.totalorder %s297, %s300
    %p306 = scmp.eq.s32.totalorder %s16, 0
    %p307 = por %p305, %p306
    %p308 = scmp.ne.s32.totalorder %s297, %s300
    %p309 = scmp.eq.s32.totalorder %s21, 3
    %p310 = por %p308, %p309
    %p311 = scmp.ne.s32.totalorder %s300, %s301
    %p312 = scmp.eq.s32.totalorder %s21, 0
    %p313 = por %p311, %p312
    %p314 = scmp.ne.s32.totalorder %s300, %s301
    %p315 = scmp.eq.s32.totalorder %s22, 3
    %p316 = por %p314, %p315
    %p318 = scmp.ne.s32.totalorder %s301, %s317
    %p319 = scmp.eq.s32.totalorder %s22, 0
    %p320 = por %p318, %p319
    %p321 = scmp.le.s32.totalorder 1, %s16
    %p322 = scmp.lt.s32.totalorder %s16, 5
    %p323 = pnand %p321, %p322
    %p324 = pneg %p323
    // Predicated region
    $region9: #{_nafblock_jit.3} parent=5 // pred_check
      _
    $region10: #{_nafblock_jit.3} parent=5 // pred_check_branch
      %326 = sbr.rel (%p323) target = $region12
    $region11: #{_nafblock_jit.3} parent=5 // pred_region
      %s327 = ssub.s32 %s16, 1
      // Predicated region
      $region13: #{_nafblock_jit.3} parent=11 // pred_check
        %p328 = pneg %p201
      $region14: #{_nafblock_jit.3} parent=11 // pred_check_branch
        %330 = sbr.rel (%p328) target = $region16
      $region15: #{_nafblock_jit.3} parent=11 // pred_region
        _
      $region16: #{_nafblock_jit.3} parent=11 // pred_fallthru
        _
      // Predicated region
      $region17: #{_nafblock_jit.3} parent=11 // pred_check
        %p331 = pneg %p222
      $region18: #{_nafblock_jit.3} parent=11 // pred_check_branch
        %333 = sbr.rel (%p331) target = $region20
      $region19: #{_nafblock_jit.3} parent=11 // pred_region
        _
      $region20: #{_nafblock_jit.3} parent=11 // pred_fallthru
        _
      // Predicated region
      $region21: #{_nafblock_jit.3} parent=11 // pred_check
        %p334 = pneg %p243
      $region22: #{_nafblock_jit.3} parent=11 // pred_check_branch
        %336 = sbr.rel (%p334) target = $region24
      $region23: #{_nafblock_jit.3} parent=11 // pred_region
        _
      $region24: #{_nafblock_jit.3} parent=11 // pred_fallthru
        _
      // Predicated region
      $region25: #{_nafblock_jit.3} parent=11 // pred_check
        %p337 = pneg %p264
      $region26: #{_nafblock_jit.3} parent=11 // pred_check_branch
        %339 = sbr.rel (%p337) target = $region28
      $region27: #{_nafblock_jit.3} parent=11 // pred_region
        _
      $region28: #{_nafblock_jit.3} parent=11 // pred_fallthru
        _
      // Predicated region
      $region29: #{_nafblock_jit.3} parent=11 // pred_check
        %p340 = pneg %p285
      $region30: #{_nafblock_jit.3} parent=11 // pred_check_branch
        %342 = sbr.rel (%p340) target = $region32
      $region31: #{_nafblock_jit.3} parent=11 // pred_region
        _
      $region32: #{_nafblock_jit.3} parent=11 // pred_fallthru
        _
    $region12: #{_nafblock_jit.3} parent=5 // pred_fallthru
      _
    %p343 = scmp.lt.s32.totalorder %s16, 4
    // Predicated region
    $region33: #{_nafblock_jit.3} parent=5 // pred_check
      %p344 = pneg %p343
    $region34: #{_nafblock_jit.3} parent=5 // pred_check_branch
      %346 = sbr.rel (%p344) target = $region36
    $region35: #{_nafblock_jit.3} parent=5 // pred_region
      // Predicated region
      $region37: #{_nafblock_jit.3} parent=35 // pred_check
        %p347 = pneg %p50
      $region38: #{_nafblock_jit.3} parent=35 // pred_check_branch
        %349 = sbr.rel (%p347) target = $region40
      $region39: #{_nafblock_jit.3} parent=35 // pred_region
        %s350 = smul.u32 16, %s24
        %p351 = scmp.lt.s32.totalorder %s23, 1
        %s352 = scalar_select %p351, %s23, 1
        %p353 = scmp.lt.s32.totalorder %s350, 31
        %s354 = scalar_select %p353, %s350, 31
        %s355 = smul.addr %s352, 32
        %s356 = sadd.s32 %s354, %s355
        %s357 = smul.addr %s356, 8
        %s358 = scalar_lea.vmem %s0, %s357
        %s359 = smul.u32 16, %s24
      $region40: #{_nafblock_jit.3} parent=35 // pred_fallthru
        _
      // Predicated region
      $region41: #{_nafblock_jit.3} parent=35 // pred_check
        %p360 = pneg %p86
      $region42: #{_nafblock_jit.3} parent=35 // pred_check_branch
        %362 = sbr.rel (%p360) target = $region44
      $region43: #{_nafblock_jit.3} parent=35 // pred_region
        %s363 = smul.u32 %s24, 8
        %s364 = ssub.s32 %s363, 1
        %p365 = scmp.gt.s32.totalorder %s364, 0
        %s366 = scalar_select %p365, %s364, 0
        %s367 = smul.u32 2, %s366
        %p368 = scmp.lt.s32.totalorder %s23, 1
        %s369 = scalar_select %p368, %s23, 1
        %p370 = scmp.lt.s32.totalorder %s367, 31
        %s371 = scalar_select %p370, %s367, 31
        %s372 = smul.addr %s369, 32
        %s373 = sadd.s32 %s371, %s372
        %s374 = smul.addr %s373, 8
        %s375 = scalar_lea.vmem %s1, %s374
        %s376 = smul.u32 %s24, 8
        %s377 = ssub.s32 %s376, 1
        %p378 = scmp.gt.s32.totalorder %s377, 0
        %s379 = scalar_select %p378, %s377, 0
        %s380 = smul.u32 2, %s379
      $region44: #{_nafblock_jit.3} parent=35 // pred_fallthru
        _
      // Predicated region
      $region45: #{_nafblock_jit.3} parent=35 // pred_check
        %p381 = pneg %p122
      $region46: #{_nafblock_jit.3} parent=35 // pred_check_branch
        %383 = sbr.rel (%p381) target = $region48
      $region47: #{_nafblock_jit.3} parent=35 // pred_region
        %s384 = sadd.s32 %s24, 1
        %s385 = smul.u32 %s384, 8
        %p386 = scmp.lt.s32.totalorder %s385, 15
        %s387 = scalar_select %p386, %s385, 15
        %s388 = smul.u32 2, %s387
        %p389 = scmp.lt.s32.totalorder %s23, 1
        %s390 = scalar_select %p389, %s23, 1
        %p391 = scmp.lt.s32.totalorder %s388, 31
        %s392 = scalar_select %p391, %s388, 31
        %s393 = smul.addr %s390, 32
        %s394 = sadd.s32 %s392, %s393
        %s395 = smul.addr %s394, 8
        %s396 = scalar_lea.vmem %s2, %s395
        %s397 = sadd.s32 %s24, 1
        %s398 = smul.u32 %s397, 8
        %p399 = scmp.lt.s32.totalorder %s398, 15
        %s400 = scalar_select %p399, %s398, 15
        %s401 = smul.u32 2, %s400
      $region48: #{_nafblock_jit.3} parent=35 // pred_fallthru
        _
      // Predicated region
      $region49: #{_nafblock_jit.3} parent=35 // pred_check
        %p402 = pneg %p148
      $region50: #{_nafblock_jit.3} parent=35 // pred_check_branch
        %404 = sbr.rel (%p402) target = $region52
      $region51: #{_nafblock_jit.3} parent=35 // pred_region
        %p405 = scmp.lt.s32.totalorder %s23, 1
        %s406 = scalar_select %p405, %s23, 1
        %s407 = smul.addr %s406, 4
        %s408 = scalar_lea.vmem %s3, %s407
      $region52: #{_nafblock_jit.3} parent=35 // pred_fallthru
        _
      // Predicated region
      $region53: #{_nafblock_jit.3} parent=35 // pred_check
        %p409 = pneg %p174
      $region54: #{_nafblock_jit.3} parent=35 // pred_check_branch
        %411 = sbr.rel (%p409) target = $region56
      $region55: #{_nafblock_jit.3} parent=35 // pred_region
        %p412 = scmp.lt.s32.totalorder %s23, 1
        %s413 = scalar_select %p412, %s23, 1
        %s414 = scalar_lea.vmem %s4, %s413
      $region56: #{_nafblock_jit.3} parent=35 // pred_fallthru
        _
    $region36: #{_nafblock_jit.3} parent=5 // pred_fallthru
      _
    %p415 = scmp.le.s32.totalorder 1, %s16
    %p416 = scmp.lt.s32.totalorder %s16, 5
    %p417 = pnand %p415, %p416
    %p418 = pneg %p417
    // Predicated region
    $region57: #{_nafblock_jit.3} parent=5 // pred_check
      _
    $region58: #{_nafblock_jit.3} parent=5 // pred_check_branch
      %420 = sbr.rel (%p417) target = $region60
    $region59: #{_nafblock_jit.3} parent=5 // pred_region
      %s421 = ssub.s32 %s16, 1
      %s422 = smul.u32 16, %s26
      %p423 = scmp.lt.s32.totalorder %s25, 1
      %s424 = scalar_select %p423, %s25, 1
      %p425 = scmp.lt.s32.totalorder %s422, 31
      %s426 = scalar_select %p425, %s422, 31
      %s427 = smul.addr %s424, 32
      %s428 = sadd.s32 %s426, %s427
      %s429 = smul.addr %s428, 8
      %s430 = scalar_lea.vmem %s0, %s429
      %p431 = pneg %p56
      %p432 = pneg %p53
      %s433 = smul.u32 %s26, 8
      %s434 = ssub.s32 %s433, 1
      %p435 = scmp.gt.s32.totalorder %s434, 0
      %s436 = scalar_select %p435, %s434, 0
      %s437 = smul.u32 2, %s436
      %p438 = scmp.lt.s32.totalorder %s25, 1
      %s439 = scalar_select %p438, %s25, 1
      %p440 = scmp.lt.s32.totalorder %s437, 31
      %s441 = scalar_select %p440, %s437, 31
      %s442 = smul.addr %s439, 32
      %s443 = sadd.s32 %s441, %s442
      %s444 = smul.addr %s443, 8
      %s445 = scalar_lea.vmem %s1, %s444
      %p446 = pneg %p92
      %p447 = pneg %p89
      %s448 = sadd.s32 %s26, 1
      %s449 = smul.u32 %s448, 8
      %p450 = scmp.lt.s32.totalorder %s449, 15
      %s451 = scalar_select %p450, %s449, 15
      %s452 = smul.u32 2, %s451
      %p453 = scmp.lt.s32.totalorder %s25, 1
      %s454 = scalar_select %p453, %s25, 1
      %p455 = scmp.lt.s32.totalorder %s452, 31
      %s456 = scalar_select %p455, %s452, 31
      %s457 = smul.addr %s454, 32
      %s458 = sadd.s32 %s456, %s457
      %s459 = smul.addr %s458, 8
      %s460 = scalar_lea.vmem %s2, %s459
      %p461 = pneg %p128
      %p462 = pneg %p125
      %p463 = scmp.lt.s32.totalorder %s25, 1
      %s464 = scalar_select %p463, %s25, 1
      %s465 = smul.addr %s464, 4
      %s466 = scalar_lea.vmem %s3, %s465
      %p467 = pneg %p154
      %p468 = pneg %p151
      %p469 = scmp.lt.s32.totalorder %s25, 1
      %s470 = scalar_select %p469, %s25, 1
      %s471 = scalar_lea.vmem %s4, %s470
      %p472 = pneg %p180
      %p473 = pneg %p177
      %p474 = pneg %p201
      %p475 = pneg %p198
      %p476 = pneg %p222
      %p477 = pneg %p219
      %p478 = pneg %p243
      %p479 = pneg %p240
      %p480 = pneg %p264
      %p481 = pneg %p261
      %p482 = pneg %p285
      %p483 = pneg %p282
      %p484 = pneg %p313
      %p485 = pneg %p310
      %s486 = smul.u32 16, %s26
      %p487 = scmp.lt.s32.totalorder %s25, 1
      %s488 = scalar_select %p487, %s25, 1
      %p489 = scmp.lt.s32.totalorder %s486, 31
      %s490 = scalar_select %p489, %s486, 31
      %s491 = smul.addr %s488, 32
      %s492 = sadd.s32 %s490, %s491
      %s493 = smul.addr %s492, 8
      %s494 = scalar_lea.vmem %s10, %s493
      %s495 = smul.u32 16, %s26
      %p496 = scmp.lt.s32.totalorder %s25, 1
      %s497 = scalar_select %p496, %s25, 1
      %p498 = scmp.lt.s32.totalorder %s495, 31
      %s499 = scalar_select %p498, %s495, 31
      %s500 = smul.addr %s497, 32
      %s501 = sadd.s32 %s499, %s500
      %s502 = smul.addr %s501, 8
      %s503 = scalar_lea.vmem %s0, %s502
      %s504 = smul.u32 16, %s26
      %s505 = smul.u32 %s26, 8
      %s506 = ssub.s32 %s505, 1
      %p507 = scmp.gt.s32.totalorder %s506, 0
      %s508 = scalar_select %p507, %s506, 0
      %s509 = smul.u32 2, %s508
      %p510 = scmp.lt.s32.totalorder %s25, 1
      %s511 = scalar_select %p510, %s25, 1
      %p512 = scmp.lt.s32.totalorder %s509, 31
      %s513 = scalar_select %p512, %s509, 31
      %s514 = smul.addr %s511, 32
      %s515 = sadd.s32 %s513, %s514
      %s516 = smul.addr %s515, 8
      %s517 = scalar_lea.vmem %s1, %s516
      %s518 = smul.u32 %s26, 8
      %s519 = ssub.s32 %s518, 1
      %p520 = scmp.gt.s32.totalorder %s519, 0
      %s521 = scalar_select %p520, %s519, 0
      %s522 = smul.u32 2, %s521
      %s523 = sadd.s32 %s26, 1
      %s524 = smul.u32 %s523, 8
      %p525 = scmp.lt.s32.totalorder %s524, 15
      %s526 = scalar_select %p525, %s524, 15
      %s527 = smul.u32 2, %s526
      %p528 = scmp.lt.s32.totalorder %s25, 1
      %s529 = scalar_select %p528, %s25, 1
      %p530 = scmp.lt.s32.totalorder %s527, 31
      %s531 = scalar_select %p530, %s527, 31
      %s532 = smul.addr %s529, 32
      %s533 = sadd.s32 %s531, %s532
      %s534 = smul.addr %s533, 8
      %s535 = scalar_lea.vmem %s2, %s534
      %s536 = sadd.s32 %s26, 1
      %s537 = smul.u32 %s536, 8
      %p538 = scmp.lt.s32.totalorder %s537, 15
      %s539 = scalar_select %p538, %s537, 15
      %s540 = smul.u32 2, %s539
      %p541 = scmp.lt.s32.totalorder %s25, 1
      %s542 = scalar_select %p541, %s25, 1
      %s543 = smul.addr %s542, 4
      %s544 = scalar_lea.vmem %s3, %s543
      %p545 = scmp.lt.s32.totalorder %s25, 1
      %s546 = scalar_select %p545, %s25, 1
      %s547 = scalar_lea.vmem %s4, %s546
      %s548 = smul.u32 16, %s26
      %p549 = scmp.lt.s32.totalorder %s25, 1
      %s550 = scalar_select %p549, %s25, 1
      %p551 = scmp.lt.s32.totalorder %s548, 31
      %s552 = scalar_select %p551, %s548, 31
      %s553 = smul.addr %s550, 32
      %s554 = sadd.s32 %s552, %s553
      %s555 = smul.addr %s554, 8
      %s556 = scalar_lea.vmem %s10, %s555
      %s557 = smul.u32 16, %s26
      %p558 = scmp.eq.s32.totalorder %s26, 0
      %p559 = scmp.eq.s32.totalorder %s26, 1
      %v560 = vld [vmem:[%s544] sm:$0xf]
      %v561 = vld [vmem:[%s5] sm:$0xff]
      %v562 = vld [vmem:[%s6] sm:$0x7]
      %v563 = vld [vmem:[%s517] sm:$0xff]
      %v564 = vld [vmem:[%s517 + $0x8] sm:$0xff]
      %v565 = vld [vmem:[%s503] sm:$0xff]
      %v566 = vld [vmem:[%s503 + $0x8] sm:$0xff]
      %v567 = vld [vmem:[%s503 + $0x10] sm:$0xff]
      %v568 = vld [vmem:[%s503 + $0x18] sm:$0xff]
      %v569 = vld [vmem:[%s503 + $0x20] sm:$0xff]
      %v570 = vld [vmem:[%s503 + $0x28] sm:$0xff]
      %v571 = vld [vmem:[%s503 + $0x30] sm:$0xff]
      %v572 = vld [vmem:[%s503 + $0x38] sm:$0xff]
      %v573 = vld [vmem:[%s503 + $0x40] sm:$0xff]
      %v574 = vld [vmem:[%s503 + $0x48] sm:$0xff]
      %v575 = vld [vmem:[%s503 + $0x50] sm:$0xff]
      %v576 = vld [vmem:[%s503 + $0x58] sm:$0xff]
      %v577 = vld [vmem:[%s503 + $0x60] sm:$0xff]
      %v578 = vld [vmem:[%s503 + $0x68] sm:$0xff]
      %v579 = vld [vmem:[%s503 + $0x70] sm:$0xff]
      %v580 = vld [vmem:[%s503 + $0x78] sm:$0xff]
      %v581 = vld [vmem:[%s535] sm:$0xff]
      %v582 = vld [vmem:[%s535 + $0x8] sm:$0xff]
      %v583 = vld [vmem:[%s7] sm:$0xf]
      %v584 = vld [vmem:[%s8] sm:$0xff]
      %v585 = vld [vmem:[%s8 + $0x8] sm:$0x1]
      %vm586 = vcmask 31744
      %v587 = vsel %vm586, %v563, 0.0
      %588 = vadd.xlane.f32.xlu0 %v587
      %v589 = vpop.xlane.xlu0 %588
      %v590 = vsel %vm586, %v564, 0.0
      %591 = vadd.xlane.f32.xlu0 %v590
      %v592 = vpop.xlane.xlu0 %591
      %v593 = vsel %vm586, %v565, 0.0
      %594 = vadd.xlane.f32.xlu0 %v593
      %v595 = vpop.xlane.xlu0 %594
      %v596 = vsel %vm586, %v566, 0.0
      %597 = vadd.xlane.f32.xlu0 %v596
      %v598 = vpop.xlane.xlu0 %597
      %v599 = vsel %vm586, %v567, 0.0
      %600 = vadd.xlane.f32.xlu0 %v599
      %v601 = vpop.xlane.xlu0 %600
      %v602 = vsel %vm586, %v568, 0.0
      %603 = vadd.xlane.f32.xlu0 %v602
      %v604 = vpop.xlane.xlu0 %603
      %v605 = vsel %vm586, %v569, 0.0
      %606 = vadd.xlane.f32.xlu0 %v605
      %v607 = vpop.xlane.xlu0 %606
      %v608 = vsel %vm586, %v570, 0.0
      %609 = vadd.xlane.f32.xlu0 %v608
      %v610 = vpop.xlane.xlu0 %609
      %v611 = vsel %vm586, %v571, 0.0
      %612 = vadd.xlane.f32.xlu0 %v611
      %v613 = vpop.xlane.xlu0 %612
      %v614 = vsel %vm586, %v572, 0.0
      %615 = vadd.xlane.f32.xlu0 %v614
      %v616 = vpop.xlane.xlu0 %615
      %v617 = vsel %vm586, %v573, 0.0
      %618 = vadd.xlane.f32.xlu0 %v617
      %v619 = vpop.xlane.xlu0 %618
      %v620 = vsel %vm586, %v574, 0.0
      %621 = vadd.xlane.f32.xlu0 %v620
      %v622 = vpop.xlane.xlu0 %621
      %v623 = vsel %vm586, %v575, 0.0
      %624 = vadd.xlane.f32.xlu0 %v623
      %v625 = vpop.xlane.xlu0 %624
      %v626 = vsel %vm586, %v576, 0.0
      %627 = vadd.xlane.f32.xlu0 %v626
      %v628 = vpop.xlane.xlu0 %627
      %v629 = vsel %vm586, %v577, 0.0
      %630 = vadd.xlane.f32.xlu0 %v629
      %v631 = vpop.xlane.xlu0 %630
      %v632 = vsel %vm586, %v578, 0.0
      %633 = vadd.xlane.f32.xlu0 %v632
      %v634 = vpop.xlane.xlu0 %633
      %v635 = vsel %vm586, %v579, 0.0
      %636 = vadd.xlane.f32.xlu0 %v635
      %v637 = vpop.xlane.xlu0 %636
      %v638 = vsel %vm586, %v580, 0.0
      %639 = vadd.xlane.f32.xlu0 %v638
      %v640 = vpop.xlane.xlu0 %639
      %v641 = vsel %vm586, %v581, 0.0
      %642 = vadd.xlane.f32.xlu0 %v641
      %v643 = vpop.xlane.xlu0 %642
      %v644 = vsel %vm586, %v582, 0.0
      %645 = vadd.xlane.f32.xlu0 %v644
      %v646 = vpop.xlane.xlu0 %645
      %v647 = vrcp.pop 4.0
      %v648 = vmul.f32 %v589, %v647
      %v649 = vmul.f32 %v592, %v647
      %v650 = vmul.f32 %v595, %v647
      %v651 = vmul.f32 %v598, %v647
      %v652 = vmul.f32 %v601, %v647
      %v653 = vmul.f32 %v604, %v647
      %v654 = vmul.f32 %v607, %v647
      %v655 = vmul.f32 %v610, %v647
      %v656 = vmul.f32 %v613, %v647
      %v657 = vmul.f32 %v616, %v647
      %v658 = vmul.f32 %v619, %v647
      %v659 = vmul.f32 %v622, %v647
      %v660 = vmul.f32 %v625, %v647
      %v661 = vmul.f32 %v628, %v647
      %v662 = vmul.f32 %v631, %v647
      %v663 = vmul.f32 %v634, %v647
      %v664 = vmul.f32 %v637, %v647
      %v665 = vmul.f32 %v640, %v647
      %v666 = vmul.f32 %v643, %v647
      %v667 = vmul.f32 %v646, %v647
      %v668 = vsub.f32 %v563, %v648
      %v669 = vsub.f32 %v564, %v649
      %v670 = vsub.f32 %v565, %v650
      %v671 = vsub.f32 %v566, %v651
      %v672 = vsub.f32 %v567, %v652
      %v673 = vsub.f32 %v568, %v653
      %v674 = vsub.f32 %v569, %v654
      %v675 = vsub.f32 %v570, %v655
      %v676 = vsub.f32 %v571, %v656
      %v677 = vsub.f32 %v572, %v657
      %v678 = vsub.f32 %v573, %v658
      %v679 = vsub.f32 %v574, %v659
      %v680 = vsub.f32 %v575, %v660
      %v681 = vsub.f32 %v576, %v661
      %v682 = vsub.f32 %v577, %v662
      %v683 = vsub.f32 %v578, %v663
      %v684 = vsub.f32 %v579, %v664
      %v685 = vsub.f32 %v580, %v665
      %v686 = vsub.f32 %v581, %v666
      %v687 = vsub.f32 %v582, %v667
      %v688 = vmul.f32 %v668, %v668
      %v689 = vmul.f32 %v669, %v669
      %v690 = vmul.f32 %v670, %v670
      %v691 = vmul.f32 %v671, %v671
      %v692 = vmul.f32 %v672, %v672
      %v693 = vmul.f32 %v673, %v673
      %v694 = vmul.f32 %v674, %v674
      %v695 = vmul.f32 %v675, %v675
      %v696 = vmul.f32 %v676, %v676
      %v697 = vmul.f32 %v677, %v677
      %v698 = vmul.f32 %v678, %v678
      %v699 = vmul.f32 %v679, %v679
      %v700 = vmul.f32 %v680, %v680
      %v701 = vmul.f32 %v681, %v681
      %v702 = vmul.f32 %v682, %v682
      %v703 = vmul.f32 %v683, %v683
      %v704 = vmul.f32 %v684, %v684
      %v705 = vmul.f32 %v685, %v685
      %v706 = vmul.f32 %v686, %v686
      %v707 = vmul.f32 %v687, %v687
      %v708 = vsel %vm586, %v688, 0.0
      %709 = vadd.xlane.f32.xlu0 %v708
      %v710 = vpop.xlane.xlu0 %709
      %v711 = vsel %vm586, %v689, 0.0
      %712 = vadd.xlane.f32.xlu0 %v711
      %v713 = vpop.xlane.xlu0 %712
      %v714 = vsel %vm586, %v690, 0.0
      %715 = vadd.xlane.f32.xlu0 %v714
      %v716 = vpop.xlane.xlu0 %715
      %v717 = vsel %vm586, %v691, 0.0
      %718 = vadd.xlane.f32.xlu0 %v717
      %v719 = vpop.xlane.xlu0 %718
      %v720 = vsel %vm586, %v692, 0.0
      %721 = vadd.xlane.f32.xlu0 %v720
      %v722 = vpop.xlane.xlu0 %721
      %v723 = vsel %vm586, %v693, 0.0
      %724 = vadd.xlane.f32.xlu0 %v723
      %v725 = vpop.xlane.xlu0 %724
      %v726 = vsel %vm586, %v694, 0.0
      %727 = vadd.xlane.f32.xlu0 %v726
      %v728 = vpop.xlane.xlu0 %727
      %v729 = vsel %vm586, %v695, 0.0
      %730 = vadd.xlane.f32.xlu0 %v729
      %v731 = vpop.xlane.xlu0 %730
      %v732 = vsel %vm586, %v696, 0.0
      %733 = vadd.xlane.f32.xlu0 %v732
      %v734 = vpop.xlane.xlu0 %733
      %v735 = vsel %vm586, %v697, 0.0
      %736 = vadd.xlane.f32.xlu0 %v735
      %v737 = vpop.xlane.xlu0 %736
      %v738 = vsel %vm586, %v698, 0.0
      %739 = vadd.xlane.f32.xlu0 %v738
      %v740 = vpop.xlane.xlu0 %739
      %v741 = vsel %vm586, %v699, 0.0
      %742 = vadd.xlane.f32.xlu0 %v741
      %v743 = vpop.xlane.xlu0 %742
      %v744 = vsel %vm586, %v700, 0.0
      %745 = vadd.xlane.f32.xlu0 %v744
      %v746 = vpop.xlane.xlu0 %745
      %v747 = vsel %vm586, %v701, 0.0
      %748 = vadd.xlane.f32.xlu0 %v747
      %v749 = vpop.xlane.xlu0 %748
      %v750 = vsel %vm586, %v702, 0.0
      %751 = vadd.xlane.f32.xlu0 %v750
      %v752 = vpop.xlane.xlu0 %751
      %v753 = vsel %vm586, %v703, 0.0
      %754 = vadd.xlane.f32.xlu0 %v753
      %v755 = vpop.xlane.xlu0 %754
      %v756 = vsel %vm586, %v704, 0.0
      %757 = vadd.xlane.f32.xlu0 %v756
      %v758 = vpop.xlane.xlu0 %757
      %v759 = vsel %vm586, %v705, 0.0
      %760 = vadd.xlane.f32.xlu0 %v759
      %v761 = vpop.xlane.xlu0 %760
      %v762 = vsel %vm586, %v706, 0.0
      %763 = vadd.xlane.f32.xlu0 %v762
      %v764 = vpop.xlane.xlu0 %763
      %v765 = vsel %vm586, %v707, 0.0
      %766 = vadd.xlane.f32.xlu0 %v765
      %v767 = vpop.xlane.xlu0 %766
      %v768 = vmul.f32 %v710, %v647
      %v769 = vmul.f32 %v713, %v647
      %v770 = vmul.f32 %v716, %v647
      %v771 = vmul.f32 %v719, %v647
      %v772 = vmul.f32 %v722, %v647
      %v773 = vmul.f32 %v725, %v647
      %v774 = vmul.f32 %v728, %v647
      %v775 = vmul.f32 %v731, %v647
      %v776 = vmul.f32 %v734, %v647
      %v777 = vmul.f32 %v737, %v647
      %v778 = vmul.f32 %v740, %v647
      %v779 = vmul.f32 %v743, %v647
      %v780 = vmul.f32 %v746, %v647
      %v781 = vmul.f32 %v749, %v647
      %v782 = vmul.f32 %v752, %v647
      %v783 = vmul.f32 %v755, %v647
      %v784 = vmul.f32 %v758, %v647
      %v785 = vmul.f32 %v761, %v647
      %v786 = vmul.f32 %v764, %v647
      %v787 = vmul.f32 %v767, %v647
      %v788 = vadd.f32 %v768, 1e-05
      %v789 = vadd.f32 %v769, 1e-05
      %v790 = vadd.f32 %v770, 1e-05
      %v791 = vadd.f32 %v771, 1e-05
      %v792 = vadd.f32 %v772, 1e-05
      %v793 = vadd.f32 %v773, 1e-05
      %v794 = vadd.f32 %v774, 1e-05
      %v795 = vadd.f32 %v775, 1e-05
      %v796 = vadd.f32 %v776, 1e-05
      %v797 = vadd.f32 %v777, 1e-05
      %v798 = vadd.f32 %v778, 1e-05
      %v799 = vadd.f32 %v779, 1e-05
      %v800 = vadd.f32 %v780, 1e-05
      %v801 = vadd.f32 %v781, 1e-05
      %v802 = vadd.f32 %v782, 1e-05
      %v803 = vadd.f32 %v783, 1e-05
      %v804 = vadd.f32 %v784, 1e-05
      %v805 = vadd.f32 %v785, 1e-05
      %v806 = vadd.f32 %v786, 1e-05
      %v807 = vadd.f32 %v787, 1e-05
      %v808 = vrsqrt.pop %v788
      %v809 = vrsqrt.pop %v789
      %v810 = vrsqrt.pop %v790
      %v811 = vrsqrt.pop %v791
      %v812 = vrsqrt.pop %v792
      %v813 = vrsqrt.pop %v793
      %v814 = vrsqrt.pop %v794
      %v815 = vrsqrt.pop %v795
      %v816 = vrsqrt.pop %v796
      %v817 = vrsqrt.pop %v797
      %v818 = vrsqrt.pop %v798
      %v819 = vrsqrt.pop %v799
      %v820 = vrsqrt.pop %v800
      %v821 = vrsqrt.pop %v801
      %v822 = vrsqrt.pop %v802
      %v823 = vrsqrt.pop %v803
      %v824 = vrsqrt.pop %v804
      %v825 = vrsqrt.pop %v805
      %v826 = vrsqrt.pop %v806
      %v827 = vrsqrt.pop %v807
      %v828 = vmul.f32 %v668, %v808
      %v829 = vmul.f32 %v669, %v809
      %v830 = vmul.f32 %v670, %v810
      %v831 = vmul.f32 %v671, %v811
      %v832 = vmul.f32 %v672, %v812
      %v833 = vmul.f32 %v673, %v813
      %v834 = vmul.f32 %v674, %v814
      %v835 = vmul.f32 %v675, %v815
      %v836 = vmul.f32 %v676, %v816
      %v837 = vmul.f32 %v677, %v817
      %v838 = vmul.f32 %v678, %v818
      %v839 = vmul.f32 %v679, %v819
      %v840 = vmul.f32 %v680, %v820
      %v841 = vmul.f32 %v681, %v821
      %v842 = vmul.f32 %v682, %v822
      %v843 = vmul.f32 %v683, %v823
      %v844 = vmul.f32 %v684, %v824
      %v845 = vmul.f32 %v685, %v825
      %v846 = vmul.f32 %v686, %v826
      %v847 = vmul.f32 %v687, %v827
      %v848 = vlaneseq
      %v849 = vshrl.u32 %v848, 7
      %v850 = vsub.s32 0, %v849
      %v851 = vrot.slane %v561, %v850
      %v852 = vmul.f32 %v828, %v851
      %v853 = vmul.f32 %v829, %v851
      %v854 = vmul.f32 %v830, %v851
      %v855 = vmul.f32 %v831, %v851
      %v856 = vmul.f32 %v832, %v851
      %v857 = vmul.f32 %v833, %v851
      %v858 = vmul.f32 %v834, %v851
      %v859 = vmul.f32 %v835, %v851
      %v860 = vmul.f32 %v836, %v851
      %v861 = vmul.f32 %v837, %v851
      %v862 = vmul.f32 %v838, %v851
      %v863 = vmul.f32 %v839, %v851
      %v864 = vmul.f32 %v840, %v851
      %v865 = vmul.f32 %v841, %v851
      %v866 = vmul.f32 %v842, %v851
      %v867 = vmul.f32 %v843, %v851
      %v868 = vmul.f32 %v844, %v851
      %v869 = vmul.f32 %v845, %v851
      %v870 = vmul.f32 %v846, %v851
      %v871 = vmul.f32 %v847, %v851
      %v872 = vlaneseq
      %v873 = vshrl.u32 %v872, 7
      %v874 = vsub.s32 1, %v873
      %v875 = vrot.slane %v561, %v874
      %v876 = vadd.f32 %v852, %v875
      %v877 = vadd.f32 %v853, %v875
      %v878 = vadd.f32 %v854, %v875
      %v879 = vadd.f32 %v855, %v875
      %v880 = vadd.f32 %v856, %v875
      %v881 = vadd.f32 %v857, %v875
      %v882 = vadd.f32 %v858, %v875
      %v883 = vadd.f32 %v859, %v875
      %v884 = vadd.f32 %v860, %v875
      %v885 = vadd.f32 %v861, %v875
      %v886 = vadd.f32 %v862, %v875
      %v887 = vadd.f32 %v863, %v875
      %v888 = vadd.f32 %v864, %v875
      %v889 = vadd.f32 %v865, %v875
      %v890 = vadd.f32 %v866, %v875
      %v891 = vadd.f32 %v867, %v875
      %v892 = vadd.f32 %v868, %v875
      %v893 = vadd.f32 %v869, %v875
      %v894 = vadd.f32 %v870, %v875
      %v895 = vadd.f32 %v871, %v875
      %v896 = vadd.f32 %v560, 1.0
      %v897 = vlaneseq
      %v898 = vshrl.u32 %v897, 7
      %v899 = vsub.s32 1, %v898
      %v900 = vrot.slane %v896, %v899
      %v901 = vmul.f32 %v876, %v900
      %v902 = vmul.f32 %v877, %v900
      %v903 = vmul.f32 %v878, %v900
      %v904 = vmul.f32 %v879, %v900
      %v905 = vmul.f32 %v880, %v900
      %v906 = vmul.f32 %v881, %v900
      %v907 = vmul.f32 %v882, %v900
      %v908 = vmul.f32 %v883, %v900
      %v909 = vmul.f32 %v884, %v900
      %v910 = vmul.f32 %v885, %v900
      %v911 = vmul.f32 %v886, %v900
      %v912 = vmul.f32 %v887, %v900
      %v913 = vmul.f32 %v888, %v900
      %v914 = vmul.f32 %v889, %v900
      %v915 = vmul.f32 %v890, %v900
      %v916 = vmul.f32 %v891, %v900
      %v917 = vmul.f32 %v892, %v900
      %v918 = vmul.f32 %v893, %v900
      %v919 = vmul.f32 %v894, %v900
      %v920 = vmul.f32 %v895, %v900
      %v921 = vlaneseq
      %v922 = vshrl.u32 %v921, 7
      %v923 = vsub.s32 0, %v922
      %v924 = vrot.slane %v560, %v923
      %v925 = vadd.f32 %v901, %v924
      %v926 = vadd.f32 %v902, %v924
      %v927 = vadd.f32 %v903, %v924
      %v928 = vadd.f32 %v904, %v924
      %v929 = vadd.f32 %v905, %v924
      %v930 = vadd.f32 %v906, %v924
      %v931 = vadd.f32 %v907, %v924
      %v932 = vadd.f32 %v908, %v924
      %v933 = vadd.f32 %v909, %v924
      %v934 = vadd.f32 %v910, %v924
      %v935 = vadd.f32 %v911, %v924
      %v936 = vadd.f32 %v912, %v924
      %v937 = vadd.f32 %v913, %v924
      %v938 = vadd.f32 %v914, %v924
      %v939 = vadd.f32 %v915, %v924
      %v940 = vadd.f32 %v916, %v924
      %v941 = vadd.f32 %v917, %v924
      %v942 = vadd.f32 %v918, %v924
      %v943 = vadd.f32 %v919, %v924
      %v944 = vadd.f32 %v920, %v924
      %v945 = vlaneseq
      %v946 = vshrl.u32 %v945, 7
      %v947 = vsub.s32 0, %v946
      %v948 = vrot.slane %v562, %v947
      %v950 = vsel %vm586, %v925, 0
      %v953 = vsel %vm586, %v926, 0
      %v956 = vsel %vm586, %v927, 0
      %v959 = vsel %vm586, %v928, 0
      %v962 = vsel %vm586, %v929, 0
      %v965 = vsel %vm586, %v930, 0
      %v968 = vsel %vm586, %v931, 0
      %v971 = vsel %vm586, %v932, 0
      %v974 = vsel %vm586, %v933, 0
      %v977 = vsel %vm586, %v934, 0
      %v980 = vsel %vm586, %v935, 0
      %v983 = vsel %vm586, %v936, 0
      %v986 = vsel %vm586, %v937, 0
      %v989 = vsel %vm586, %v938, 0
      %v992 = vsel %vm586, %v939, 0
      %v995 = vsel %vm586, %v940, 0
      %v998 = vsel %vm586, %v941, 0
      %v1001 = vsel %vm586, %v942, 0
      %v1004 = vsel %vm586, %v943, 0
      %v1007 = vsel %vm586, %v944, 0
      %vm1009 = vcmask 1043456
      %v1011 = vsel %vm1009, %v583, 0
      %1013 = vmatprep.subr.mxu0 0.0
      %1014 = vmatpush1.msra.mxu0 0.0
      %1015 = vmatprep.subr.mxu0 0.0
      %1016 = vmatpush1.msra.mxu0 0.0
      %1017 = vmatprep.subr.mxu0 0.0
      %1018 = vmatpush1.msra.mxu0 0.0
      %1019 = vmatprep.subr.mxu0 0.0
      %1020 = vmatpush1.msra.mxu0 0.0
      %1021 = vmatprep.subr.mxu0 0.0
      %1022 = vmatpush1.msra.mxu0 0.0
      %1023 = vmatprep.subr.mxu0 0.0
      %1024 = vmatpush1.msra.mxu0 0.0
      %1025 = vmatprep.subr.mxu0 0.0
      %1026 = vmatpush1.msra.mxu0 0.0
      %1027 = vmatprep.subr.mxu0 0.0
      %1028 = vmatpush1.msra.mxu0 0.0
      %1029 = vmatprep.subr.mxu0 0.0
      %1030 = vmatpush1.msra.mxu0 0.0
      %1031 = vmatprep.subr.mxu0 0.0
      %1032 = vmatpush1.msra.mxu0 0.0
      %1033 = vmatprep.subr.mxu0 0.0
      %1034 = vmatpush1.msra.mxu0 0.0
      %1035 = vmatprep.subr.mxu0 0.0
      %1036 = vmatpush1.msra.mxu0 0.0
      %1037 = vmatprep.subr.mxu0 0.0
      %1038 = vmatpush1.msra.mxu0 0.0
      %1039 = vmatprep.subr.mxu0 0.0
      %1040 = vmatpush1.msra.mxu0 0.0
      %1041 = vmatprep.subr.mxu0 0.0
      %1042 = vmatpush1.msra.mxu0 0.0
      %1043 = vmatprep.subr.mxu0 0.0
      %1044 = vmatpush1.msra.mxu0 %v1011
      %1045 = vmatprep.subr.mxu0 0.0
      %1046 = vmatpush2.msra.mxu0 0.0
      %1047 = vmatprep.subr.mxu0 0.0
      %1048 = vmatpush2.msra.mxu0 0.0
      %1049 = vmatprep.subr.mxu0 0.0
      %1050 = vmatpush2.msra.mxu0 0.0
      %1051 = vmatprep.subr.mxu0 0.0
      %1052 = vmatpush2.msra.mxu0 0.0
      %1053 = vmatprep.subr.mxu0 0.0
      %1054 = vmatpush2.msra.mxu0 0.0
      %1055 = vmatprep.subr.mxu0 0.0
      %1056 = vmatpush2.msra.mxu0 0.0
      %1057 = vmatprep.subr.mxu0 0.0
      %1058 = vmatpush2.msra.mxu0 0.0
      %1059 = vmatprep.subr.mxu0 0.0
      %1060 = vmatpush2.msra.mxu0 0.0
      %1061 = vmatprep.subr.mxu0 0.0
      %1062 = vmatpush2.msra.mxu0 0.0
      %1063 = vmatprep.subr.mxu0 0.0
      %1064 = vmatpush2.msra.mxu0 0.0
      %1065 = vmatprep.subr.mxu0 0.0
      %1066 = vmatpush2.msra.mxu0 0.0
      %1067 = vmatprep.subr.mxu0 0.0
      %1068 = vmatpush2.msra.mxu0 0.0
      %1069 = vmatprep.subr.mxu0 0.0
      %1070 = vmatpush2.msra.mxu0 0.0
      %1071 = vmatprep.subr.mxu0 0.0
      %1072 = vmatpush2.msra.mxu0 0.0
      %1073 = vmatprep.subr.mxu0 0.0
      %1074 = vmatpush2.msra.mxu0 0.0
      %1075 = vmatprep.subr.mxu0 0.0
      %1076 = vmatpush2.msra.mxu0 0.0
      %1077 = vmatprep.mubr.f32.mxu0 0.0
      %1078 = vmatmul.mubr.f32.gmra.mxu0 %v950
      %v1079 = vpop.f32.mrf.mxu0
      %v1080 = vadd.f32 %v948, %v1079
      %v1081 = vpop.f32.mrf.mxu0
      %1082 = vmatprep.mubr.f32.mxu0 0.0
      %1083 = vmatmul.mubr.f32.gmra.mxu0 %v953
      %v1084 = vpop.f32.mrf.mxu0
      %v1085 = vadd.f32 %v948, %v1084
      %v1086 = vpop.f32.mrf.mxu0
      %1087 = vmatprep.mubr.f32.mxu0 0.0
      %1088 = vmatmul.mubr.f32.gmra.mxu0 %v956
      %v1089 = vpop.f32.mrf.mxu0
      %v1090 = vadd.f32 %v948, %v1089
      %v1091 = vpop.f32.mrf.mxu0
      %1092 = vmatprep.mubr.f32.mxu0 0.0
      %1093 = vmatmul.mubr.f32.gmra.mxu0 %v959
      %v1094 = vpop.f32.mrf.mxu0
      %v1095 = vadd.f32 %v948, %v1094
      %v1096 = vpop.f32.mrf.mxu0
      %1097 = vmatprep.mubr.f32.mxu0 0.0
      %1098 = vmatmul.mubr.f32.gmra.mxu0 %v962
      %v1099 = vpop.f32.mrf.mxu0
      %v1100 = vadd.f32 %v948, %v1099
      %v1101 = vpop.f32.mrf.mxu0
      %1102 = vmatprep.mubr.f32.mxu0 0.0
      %1103 = vmatmul.mubr.f32.gmra.mxu0 %v965
      %v1104 = vpop.f32.mrf.mxu0
      %v1105 = vadd.f32 %v948, %v1104
      %v1106 = vpop.f32.mrf.mxu0
      %1107 = vmatprep.mubr.f32.mxu0 0.0
      %1108 = vmatmul.mubr.f32.gmra.mxu0 %v968
      %v1109 = vpop.f32.mrf.mxu0
      %v1110 = vadd.f32 %v948, %v1109
      %v1111 = vpop.f32.mrf.mxu0
      %1112 = vmatprep.mubr.f32.mxu0 0.0
      %1113 = vmatmul.mubr.f32.gmra.mxu0 %v971
      %v1114 = vpop.f32.mrf.mxu0
      %v1115 = vadd.f32 %v948, %v1114
      %v1116 = vpop.f32.mrf.mxu0
      %1117 = vmatprep.mubr.f32.mxu0 0.0
      %1118 = vmatmul.mubr.f32.gmra.mxu0 %v974
      %v1119 = vpop.f32.mrf.mxu0
      %v1120 = vadd.f32 %v948, %v1119
      %v1121 = vpop.f32.mrf.mxu0
      %1122 = vmatprep.mubr.f32.mxu0 0.0
      %1123 = vmatmul.mubr.f32.gmra.mxu0 %v977
      %v1124 = vpop.f32.mrf.mxu0
      %v1125 = vadd.f32 %v948, %v1124
      %v1126 = vpop.f32.mrf.mxu0
      %1127 = vmatprep.mubr.f32.mxu0 0.0
      %1128 = vmatmul.mubr.f32.gmra.mxu0 %v980
      %v1129 = vpop.f32.mrf.mxu0
      %v1130 = vadd.f32 %v948, %v1129
      %v1131 = vpop.f32.mrf.mxu0
      %1132 = vmatprep.mubr.f32.mxu0 0.0
      %1133 = vmatmul.mubr.f32.gmra.mxu0 %v983
      %v1134 = vpop.f32.mrf.mxu0
      %v1135 = vadd.f32 %v948, %v1134
      %v1136 = vpop.f32.mrf.mxu0
      %1137 = vmatprep.mubr.f32.mxu0 0.0
      %1138 = vmatmul.mubr.f32.gmra.mxu0 %v986
      %v1139 = vpop.f32.mrf.mxu0
      %v1140 = vadd.f32 %v948, %v1139
      %v1141 = vpop.f32.mrf.mxu0
      %1142 = vmatprep.mubr.f32.mxu0 0.0
      %1143 = vmatmul.mubr.f32.gmra.mxu0 %v989
      %v1144 = vpop.f32.mrf.mxu0
      %v1145 = vadd.f32 %v948, %v1144
      %v1146 = vpop.f32.mrf.mxu0
      %1147 = vmatprep.mubr.f32.mxu0 0.0
      %1148 = vmatmul.mubr.f32.gmra.mxu0 %v992
      %v1149 = vpop.f32.mrf.mxu0
      %v1150 = vadd.f32 %v948, %v1149
      %v1151 = vpop.f32.mrf.mxu0
      %1152 = vmatprep.mubr.f32.mxu0 0.0
      %1153 = vmatmul.mubr.f32.gmra.mxu0 %v995
      %v1154 = vpop.f32.mrf.mxu0
      %v1155 = vadd.f32 %v948, %v1154
      %v1156 = vpop.f32.mrf.mxu0
      %1157 = vmatprep.mubr.f32.mxu0 0.0
      %1158 = vmatmul.mubr.f32.gmra.mxu0 %v998
      %v1159 = vpop.f32.mrf.mxu0
      %v1160 = vadd.f32 %v948, %v1159
      %v1161 = vpop.f32.mrf.mxu0
      %1162 = vmatprep.mubr.f32.mxu0 0.0
      %1163 = vmatmul.mubr.f32.gmra.mxu0 %v1001
      %v1164 = vpop.f32.mrf.mxu0
      %v1165 = vadd.f32 %v948, %v1164
      %v1166 = vpop.f32.mrf.mxu0
      %1167 = vmatprep.mubr.f32.mxu0 0.0
      %1168 = vmatmul.mubr.f32.gmra.mxu0 %v1004
      %v1169 = vpop.f32.mrf.mxu0
      %v1170 = vadd.f32 %v948, %v1169
      %v1171 = vpop.f32.mrf.mxu0
      %1172 = vmatprep.mubr.f32.mxu0 0.0
      %1173 = vmatmul.mubr.f32.gmra.mxu0 %v1007
      %v1174 = vpop.f32.mrf.mxu0
      %v1175 = vadd.f32 %v948, %v1174
      %v1176 = vpop.f32.mrf.mxu0
      %1177 = vdwg.mxu0
      %v1178 = vlaneseq
      %v1179 = vshrl.u32 %v1178, 7
      %v1180 = vadd.s32 %v1179, 8
      %v1181 = vadd.s32 %v1179, 16
      %v1182 = vadd.s32 %v1179, 24
      %v1183 = vadd.s32 %v1179, 32
      %v1184 = vadd.s32 %v1179, 40
      %v1185 = vadd.s32 %v1179, 48
      %v1186 = vadd.s32 %v1179, 56
      %v1187 = vadd.s32 %v1179, 64
      %v1188 = vadd.s32 %v1179, 72
      %v1189 = vadd.s32 %v1179, 80
      %v1190 = vadd.s32 %v1179, 88
      %v1191 = vadd.s32 %v1179, 96
      %v1192 = vadd.s32 %v1179, 104
      %v1193 = vadd.s32 %v1179, 112
      %v1194 = vadd.s32 %v1179, 120
      %v1195 = vadd.s32 %v1179, 128
      %v1196 = vadd.s32 %v1179, 136
      %v1197 = vadd.s32 %v1179, 144
      %v1198 = vadd.s32 %v1179, 152
      %vm1199 = vcmp.lt.s32.totalorder %v1179, 16
      %vm1200 = vcmp.lt.s32.totalorder %v1180, 16
      %vm1201 = vcmp.lt.s32.totalorder %v1181, 16
      %vm1202 = vcmp.lt.s32.totalorder %v1182, 16
      %vm1203 = vcmp.lt.s32.totalorder %v1183, 16
      %vm1204 = vcmp.lt.s32.totalorder %v1184, 16
      %vm1205 = vcmp.lt.s32.totalorder %v1185, 16
      %vm1206 = vcmp.lt.s32.totalorder %v1186, 16
      %vm1207 = vcmp.lt.s32.totalorder %v1187, 16
      %vm1208 = vcmp.lt.s32.totalorder %v1188, 16
      %vm1209 = vcmp.lt.s32.totalorder %v1189, 16
      %vm1210 = vcmp.lt.s32.totalorder %v1190, 16
      %vm1211 = vcmp.lt.s32.totalorder %v1191, 16
      %vm1212 = vcmp.lt.s32.totalorder %v1192, 16
      %vm1213 = vcmp.lt.s32.totalorder %v1193, 16
      %vm1214 = vcmp.lt.s32.totalorder %v1194, 16
      %vm1215 = vcmp.lt.s32.totalorder %v1195, 16
      %vm1216 = vcmp.lt.s32.totalorder %v1196, 16
      %vm1217 = vcmp.lt.s32.totalorder %v1197, 16
      %vm1218 = vcmp.lt.s32.totalorder %v1198, 16
      %s1219 = scalar_select %p558, 1, 0
      %v1220 = vstv %s1219
      %vm1221 = vcmp.eq.s32.totalorder %v1220, 1
      %vm1222 = vmand %vm1221, %vm1199
      %vm1223 = vmand %vm1221, %vm1200
      %vm1224 = vmand %vm1221, %vm1201
      %vm1225 = vmand %vm1221, %vm1202
      %vm1226 = vmand %vm1221, %vm1203
      %vm1227 = vmand %vm1221, %vm1204
      %vm1228 = vmand %vm1221, %vm1205
      %vm1229 = vmand %vm1221, %vm1206
      %vm1230 = vmand %vm1221, %vm1207
      %vm1231 = vmand %vm1221, %vm1208
      %vm1232 = vmand %vm1221, %vm1209
      %vm1233 = vmand %vm1221, %vm1210
      %vm1234 = vmand %vm1221, %vm1211
      %vm1235 = vmand %vm1221, %vm1212
      %vm1236 = vmand %vm1221, %vm1213
      %vm1237 = vmand %vm1221, %vm1214
      %vm1238 = vmand %vm1221, %vm1215
      %vm1239 = vmand %vm1221, %vm1216
      %vm1240 = vmand %vm1221, %vm1217
      %vm1241 = vmand %vm1221, %vm1218
      %vm1242 = vcmp.ge.s32.totalorder %v1179, 144
      %vm1243 = vcmp.ge.s32.totalorder %v1180, 144
      %vm1244 = vcmp.ge.s32.totalorder %v1181, 144
      %vm1245 = vcmp.ge.s32.totalorder %v1182, 144
      %vm1246 = vcmp.ge.s32.totalorder %v1183, 144
      %vm1247 = vcmp.ge.s32.totalorder %v1184, 144
      %vm1248 = vcmp.ge.s32.totalorder %v1185, 144
      %vm1249 = vcmp.ge.s32.totalorder %v1186, 144
      %vm1250 = vcmp.ge.s32.totalorder %v1187, 144
      %vm1251 = vcmp.ge.s32.totalorder %v1188, 144
      %vm1252 = vcmp.ge.s32.totalorder %v1189, 144
      %vm1253 = vcmp.ge.s32.totalorder %v1190, 144
      %vm1254 = vcmp.ge.s32.totalorder %v1191, 144
      %vm1255 = vcmp.ge.s32.totalorder %v1192, 144
      %vm1256 = vcmp.ge.s32.totalorder %v1193, 144
      %vm1257 = vcmp.ge.s32.totalorder %v1194, 144
      %vm1258 = vcmp.ge.s32.totalorder %v1195, 144
      %vm1259 = vcmp.ge.s32.totalorder %v1196, 144
      %vm1260 = vcmp.ge.s32.totalorder %v1197, 144
      %vm1261 = vcmp.ge.s32.totalorder %v1198, 144
      %s1262 = scalar_select %p559, 1, 0
      %v1263 = vstv %s1262
      %vm1264 = vcmp.eq.s32.totalorder %v1263, 1
      %vm1265 = vmand %vm1264, %vm1242
      %vm1266 = vmand %vm1264, %vm1243
      %vm1267 = vmand %vm1264, %vm1244
      %vm1268 = vmand %vm1264, %vm1245
      %vm1269 = vmand %vm1264, %vm1246
      %vm1270 = vmand %vm1264, %vm1247
      %vm1271 = vmand %vm1264, %vm1248
      %vm1272 = vmand %vm1264, %vm1249
      %vm1273 = vmand %vm1264, %vm1250
      %vm1274 = vmand %vm1264, %vm1251
      %vm1275 = vmand %vm1264, %vm1252
      %vm1276 = vmand %vm1264, %vm1253
      %vm1277 = vmand %vm1264, %vm1254
      %vm1278 = vmand %vm1264, %vm1255
      %vm1279 = vmand %vm1264, %vm1256
      %vm1280 = vmand %vm1264, %vm1257
      %vm1281 = vmand %vm1264, %vm1258
      %vm1282 = vmand %vm1264, %vm1259
      %vm1283 = vmand %vm1264, %vm1260
      %vm1284 = vmand %vm1264, %vm1261
      %vm1285 = vmor %vm1222, %vm1265
      %vm1286 = vmor %vm1223, %vm1266
      %vm1287 = vmor %vm1224, %vm1267
      %vm1288 = vmor %vm1225, %vm1268
      %vm1289 = vmor %vm1226, %vm1269
      %vm1290 = vmor %vm1227, %vm1270
      %vm1291 = vmor %vm1228, %vm1271
      %vm1292 = vmor %vm1229, %vm1272
      %vm1293 = vmor %vm1230, %vm1273
      %vm1294 = vmor %vm1231, %vm1274
      %vm1295 = vmor %vm1232, %vm1275
      %vm1296 = vmor %vm1233, %vm1276
      %vm1297 = vmor %vm1234, %vm1277
      %vm1298 = vmor %vm1235, %vm1278
      %vm1299 = vmor %vm1236, %vm1279
      %vm1300 = vmor %vm1237, %vm1280
      %vm1301 = vmor %vm1238, %vm1281
      %vm1302 = vmor %vm1239, %vm1282
      %vm1303 = vmor %vm1240, %vm1283
      %vm1304 = vmor %vm1241, %vm1284
      %v1305 = vsel %vm1285, 1, 0
      %v1306 = vsel %vm1286, 1, 0
      %v1307 = vsel %vm1287, 1, 0
      %v1308 = vsel %vm1288, 1, 0
      %v1309 = vsel %vm1289, 1, 0
      %v1310 = vsel %vm1290, 1, 0
      %v1311 = vsel %vm1291, 1, 0
      %v1312 = vsel %vm1292, 1, 0
      %v1313 = vsel %vm1293, 1, 0
      %v1314 = vsel %vm1294, 1, 0
      %v1315 = vsel %vm1295, 1, 0
      %v1316 = vsel %vm1296, 1, 0
      %v1317 = vsel %vm1297, 1, 0
      %v1318 = vsel %vm1298, 1, 0
      %v1319 = vsel %vm1299, 1, 0
      %v1320 = vsel %vm1300, 1, 0
      %v1321 = vsel %vm1301, 1, 0
      %v1322 = vsel %vm1302, 1, 0
      %v1323 = vsel %vm1303, 1, 0
      %v1324 = vsel %vm1304, 1, 0
      %vm1325 = vcmp.eq.s32.totalorder %v1305, 1
      %vm1326 = vcmp.eq.s32.totalorder %v1306, 1
      %vm1327 = vcmp.eq.s32.totalorder %v1307, 1
      %vm1328 = vcmp.eq.s32.totalorder %v1308, 1
      %vm1329 = vcmp.eq.s32.totalorder %v1309, 1
      %vm1330 = vcmp.eq.s32.totalorder %v1310, 1
      %vm1331 = vcmp.eq.s32.totalorder %v1311, 1
      %vm1332 = vcmp.eq.s32.totalorder %v1312, 1
      %vm1333 = vcmp.eq.s32.totalorder %v1313, 1
      %vm1334 = vcmp.eq.s32.totalorder %v1314, 1
      %vm1335 = vcmp.eq.s32.totalorder %v1315, 1
      %vm1336 = vcmp.eq.s32.totalorder %v1316, 1
      %vm1337 = vcmp.eq.s32.totalorder %v1317, 1
      %vm1338 = vcmp.eq.s32.totalorder %v1318, 1
      %vm1339 = vcmp.eq.s32.totalorder %v1319, 1
      %vm1340 = vcmp.eq.s32.totalorder %v1320, 1
      %vm1341 = vcmp.eq.s32.totalorder %v1321, 1
      %vm1342 = vcmp.eq.s32.totalorder %v1322, 1
      %vm1343 = vcmp.eq.s32.totalorder %v1323, 1
      %vm1344 = vcmp.eq.s32.totalorder %v1324, 1
      %v1345 = vsel %vm1325, 0.0, %v1080
      %v1346 = vsel %vm1326, 0.0, %v1085
      %v1347 = vsel %vm1327, 0.0, %v1090
      %v1348 = vsel %vm1328, 0.0, %v1095
      %v1349 = vsel %vm1329, 0.0, %v1100
      %v1350 = vsel %vm1330, 0.0, %v1105
      %v1351 = vsel %vm1331, 0.0, %v1110
      %v1352 = vsel %vm1332, 0.0, %v1115
      %v1353 = vsel %vm1333, 0.0, %v1120
      %v1354 = vsel %vm1334, 0.0, %v1125
      %v1355 = vsel %vm1335, 0.0, %v1130
      %v1356 = vsel %vm1336, 0.0, %v1135
      %v1357 = vsel %vm1337, 0.0, %v1140
      %v1358 = vsel %vm1338, 0.0, %v1145
      %v1359 = vsel %vm1339, 0.0, %v1150
      %v1360 = vsel %vm1340, 0.0, %v1155
      %v1361 = vsel %vm1341, 0.0, %v1160
      %v1362 = vsel %vm1342, 0.0, %v1165
      %v1363 = vsel %vm1343, 0.0, %v1170
      %v1364 = vsel %vm1344, 0.0, %v1175
      %vm1365 = vcmp.lt.s32.totalorder %v1179, 0
      %v1366 = vsub.s32 0, %v1179
      %v1367 = vsel %vm1365, %v1366, %v1179
      %v1368 = vshrl.u32 %v1367, 4
      %v1369 = vand.u32 %v1367, 15
      %v1370 = vsub.s32 0, %v1369
      %v1371 = vsel %vm1365, %v1370, %v1369
      %vm1372 = vcmp.lt.s32.totalorder %v1180, 0
      %v1373 = vsub.s32 0, %v1180
      %v1374 = vsel %vm1372, %v1373, %v1180
      %v1375 = vshrl.u32 %v1374, 4
      %v1376 = vand.u32 %v1374, 15
      %v1377 = vsub.s32 0, %v1376
      %v1378 = vsel %vm1372, %v1377, %v1376
      %vm1379 = vcmp.lt.s32.totalorder %v1181, 0
      %v1380 = vsub.s32 0, %v1181
      %v1381 = vsel %vm1379, %v1380, %v1181
      %v1382 = vshrl.u32 %v1381, 4
      %v1383 = vand.u32 %v1381, 15
      %v1384 = vsub.s32 0, %v1383
      %v1385 = vsel %vm1379, %v1384, %v1383
      %vm1386 = vcmp.lt.s32.totalorder %v1182, 0
      %v1387 = vsub.s32 0, %v1182
      %v1388 = vsel %vm1386, %v1387, %v1182
      %v1389 = vshrl.u32 %v1388, 4
      %v1390 = vand.u32 %v1388, 15
      %v1391 = vsub.s32 0, %v1390
      %v1392 = vsel %vm1386, %v1391, %v1390
      %vm1393 = vcmp.lt.s32.totalorder %v1183, 0
      %v1394 = vsub.s32 0, %v1183
      %v1395 = vsel %vm1393, %v1394, %v1183
      %v1396 = vshrl.u32 %v1395, 4
      %v1397 = vand.u32 %v1395, 15
      %v1398 = vsub.s32 0, %v1397
      %v1399 = vsel %vm1393, %v1398, %v1397
      %vm1400 = vcmp.lt.s32.totalorder %v1184, 0
      %v1401 = vsub.s32 0, %v1184
      %v1402 = vsel %vm1400, %v1401, %v1184
      %v1403 = vshrl.u32 %v1402, 4
      %v1404 = vand.u32 %v1402, 15
      %v1405 = vsub.s32 0, %v1404
      %v1406 = vsel %vm1400, %v1405, %v1404
      %vm1407 = vcmp.lt.s32.totalorder %v1185, 0
      %v1408 = vsub.s32 0, %v1185
      %v1409 = vsel %vm1407, %v1408, %v1185
      %v1410 = vshrl.u32 %v1409, 4
      %v1411 = vand.u32 %v1409, 15
      %v1412 = vsub.s32 0, %v1411
      %v1413 = vsel %vm1407, %v1412, %v1411
      %vm1414 = vcmp.lt.s32.totalorder %v1186, 0
      %v1415 = vsub.s32 0, %v1186
      %v1416 = vsel %vm1414, %v1415, %v1186
      %v1417 = vshrl.u32 %v1416, 4
      %v1418 = vand.u32 %v1416, 15
      %v1419 = vsub.s32 0, %v1418
      %v1420 = vsel %vm1414, %v1419, %v1418
      %vm1421 = vcmp.lt.s32.totalorder %v1187, 0
      %v1422 = vsub.s32 0, %v1187
      %v1423 = vsel %vm1421, %v1422, %v1187
      %v1424 = vshrl.u32 %v1423, 4
      %v1425 = vand.u32 %v1423, 15
      %v1426 = vsub.s32 0, %v1425
      %v1427 = vsel %vm1421, %v1426, %v1425
      %vm1428 = vcmp.lt.s32.totalorder %v1188, 0
      %v1429 = vsub.s32 0, %v1188
      %v1430 = vsel %vm1428, %v1429, %v1188
      %v1431 = vshrl.u32 %v1430, 4
      %v1432 = vand.u32 %v1430, 15
      %v1433 = vsub.s32 0, %v1432
      %v1434 = vsel %vm1428, %v1433, %v1432
      %vm1435 = vcmp.lt.s32.totalorder %v1189, 0
      %v1436 = vsub.s32 0, %v1189
      %v1437 = vsel %vm1435, %v1436, %v1189
      %v1438 = vshrl.u32 %v1437, 4
      %v1439 = vand.u32 %v1437, 15
      %v1440 = vsub.s32 0, %v1439
      %v1441 = vsel %vm1435, %v1440, %v1439
      %vm1442 = vcmp.lt.s32.totalorder %v1190, 0
      %v1443 = vsub.s32 0, %v1190
      %v1444 = vsel %vm1442, %v1443, %v1190
      %v1445 = vshrl.u32 %v1444, 4
      %v1446 = vand.u32 %v1444, 15
      %v1447 = vsub.s32 0, %v1446
      %v1448 = vsel %vm1442, %v1447, %v1446
      %vm1449 = vcmp.lt.s32.totalorder %v1191, 0
      %v1450 = vsub.s32 0, %v1191
      %v1451 = vsel %vm1449, %v1450, %v1191
      %v1452 = vshrl.u32 %v1451, 4
      %v1453 = vand.u32 %v1451, 15
      %v1454 = vsub.s32 0, %v1453
      %v1455 = vsel %vm1449, %v1454, %v1453
      %vm1456 = vcmp.lt.s32.totalorder %v1192, 0
      %v1457 = vsub.s32 0, %v1192
      %v1458 = vsel %vm1456, %v1457, %v1192
      %v1459 = vshrl.u32 %v1458, 4
      %v1460 = vand.u32 %v1458, 15
      %v1461 = vsub.s32 0, %v1460
      %v1462 = vsel %vm1456, %v1461, %v1460
      %vm1463 = vcmp.lt.s32.totalorder %v1193, 0
      %v1464 = vsub.s32 0, %v1193
      %v1465 = vsel %vm1463, %v1464, %v1193
      %v1466 = vshrl.u32 %v1465, 4
      %v1467 = vand.u32 %v1465, 15
      %v1468 = vsub.s32 0, %v1467
      %v1469 = vsel %vm1463, %v1468, %v1467
      %vm1470 = vcmp.lt.s32.totalorder %v1194, 0
      %v1471 = vsub.s32 0, %v1194
      %v1472 = vsel %vm1470, %v1471, %v1194
      %v1473 = vshrl.u32 %v1472, 4
      %v1474 = vand.u32 %v1472, 15
      %v1475 = vsub.s32 0, %v1474
      %v1476 = vsel %vm1470, %v1475, %v1474
      %vm1477 = vcmp.lt.s32.totalorder %v1195, 0
      %v1478 = vsub.s32 0, %v1195
      %v1479 = vsel %vm1477, %v1478, %v1195
      %v1480 = vshrl.u32 %v1479, 4
      %v1481 = vand.u32 %v1479, 15
      %v1482 = vsub.s32 0, %v1481
      %v1483 = vsel %vm1477, %v1482, %v1481
      %vm1484 = vcmp.lt.s32.totalorder %v1196, 0
      %v1485 = vsub.s32 0, %v1196
      %v1486 = vsel %vm1484, %v1485, %v1196
      %v1487 = vshrl.u32 %v1486, 4
      %v1488 = vand.u32 %v1486, 15
      %v1489 = vsub.s32 0, %v1488
      %v1490 = vsel %vm1484, %v1489, %v1488
      %vm1491 = vcmp.lt.s32.totalorder %v1197, 0
      %v1492 = vsub.s32 0, %v1197
      %v1493 = vsel %vm1491, %v1492, %v1197
      %v1494 = vshrl.u32 %v1493, 4
      %v1495 = vand.u32 %v1493, 15
      %v1496 = vsub.s32 0, %v1495
      %v1497 = vsel %vm1491, %v1496, %v1495
      %vm1498 = vcmp.lt.s32.totalorder %v1198, 0
      %v1499 = vsub.s32 0, %v1198
      %v1500 = vsel %vm1498, %v1499, %v1198
      %v1501 = vshrl.u32 %v1500, 4
      %v1502 = vand.u32 %v1500, 15
      %v1503 = vsub.s32 0, %v1502
      %v1504 = vsel %vm1498, %v1503, %v1502
      %vm1505 = vcmp.ne.s32.totalorder %v1371, 0
      %vm1506 = vcmp.ne.s32.totalorder %v1378, 0
      %vm1507 = vcmp.ne.s32.totalorder %v1385, 0
      %vm1508 = vcmp.ne.s32.totalorder %v1392, 0
      %vm1509 = vcmp.ne.s32.totalorder %v1399, 0
      %vm1510 = vcmp.ne.s32.totalorder %v1406, 0
      %vm1511 = vcmp.ne.s32.totalorder %v1413, 0
      %vm1512 = vcmp.ne.s32.totalorder %v1420, 0
      %vm1513 = vcmp.ne.s32.totalorder %v1427, 0
      %vm1514 = vcmp.ne.s32.totalorder %v1434, 0
      %vm1515 = vcmp.ne.s32.totalorder %v1441, 0
      %vm1516 = vcmp.ne.s32.totalorder %v1448, 0
      %vm1517 = vcmp.ne.s32.totalorder %v1455, 0
      %vm1518 = vcmp.ne.s32.totalorder %v1462, 0
      %vm1519 = vcmp.ne.s32.totalorder %v1469, 0
      %vm1520 = vcmp.ne.s32.totalorder %v1476, 0
      %vm1521 = vcmp.ne.s32.totalorder %v1483, 0
      %vm1522 = vcmp.ne.s32.totalorder %v1490, 0
      %vm1523 = vcmp.ne.s32.totalorder %v1497, 0
      %vm1524 = vcmp.ne.s32.totalorder %v1504, 0
      %vm1525 = vcmp.lt.s32.totalorder %v1371, 0
      %vm1526 = vcmp.lt.s32.totalorder %v1378, 0
      %vm1527 = vcmp.lt.s32.totalorder %v1385, 0
      %vm1528 = vcmp.lt.s32.totalorder %v1392, 0
      %vm1529 = vcmp.lt.s32.totalorder %v1399, 0
      %vm1530 = vcmp.lt.s32.totalorder %v1406, 0
      %vm1531 = vcmp.lt.s32.totalorder %v1413, 0
      %vm1532 = vcmp.lt.s32.totalorder %v1420, 0
      %vm1533 = vcmp.lt.s32.totalorder %v1427, 0
      %vm1534 = vcmp.lt.s32.totalorder %v1434, 0
      %vm1535 = vcmp.lt.s32.totalorder %v1441, 0
      %vm1536 = vcmp.lt.s32.totalorder %v1448, 0
      %vm1537 = vcmp.lt.s32.totalorder %v1455, 0
      %vm1538 = vcmp.lt.s32.totalorder %v1462, 0
      %vm1539 = vcmp.lt.s32.totalorder %v1469, 0
      %vm1540 = vcmp.lt.s32.totalorder %v1476, 0
      %vm1541 = vcmp.lt.s32.totalorder %v1483, 0
      %vm1542 = vcmp.lt.s32.totalorder %v1490, 0
      %vm1543 = vcmp.lt.s32.totalorder %v1497, 0
      %vm1544 = vcmp.lt.s32.totalorder %v1504, 0
      %vm1545 = vmand %vm1525, %vm1505
      %vm1546 = vmand %vm1526, %vm1506
      %vm1547 = vmand %vm1527, %vm1507
      %vm1548 = vmand %vm1528, %vm1508
      %vm1549 = vmand %vm1529, %vm1509
      %vm1550 = vmand %vm1530, %vm1510
      %vm1551 = vmand %vm1531, %vm1511
      %vm1552 = vmand %vm1532, %vm1512
      %vm1553 = vmand %vm1533, %vm1513
      %vm1554 = vmand %vm1534, %vm1514
      %vm1555 = vmand %vm1535, %vm1515
      %vm1556 = vmand %vm1536, %vm1516
      %vm1557 = vmand %vm1537, %vm1517
      %vm1558 = vmand %vm1538, %vm1518
      %vm1559 = vmand %vm1539, %vm1519
      %vm1560 = vmand %vm1540, %vm1520
      %vm1561 = vmand %vm1541, %vm1521
      %vm1562 = vmand %vm1542, %vm1522
      %vm1563 = vmand %vm1543, %vm1523
      %vm1564 = vmand %vm1544, %vm1524
      %v1565 = vadd.s32 %v1371, 16
      %v1566 = vadd.s32 %v1378, 16
      %v1567 = vadd.s32 %v1385, 16
      %v1568 = vadd.s32 %v1392, 16
      %v1569 = vadd.s32 %v1399, 16
      %v1570 = vadd.s32 %v1406, 16
      %v1571 = vadd.s32 %v1413, 16
      %v1572 = vadd.s32 %v1420, 16
      %v1573 = vadd.s32 %v1427, 16
      %v1574 = vadd.s32 %v1434, 16
      %v1575 = vadd.s32 %v1441, 16
      %v1576 = vadd.s32 %v1448, 16
      %v1577 = vadd.s32 %v1455, 16
      %v1578 = vadd.s32 %v1462, 16
      %v1579 = vadd.s32 %v1469, 16
      %v1580 = vadd.s32 %v1476, 16
      %v1581 = vadd.s32 %v1483, 16
      %v1582 = vadd.s32 %v1490, 16
      %v1583 = vadd.s32 %v1497, 16
      %v1584 = vadd.s32 %v1504, 16
      %v1585 = vsel %vm1545, %v1565, %v1371
      %v1586 = vsel %vm1546, %v1566, %v1378
      %v1587 = vsel %vm1547, %v1567, %v1385
      %v1588 = vsel %vm1548, %v1568, %v1392
      %v1589 = vsel %vm1549, %v1569, %v1399
      %v1590 = vsel %vm1550, %v1570, %v1406
      %v1591 = vsel %vm1551, %v1571, %v1413
      %v1592 = vsel %vm1552, %v1572, %v1420
      %v1593 = vsel %vm1553, %v1573, %v1427
      %v1594 = vsel %vm1554, %v1574, %v1434
      %v1595 = vsel %vm1555, %v1575, %v1441
      %v1596 = vsel %vm1556, %v1576, %v1448
      %v1597 = vsel %vm1557, %v1577, %v1455
      %v1598 = vsel %vm1558, %v1578, %v1462
      %v1599 = vsel %vm1559, %v1579, %v1469
      %v1600 = vsel %vm1560, %v1580, %v1476
      %v1601 = vsel %vm1561, %v1581, %v1483
      %v1602 = vsel %vm1562, %v1582, %v1490
      %v1603 = vsel %vm1563, %v1583, %v1497
      %v1604 = vsel %vm1564, %v1584, %v1504
      %vm1605 = vcmp.eq.s32.totalorder %v1585, 0
      %vm1606 = vcmp.eq.s32.totalorder %v1586, 0
      %vm1607 = vcmp.eq.s32.totalorder %v1587, 0
      %vm1608 = vcmp.eq.s32.totalorder %v1588, 0
      %vm1609 = vcmp.eq.s32.totalorder %v1589, 0
      %vm1610 = vcmp.eq.s32.totalorder %v1590, 0
      %vm1611 = vcmp.eq.s32.totalorder %v1591, 0
      %vm1612 = vcmp.eq.s32.totalorder %v1592, 0
      %vm1613 = vcmp.eq.s32.totalorder %v1593, 0
      %vm1614 = vcmp.eq.s32.totalorder %v1594, 0
      %vm1615 = vcmp.eq.s32.totalorder %v1595, 0
      %vm1616 = vcmp.eq.s32.totalorder %v1596, 0
      %vm1617 = vcmp.eq.s32.totalorder %v1597, 0
      %vm1618 = vcmp.eq.s32.totalorder %v1598, 0
      %vm1619 = vcmp.eq.s32.totalorder %v1599, 0
      %vm1620 = vcmp.eq.s32.totalorder %v1600, 0
      %vm1621 = vcmp.eq.s32.totalorder %v1601, 0
      %vm1622 = vcmp.eq.s32.totalorder %v1602, 0
      %vm1623 = vcmp.eq.s32.totalorder %v1603, 0
      %vm1624 = vcmp.eq.s32.totalorder %v1604, 0
      %v1625 = vrot.slane %v1345, 7
      %v1626 = vrot.slane %v1346, 7
      %v1627 = vrot.slane %v1347, 7
      %v1628 = vrot.slane %v1348, 7
      %v1629 = vrot.slane %v1349, 7
      %v1630 = vrot.slane %v1350, 7
      %v1631 = vrot.slane %v1351, 7
      %v1632 = vrot.slane %v1352, 7
      %v1633 = vrot.slane %v1353, 7
      %v1634 = vrot.slane %v1354, 7
      %v1635 = vrot.slane %v1355, 7
      %v1636 = vrot.slane %v1356, 7
      %v1637 = vrot.slane %v1357, 7
      %v1638 = vrot.slane %v1358, 7
      %v1639 = vrot.slane %v1359, 7
      %v1640 = vrot.slane %v1360, 7
      %v1641 = vrot.slane %v1361, 7
      %v1642 = vrot.slane %v1362, 7
      %v1643 = vrot.slane %v1363, 7
      %v1644 = vrot.slane %v1364, 7
      %vm1645 = vcmp.lt.s32.totalorder %v1179, 1
      %v1646 = vsel %vm1645, %v1643, %v1644
      %v1647 = vsel %vm1645, %v1642, %v1643
      %v1648 = vsel %vm1645, %v1641, %v1642
      %v1649 = vsel %vm1645, %v1640, %v1641
      %v1650 = vsel %vm1645, %v1639, %v1640
      %v1651 = vsel %vm1645, %v1638, %v1639
      %v1652 = vsel %vm1645, %v1637, %v1638
      %v1653 = vsel %vm1645, %v1636, %v1637
      %v1654 = vsel %vm1645, %v1635, %v1636
      %v1655 = vsel %vm1645, %v1634, %v1635
      %v1656 = vsel %vm1645, %v1633, %v1634
      %v1657 = vsel %vm1645, %v1632, %v1633
      %v1658 = vsel %vm1645, %v1631, %v1632
      %v1659 = vsel %vm1645, %v1630, %v1631
      %v1660 = vsel %vm1645, %v1629, %v1630
      %v1661 = vsel %vm1645, %v1628, %v1629
      %v1662 = vsel %vm1645, %v1627, %v1628
      %v1663 = vsel %vm1645, %v1626, %v1627
      %v1664 = vsel %vm1645, %v1625, %v1626
      %v1665 = vsel %vm1645, %v1644, %v1625
      %v1666 = vsel %vm1605, 1, 0
      %v1667 = vsel %vm1606, 1, 0
      %v1668 = vsel %vm1607, 1, 0
      %v1669 = vsel %vm1608, 1, 0
      %v1670 = vsel %vm1609, 1, 0
      %v1671 = vsel %vm1610, 1, 0
      %v1672 = vsel %vm1611, 1, 0
      %v1673 = vsel %vm1612, 1, 0
      %v1674 = vsel %vm1613, 1, 0
      %v1675 = vsel %vm1614, 1, 0
      %v1676 = vsel %vm1615, 1, 0
      %v1677 = vsel %vm1616, 1, 0
      %v1678 = vsel %vm1617, 1, 0
      %v1679 = vsel %vm1618, 1, 0
      %v1680 = vsel %vm1619, 1, 0
      %v1681 = vsel %vm1620, 1, 0
      %v1682 = vsel %vm1621, 1, 0
      %v1683 = vsel %vm1622, 1, 0
      %v1684 = vsel %vm1623, 1, 0
      %v1685 = vsel %vm1624, 1, 0
      %vm1686 = vcmp.eq.s32.totalorder %v1666, 1
      %vm1687 = vcmp.eq.s32.totalorder %v1667, 1
      %vm1688 = vcmp.eq.s32.totalorder %v1668, 1
      %vm1689 = vcmp.eq.s32.totalorder %v1669, 1
      %vm1690 = vcmp.eq.s32.totalorder %v1670, 1
      %vm1691 = vcmp.eq.s32.totalorder %v1671, 1
      %vm1692 = vcmp.eq.s32.totalorder %v1672, 1
      %vm1693 = vcmp.eq.s32.totalorder %v1673, 1
      %vm1694 = vcmp.eq.s32.totalorder %v1674, 1
      %vm1695 = vcmp.eq.s32.totalorder %v1675, 1
      %vm1696 = vcmp.eq.s32.totalorder %v1676, 1
      %vm1697 = vcmp.eq.s32.totalorder %v1677, 1
      %vm1698 = vcmp.eq.s32.totalorder %v1678, 1
      %vm1699 = vcmp.eq.s32.totalorder %v1679, 1
      %vm1700 = vcmp.eq.s32.totalorder %v1680, 1
      %vm1701 = vcmp.eq.s32.totalorder %v1681, 1
      %vm1702 = vcmp.eq.s32.totalorder %v1682, 1
      %vm1703 = vcmp.eq.s32.totalorder %v1683, 1
      %vm1704 = vcmp.eq.s32.totalorder %v1684, 1
      %vm1705 = vcmp.eq.s32.totalorder %v1685, 1
      %v1706 = vsel %vm1686, 0.0, %v1665
      %v1707 = vsel %vm1687, 0.0, %v1664
      %v1708 = vsel %vm1688, 0.0, %v1663
      %v1709 = vsel %vm1689, 0.0, %v1662
      %v1710 = vsel %vm1690, 0.0, %v1661
      %v1711 = vsel %vm1691, 0.0, %v1660
      %v1712 = vsel %vm1692, 0.0, %v1659
      %v1713 = vsel %vm1693, 0.0, %v1658
      %v1714 = vsel %vm1694, 0.0, %v1657
      %v1715 = vsel %vm1695, 0.0, %v1656
      %v1716 = vsel %vm1696, 0.0, %v1655
      %v1717 = vsel %vm1697, 0.0, %v1654
      %v1718 = vsel %vm1698, 0.0, %v1653
      %v1719 = vsel %vm1699, 0.0, %v1652
      %v1720 = vsel %vm1700, 0.0, %v1651
      %v1721 = vsel %vm1701, 0.0, %v1650
      %v1722 = vsel %vm1702, 0.0, %v1649
      %v1723 = vsel %vm1703, 0.0, %v1648
      %v1724 = vsel %vm1704, 0.0, %v1647
      %v1725 = vsel %vm1705, 0.0, %v1646
      %vm1726 = vcmp.eq.s32.totalorder %v1585, 15
      %vm1727 = vcmp.eq.s32.totalorder %v1586, 15
      %vm1728 = vcmp.eq.s32.totalorder %v1587, 15
      %vm1729 = vcmp.eq.s32.totalorder %v1588, 15
      %vm1730 = vcmp.eq.s32.totalorder %v1589, 15
      %vm1731 = vcmp.eq.s32.totalorder %v1590, 15
      %vm1732 = vcmp.eq.s32.totalorder %v1591, 15
      %vm1733 = vcmp.eq.s32.totalorder %v1592, 15
      %vm1734 = vcmp.eq.s32.totalorder %v1593, 15
      %vm1735 = vcmp.eq.s32.totalorder %v1594, 15
      %vm1736 = vcmp.eq.s32.totalorder %v1595, 15
      %vm1737 = vcmp.eq.s32.totalorder %v1596, 15
      %vm1738 = vcmp.eq.s32.totalorder %v1597, 15
      %vm1739 = vcmp.eq.s32.totalorder %v1598, 15
      %vm1740 = vcmp.eq.s32.totalorder %v1599, 15
      %vm1741 = vcmp.eq.s32.totalorder %v1600, 15
      %vm1742 = vcmp.eq.s32.totalorder %v1601, 15
      %vm1743 = vcmp.eq.s32.totalorder %v1602, 15
      %vm1744 = vcmp.eq.s32.totalorder %v1603, 15
      %vm1745 = vcmp.eq.s32.totalorder %v1604, 15
      %v1746 = vrot.slane %v1345, 1
      %v1747 = vrot.slane %v1346, 1
      %v1748 = vrot.slane %v1347, 1
      %v1749 = vrot.slane %v1348, 1
      %v1750 = vrot.slane %v1349, 1
      %v1751 = vrot.slane %v1350, 1
      %v1752 = vrot.slane %v1351, 1
      %v1753 = vrot.slane %v1352, 1
      %v1754 = vrot.slane %v1353, 1
      %v1755 = vrot.slane %v1354, 1
      %v1756 = vrot.slane %v1355, 1
      %v1757 = vrot.slane %v1356, 1
      %v1758 = vrot.slane %v1357, 1
      %v1759 = vrot.slane %v1358, 1
      %v1760 = vrot.slane %v1359, 1
      %v1761 = vrot.slane %v1360, 1
      %v1762 = vrot.slane %v1361, 1
      %v1763 = vrot.slane %v1362, 1
      %v1764 = vrot.slane %v1363, 1
      %v1765 = vrot.slane %v1364, 1
      %vm1766 = vcmp.lt.s32.totalorder %v1179, 7
      %v1767 = vsel %vm1766, %v1764, %v1765
      %v1768 = vsel %vm1766, %v1763, %v1764
      %v1769 = vsel %vm1766, %v1762, %v1763
      %v1770 = vsel %vm1766, %v1761, %v1762
      %v1771 = vsel %vm1766, %v1760, %v1761
      %v1772 = vsel %vm1766, %v1759, %v1760
      %v1773 = vsel %vm1766, %v1758, %v1759
      %v1774 = vsel %vm1766, %v1757, %v1758
      %v1775 = vsel %vm1766, %v1756, %v1757
      %v1776 = vsel %vm1766, %v1755, %v1756
      %v1777 = vsel %vm1766, %v1754, %v1755
      %v1778 = vsel %vm1766, %v1753, %v1754
      %v1779 = vsel %vm1766, %v1752, %v1753
      %v1780 = vsel %vm1766, %v1751, %v1752
      %v1781 = vsel %vm1766, %v1750, %v1751
      %v1782 = vsel %vm1766, %v1749, %v1750
      %v1783 = vsel %vm1766, %v1748, %v1749
      %v1784 = vsel %vm1766, %v1747, %v1748
      %v1785 = vsel %vm1766, %v1746, %v1747
      %v1786 = vsel %vm1766, %v1765, %v1746
      %v1787 = vsel %vm1726, 1, 0
      %v1788 = vsel %vm1727, 1, 0
      %v1789 = vsel %vm1728, 1, 0
      %v1790 = vsel %vm1729, 1, 0
      %v1791 = vsel %vm1730, 1, 0
      %v1792 = vsel %vm1731, 1, 0
      %v1793 = vsel %vm1732, 1, 0
      %v1794 = vsel %vm1733, 1, 0
      %v1795 = vsel %vm1734, 1, 0
      %v1796 = vsel %vm1735, 1, 0
      %v1797 = vsel %vm1736, 1, 0
      %v1798 = vsel %vm1737, 1, 0
      %v1799 = vsel %vm1738, 1, 0
      %v1800 = vsel %vm1739, 1, 0
      %v1801 = vsel %vm1740, 1, 0
      %v1802 = vsel %vm1741, 1, 0
      %v1803 = vsel %vm1742, 1, 0
      %v1804 = vsel %vm1743, 1, 0
      %v1805 = vsel %vm1744, 1, 0
      %v1806 = vsel %vm1745, 1, 0
      %vm1807 = vcmp.eq.s32.totalorder %v1787, 1
      %vm1808 = vcmp.eq.s32.totalorder %v1788, 1
      %vm1809 = vcmp.eq.s32.totalorder %v1789, 1
      %vm1810 = vcmp.eq.s32.totalorder %v1790, 1
      %vm1811 = vcmp.eq.s32.totalorder %v1791, 1
      %vm1812 = vcmp.eq.s32.totalorder %v1792, 1
      %vm1813 = vcmp.eq.s32.totalorder %v1793, 1
      %vm1814 = vcmp.eq.s32.totalorder %v1794, 1
      %vm1815 = vcmp.eq.s32.totalorder %v1795, 1
      %vm1816 = vcmp.eq.s32.totalorder %v1796, 1
      %vm1817 = vcmp.eq.s32.totalorder %v1797, 1
      %vm1818 = vcmp.eq.s32.totalorder %v1798, 1
      %vm1819 = vcmp.eq.s32.totalorder %v1799, 1
      %vm1820 = vcmp.eq.s32.totalorder %v1800, 1
      %vm1821 = vcmp.eq.s32.totalorder %v1801, 1
      %vm1822 = vcmp.eq.s32.totalorder %v1802, 1
      %vm1823 = vcmp.eq.s32.totalorder %v1803, 1
      %vm1824 = vcmp.eq.s32.totalorder %v1804, 1
      %vm1825 = vcmp.eq.s32.totalorder %v1805, 1
      %vm1826 = vcmp.eq.s32.totalorder %v1806, 1
      %v1827 = vsel %vm1807, 0.0, %v1785
      %v1828 = vsel %vm1808, 0.0, %v1784
      %v1829 = vsel %vm1809, 0.0, %v1783
      %v1830 = vsel %vm1810, 0.0, %v1782
      %v1831 = vsel %vm1811, 0.0, %v1781
      %v1832 = vsel %vm1812, 0.0, %v1780
      %v1833 = vsel %vm1813, 0.0, %v1779
      %v1834 = vsel %vm1814, 0.0, %v1778
      %v1835 = vsel %vm1815, 0.0, %v1777
      %v1836 = vsel %vm1816, 0.0, %v1776
      %v1837 = vsel %vm1817, 0.0, %v1775
      %v1838 = vsel %vm1818, 0.0, %v1774
      %v1839 = vsel %vm1819, 0.0, %v1773
      %v1840 = vsel %vm1820, 0.0, %v1772
      %v1841 = vsel %vm1821, 0.0, %v1771
      %v1842 = vsel %vm1822, 0.0, %v1770
      %v1843 = vsel %vm1823, 0.0, %v1769
      %v1844 = vsel %vm1824, 0.0, %v1768
      %v1845 = vsel %vm1825, 0.0, %v1767
      %v1846 = vsel %vm1826, 0.0, %v1786
      %v1847 = vlaneseq
      %v1848 = vshrl.u32 %v1847, 7
      %v1849 = vsub.s32 0, %v1848
      %v1850 = vrot.slane %v584, %v1849
      %v1851 = vmul.f32 %v1706, %v1850
      %v1852 = vmul.f32 %v1707, %v1850
      %v1853 = vmul.f32 %v1708, %v1850
      %v1854 = vmul.f32 %v1709, %v1850
      %v1855 = vmul.f32 %v1710, %v1850
      %v1856 = vmul.f32 %v1711, %v1850
      %v1857 = vmul.f32 %v1712, %v1850
      %v1858 = vmul.f32 %v1713, %v1850
      %v1859 = vmul.f32 %v1714, %v1850
      %v1860 = vmul.f32 %v1715, %v1850
      %v1861 = vmul.f32 %v1716, %v1850
      %v1862 = vmul.f32 %v1717, %v1850
      %v1863 = vmul.f32 %v1718, %v1850
      %v1864 = vmul.f32 %v1719, %v1850
      %v1865 = vmul.f32 %v1720, %v1850
      %v1866 = vmul.f32 %v1721, %v1850
      %v1867 = vadd.f32 %v1851, 0.0
      %v1868 = vadd.f32 %v1852, 0.0
      %v1869 = vadd.f32 %v1853, 0.0
      %v1870 = vadd.f32 %v1854, 0.0
      %v1871 = vadd.f32 %v1855, 0.0
      %v1872 = vadd.f32 %v1856, 0.0
      %v1873 = vadd.f32 %v1857, 0.0
      %v1874 = vadd.f32 %v1858, 0.0
      %v1875 = vadd.f32 %v1859, 0.0
      %v1876 = vadd.f32 %v1860, 0.0
      %v1877 = vadd.f32 %v1861, 0.0
      %v1878 = vadd.f32 %v1862, 0.0
      %v1879 = vadd.f32 %v1863, 0.0
      %v1880 = vadd.f32 %v1864, 0.0
      %v1881 = vadd.f32 %v1865, 0.0
      %v1882 = vadd.f32 %v1866, 0.0
      %v1883 = vlaneseq
      %v1884 = vshrl.u32 %v1883, 7
      %v1885 = vsub.s32 1, %v1884
      %v1886 = vrot.slane %v584, %v1885
      %v1887 = vmul.f32 %v1345, %v1886
      %v1888 = vmul.f32 %v1346, %v1886
      %v1889 = vmul.f32 %v1347, %v1886
      %v1890 = vmul.f32 %v1348, %v1886
      %v1891 = vmul.f32 %v1349, %v1886
      %v1892 = vmul.f32 %v1350, %v1886
      %v1893 = vmul.f32 %v1351, %v1886
      %v1894 = vmul.f32 %v1352, %v1886
      %v1895 = vmul.f32 %v1353, %v1886
      %v1896 = vmul.f32 %v1354, %v1886
      %v1897 = vmul.f32 %v1355, %v1886
      %v1898 = vmul.f32 %v1356, %v1886
      %v1899 = vmul.f32 %v1357, %v1886
      %v1900 = vmul.f32 %v1358, %v1886
      %v1901 = vmul.f32 %v1359, %v1886
      %v1902 = vmul.f32 %v1360, %v1886
      %v1903 = vadd.f32 %v1867, %v1887
      %v1904 = vadd.f32 %v1868, %v1888
      %v1905 = vadd.f32 %v1869, %v1889
      %v1906 = vadd.f32 %v1870, %v1890
      %v1907 = vadd.f32 %v1871, %v1891
      %v1908 = vadd.f32 %v1872, %v1892
      %v1909 = vadd.f32 %v1873, %v1893
      %v1910 = vadd.f32 %v1874, %v1894
      %v1911 = vadd.f32 %v1875, %v1895
      %v1912 = vadd.f32 %v1876, %v1896
      %v1913 = vadd.f32 %v1877, %v1897
      %v1914 = vadd.f32 %v1878, %v1898
      %v1915 = vadd.f32 %v1879, %v1899
      %v1916 = vadd.f32 %v1880, %v1900
      %v1917 = vadd.f32 %v1881, %v1901
      %v1918 = vadd.f32 %v1882, %v1902
      %v1919 = vlaneseq
      %v1920 = vshrl.u32 %v1919, 7
      %v1921 = vsub.s32 2, %v1920
      %v1922 = vrot.slane %v584, %v1921
      %v1923 = vmul.f32 %v1827, %v1922
      %v1924 = vmul.f32 %v1828, %v1922
      %v1925 = vmul.f32 %v1829, %v1922
      %v1926 = vmul.f32 %v1830, %v1922
      %v1927 = vmul.f32 %v1831, %v1922
      %v1928 = vmul.f32 %v1832, %v1922
      %v1929 = vmul.f32 %v1833, %v1922
      %v1930 = vmul.f32 %v1834, %v1922
      %v1931 = vmul.f32 %v1835, %v1922
      %v1932 = vmul.f32 %v1836, %v1922
      %v1933 = vmul.f32 %v1837, %v1922
      %v1934 = vmul.f32 %v1838, %v1922
      %v1935 = vmul.f32 %v1839, %v1922
      %v1936 = vmul.f32 %v1840, %v1922
      %v1937 = vmul.f32 %v1841, %v1922
      %v1938 = vmul.f32 %v1842, %v1922
      %v1939 = vadd.f32 %v1903, %v1923
      %v1940 = vadd.f32 %v1904, %v1924
      %v1941 = vadd.f32 %v1905, %v1925
      %v1942 = vadd.f32 %v1906, %v1926
      %v1943 = vadd.f32 %v1907, %v1927
      %v1944 = vadd.f32 %v1908, %v1928
      %v1945 = vadd.f32 %v1909, %v1929
      %v1946 = vadd.f32 %v1910, %v1930
      %v1947 = vadd.f32 %v1911, %v1931
      %v1948 = vadd.f32 %v1912, %v1932
      %v1949 = vadd.f32 %v1913, %v1933
      %v1950 = vadd.f32 %v1914, %v1934
      %v1951 = vadd.f32 %v1915, %v1935
      %v1952 = vadd.f32 %v1916, %v1936
      %v1953 = vadd.f32 %v1917, %v1937
      %v1954 = vadd.f32 %v1918, %v1938
      %v1955 = vlaneseq
      %v1956 = vshrl.u32 %v1955, 7
      %v1957 = vsub.s32 3, %v1956
      %v1958 = vrot.slane %v584, %v1957
      %v1959 = vmul.f32 %v1708, %v1958
      %v1960 = vmul.f32 %v1709, %v1958
      %v1961 = vmul.f32 %v1710, %v1958
      %v1962 = vmul.f32 %v1711, %v1958
      %v1963 = vmul.f32 %v1712, %v1958
      %v1964 = vmul.f32 %v1713, %v1958
      %v1965 = vmul.f32 %v1714, %v1958
      %v1966 = vmul.f32 %v1715, %v1958
      %v1967 = vmul.f32 %v1716, %v1958
      %v1968 = vmul.f32 %v1717, %v1958
      %v1969 = vmul.f32 %v1718, %v1958
      %v1970 = vmul.f32 %v1719, %v1958
      %v1971 = vmul.f32 %v1720, %v1958
      %v1972 = vmul.f32 %v1721, %v1958
      %v1973 = vmul.f32 %v1722, %v1958
      %v1974 = vmul.f32 %v1723, %v1958
      %v1975 = vadd.f32 %v1939, %v1959
      %v1976 = vadd.f32 %v1940, %v1960
      %v1977 = vadd.f32 %v1941, %v1961
      %v1978 = vadd.f32 %v1942, %v1962
      %v1979 = vadd.f32 %v1943, %v1963
      %v1980 = vadd.f32 %v1944, %v1964
      %v1981 = vadd.f32 %v1945, %v1965
      %v1982 = vadd.f32 %v1946, %v1966
      %v1983 = vadd.f32 %v1947, %v1967
      %v1984 = vadd.f32 %v1948, %v1968
      %v1985 = vadd.f32 %v1949, %v1969
      %v1986 = vadd.f32 %v1950, %v1970
      %v1987 = vadd.f32 %v1951, %v1971
      %v1988 = vadd.f32 %v1952, %v1972
      %v1989 = vadd.f32 %v1953, %v1973
      %v1990 = vadd.f32 %v1954, %v1974
      %v1991 = vlaneseq
      %v1992 = vshrl.u32 %v1991, 7
      %v1993 = vsub.s32 4, %v1992
      %v1994 = vrot.slane %v584, %v1993
      %v1995 = vmul.f32 %v1347, %v1994
      %v1996 = vmul.f32 %v1348, %v1994
      %v1997 = vmul.f32 %v1349, %v1994
      %v1998 = vmul.f32 %v1350, %v1994
      %v1999 = vmul.f32 %v1351, %v1994
      %v2000 = vmul.f32 %v1352, %v1994
      %v2001 = vmul.f32 %v1353, %v1994
      %v2002 = vmul.f32 %v1354, %v1994
      %v2003 = vmul.f32 %v1355, %v1994
      %v2004 = vmul.f32 %v1356, %v1994
      %v2005 = vmul.f32 %v1357, %v1994
      %v2006 = vmul.f32 %v1358, %v1994
      %v2007 = vmul.f32 %v1359, %v1994
      %v2008 = vmul.f32 %v1360, %v1994
      %v2009 = vmul.f32 %v1361, %v1994
      %v2010 = vmul.f32 %v1362, %v1994
      %v2011 = vadd.f32 %v1975, %v1995
      %v2012 = vadd.f32 %v1976, %v1996
      %v2013 = vadd.f32 %v1977, %v1997
      %v2014 = vadd.f32 %v1978, %v1998
      %v2015 = vadd.f32 %v1979, %v1999
      %v2016 = vadd.f32 %v1980, %v2000
      %v2017 = vadd.f32 %v1981, %v2001
      %v2018 = vadd.f32 %v1982, %v2002
      %v2019 = vadd.f32 %v1983, %v2003
      %v2020 = vadd.f32 %v1984, %v2004
      %v2021 = vadd.f32 %v1985, %v2005
      %v2022 = vadd.f32 %v1986, %v2006
      %v2023 = vadd.f32 %v1987, %v2007
      %v2024 = vadd.f32 %v1988, %v2008
      %v2025 = vadd.f32 %v1989, %v2009
      %v2026 = vadd.f32 %v1990, %v2010
      %v2027 = vlaneseq
      %v2028 = vshrl.u32 %v2027, 7
      %v2029 = vsub.s32 5, %v2028
      %v2030 = vrot.slane %v584, %v2029
      %v2031 = vmul.f32 %v1829, %v2030
      %v2032 = vmul.f32 %v1830, %v2030
      %v2033 = vmul.f32 %v1831, %v2030
      %v2034 = vmul.f32 %v1832, %v2030
      %v2035 = vmul.f32 %v1833, %v2030
      %v2036 = vmul.f32 %v1834, %v2030
      %v2037 = vmul.f32 %v1835, %v2030
      %v2038 = vmul.f32 %v1836, %v2030
      %v2039 = vmul.f32 %v1837, %v2030
      %v2040 = vmul.f32 %v1838, %v2030
      %v2041 = vmul.f32 %v1839, %v2030
      %v2042 = vmul.f32 %v1840, %v2030
      %v2043 = vmul.f32 %v1841, %v2030
      %v2044 = vmul.f32 %v1842, %v2030
      %v2045 = vmul.f32 %v1843, %v2030
      %v2046 = vmul.f32 %v1844, %v2030
      %v2047 = vadd.f32 %v2011, %v2031
      %v2048 = vadd.f32 %v2012, %v2032
      %v2049 = vadd.f32 %v2013, %v2033
      %v2050 = vadd.f32 %v2014, %v2034
      %v2051 = vadd.f32 %v2015, %v2035
      %v2052 = vadd.f32 %v2016, %v2036
      %v2053 = vadd.f32 %v2017, %v2037
      %v2054 = vadd.f32 %v2018, %v2038
      %v2055 = vadd.f32 %v2019, %v2039
      %v2056 = vadd.f32 %v2020, %v2040
      %v2057 = vadd.f32 %v2021, %v2041
      %v2058 = vadd.f32 %v2022, %v2042
      %v2059 = vadd.f32 %v2023, %v2043
      %v2060 = vadd.f32 %v2024, %v2044
      %v2061 = vadd.f32 %v2025, %v2045
      %v2062 = vadd.f32 %v2026, %v2046
      %v2063 = vlaneseq
      %v2064 = vshrl.u32 %v2063, 7
      %v2065 = vsub.s32 6, %v2064
      %v2066 = vrot.slane %v584, %v2065
      %v2067 = vmul.f32 %v1710, %v2066
      %v2068 = vmul.f32 %v1711, %v2066
      %v2069 = vmul.f32 %v1712, %v2066
      %v2070 = vmul.f32 %v1713, %v2066
      %v2071 = vmul.f32 %v1714, %v2066
      %v2072 = vmul.f32 %v1715, %v2066
      %v2073 = vmul.f32 %v1716, %v2066
      %v2074 = vmul.f32 %v1717, %v2066
      %v2075 = vmul.f32 %v1718, %v2066
      %v2076 = vmul.f32 %v1719, %v2066
      %v2077 = vmul.f32 %v1720, %v2066
      %v2078 = vmul.f32 %v1721, %v2066
      %v2079 = vmul.f32 %v1722, %v2066
      %v2080 = vmul.f32 %v1723, %v2066
      %v2081 = vmul.f32 %v1724, %v2066
      %v2082 = vmul.f32 %v1725, %v2066
      %v2083 = vadd.f32 %v2047, %v2067
      %v2084 = vadd.f32 %v2048, %v2068
      %v2085 = vadd.f32 %v2049, %v2069
      %v2086 = vadd.f32 %v2050, %v2070
      %v2087 = vadd.f32 %v2051, %v2071
      %v2088 = vadd.f32 %v2052, %v2072
      %v2089 = vadd.f32 %v2053, %v2073
      %v2090 = vadd.f32 %v2054, %v2074
      %v2091 = vadd.f32 %v2055, %v2075
      %v2092 = vadd.f32 %v2056, %v2076
      %v2093 = vadd.f32 %v2057, %v2077
      %v2094 = vadd.f32 %v2058, %v2078
      %v2095 = vadd.f32 %v2059, %v2079
      %v2096 = vadd.f32 %v2060, %v2080
      %v2097 = vadd.f32 %v2061, %v2081
      %v2098 = vadd.f32 %v2062, %v2082
      %v2099 = vlaneseq
      %v2100 = vshrl.u32 %v2099, 7
      %v2101 = vsub.s32 7, %v2100
      %v2102 = vrot.slane %v584, %v2101
      %v2103 = vmul.f32 %v1349, %v2102
      %v2104 = vmul.f32 %v1350, %v2102
      %v2105 = vmul.f32 %v1351, %v2102
      %v2106 = vmul.f32 %v1352, %v2102
      %v2107 = vmul.f32 %v1353, %v2102
      %v2108 = vmul.f32 %v1354, %v2102
      %v2109 = vmul.f32 %v1355, %v2102
      %v2110 = vmul.f32 %v1356, %v2102
      %v2111 = vmul.f32 %v1357, %v2102
      %v2112 = vmul.f32 %v1358, %v2102
      %v2113 = vmul.f32 %v1359, %v2102
      %v2114 = vmul.f32 %v1360, %v2102
      %v2115 = vmul.f32 %v1361, %v2102
      %v2116 = vmul.f32 %v1362, %v2102
      %v2117 = vmul.f32 %v1363, %v2102
      %v2118 = vmul.f32 %v1364, %v2102
      %v2119 = vadd.f32 %v2083, %v2103
      %v2120 = vadd.f32 %v2084, %v2104
      %v2121 = vadd.f32 %v2085, %v2105
      %v2122 = vadd.f32 %v2086, %v2106
      %v2123 = vadd.f32 %v2087, %v2107
      %v2124 = vadd.f32 %v2088, %v2108
      %v2125 = vadd.f32 %v2089, %v2109
      %v2126 = vadd.f32 %v2090, %v2110
      %v2127 = vadd.f32 %v2091, %v2111
      %v2128 = vadd.f32 %v2092, %v2112
      %v2129 = vadd.f32 %v2093, %v2113
      %v2130 = vadd.f32 %v2094, %v2114
      %v2131 = vadd.f32 %v2095, %v2115
      %v2132 = vadd.f32 %v2096, %v2116
      %v2133 = vadd.f32 %v2097, %v2117
      %v2134 = vadd.f32 %v2098, %v2118
      %v2135 = vlaneseq
      %v2136 = vshrl.u32 %v2135, 7
      %v2137 = vsub.s32 0, %v2136
      %v2138 = vrot.slane %v585, %v2137
      %v2139 = vmul.f32 %v1831, %v2138
      %v2140 = vmul.f32 %v1832, %v2138
      %v2141 = vmul.f32 %v1833, %v2138
      %v2142 = vmul.f32 %v1834, %v2138
      %v2143 = vmul.f32 %v1835, %v2138
      %v2144 = vmul.f32 %v1836, %v2138
      %v2145 = vmul.f32 %v1837, %v2138
      %v2146 = vmul.f32 %v1838, %v2138
      %v2147 = vmul.f32 %v1839, %v2138
      %v2148 = vmul.f32 %v1840, %v2138
      %v2149 = vmul.f32 %v1841, %v2138
      %v2150 = vmul.f32 %v1842, %v2138
      %v2151 = vmul.f32 %v1843, %v2138
      %v2152 = vmul.f32 %v1844, %v2138
      %v2153 = vmul.f32 %v1845, %v2138
      %v2154 = vmul.f32 %v1846, %v2138
      %v2155 = vadd.f32 %v2119, %v2139
      %v2156 = vadd.f32 %v2120, %v2140
      %v2157 = vadd.f32 %v2121, %v2141
      %v2158 = vadd.f32 %v2122, %v2142
      %v2159 = vadd.f32 %v2123, %v2143
      %v2160 = vadd.f32 %v2124, %v2144
      %v2161 = vadd.f32 %v2125, %v2145
      %v2162 = vadd.f32 %v2126, %v2146
      %v2163 = vadd.f32 %v2127, %v2147
      %v2164 = vadd.f32 %v2128, %v2148
      %v2165 = vadd.f32 %v2129, %v2149
      %v2166 = vadd.f32 %v2130, %v2150
      %v2167 = vadd.f32 %v2131, %v2151
      %v2168 = vadd.f32 %v2132, %v2152
      %v2169 = vadd.f32 %v2133, %v2153
      %v2170 = vadd.f32 %v2134, %v2154
      %v2171 = vlaneseq
      %v2172 = vshrl.u32 %v2171, 7
      %v2173 = vsub.s32 1, %v2172
      %v2174 = vrot.slane %v562, %v2173
      %v2175 = vadd.f32 %v2155, %v2174
      %v2176 = vadd.f32 %v2156, %v2174
      %v2177 = vadd.f32 %v2157, %v2174
      %v2178 = vadd.f32 %v2158, %v2174
      %v2179 = vadd.f32 %v2159, %v2174
      %v2180 = vadd.f32 %v2160, %v2174
      %v2181 = vadd.f32 %v2161, %v2174
      %v2182 = vadd.f32 %v2162, %v2174
      %v2183 = vadd.f32 %v2163, %v2174
      %v2184 = vadd.f32 %v2164, %v2174
      %v2185 = vadd.f32 %v2165, %v2174
      %v2186 = vadd.f32 %v2166, %v2174
      %v2187 = vadd.f32 %v2167, %v2174
      %v2188 = vadd.f32 %v2168, %v2174
      %v2189 = vadd.f32 %v2169, %v2174
      %v2190 = vadd.f32 %v2170, %v2174
      %2207 = vrot.lane.b32.xlu0 %v2175, 124
      %v2208 = vpop.permute.xlu0 %2207
      %2209 = vrot.lane.b32.xlu0 %v2176, 124
      %v2210 = vpop.permute.xlu0 %2209
      %2211 = vrot.lane.b32.xlu0 %v2177, 124
      %v2212 = vpop.permute.xlu0 %2211
      %2213 = vrot.lane.b32.xlu0 %v2178, 124
      %v2214 = vpop.permute.xlu0 %2213
      %2215 = vrot.lane.b32.xlu0 %v2179, 124
      %v2216 = vpop.permute.xlu0 %2215
      %2217 = vrot.lane.b32.xlu0 %v2180, 124
      %v2218 = vpop.permute.xlu0 %2217
      %2219 = vrot.lane.b32.xlu0 %v2181, 124
      %v2220 = vpop.permute.xlu0 %2219
      %2221 = vrot.lane.b32.xlu0 %v2182, 124
      %v2222 = vpop.permute.xlu0 %2221
      %2223 = vrot.lane.b32.xlu0 %v2183, 124
      %v2224 = vpop.permute.xlu0 %2223
      %2225 = vrot.lane.b32.xlu0 %v2184, 124
      %v2226 = vpop.permute.xlu0 %2225
      %2227 = vrot.lane.b32.xlu0 %v2185, 124
      %v2228 = vpop.permute.xlu0 %2227
      %2229 = vrot.lane.b32.xlu0 %v2186, 124
      %v2230 = vpop.permute.xlu0 %2229
      %2231 = vrot.lane.b32.xlu0 %v2187, 124
      %v2232 = vpop.permute.xlu0 %2231
      %2233 = vrot.lane.b32.xlu0 %v2188, 124
      %v2234 = vpop.permute.xlu0 %2233
      %2235 = vrot.lane.b32.xlu0 %v2189, 124
      %v2236 = vpop.permute.xlu0 %2235
      %2237 = vrot.lane.b32.xlu0 %v2190, 124
      %v2238 = vpop.permute.xlu0 %2237
      %v2255 = vmul.f32 %v2175, %v2208
      %v2256 = vmul.f32 %v2176, %v2210
      %v2257 = vmul.f32 %v2177, %v2212
      %v2258 = vmul.f32 %v2178, %v2214
      %v2259 = vmul.f32 %v2179, %v2216
      %v2260 = vmul.f32 %v2180, %v2218
      %v2261 = vmul.f32 %v2181, %v2220
      %v2262 = vmul.f32 %v2182, %v2222
      %v2263 = vmul.f32 %v2183, %v2224
      %v2264 = vmul.f32 %v2184, %v2226
      %v2265 = vmul.f32 %v2185, %v2228
      %v2266 = vmul.f32 %v2186, %v2230
      %v2267 = vmul.f32 %v2187, %v2232
      %v2268 = vmul.f32 %v2188, %v2234
      %v2269 = vmul.f32 %v2189, %v2236
      %v2270 = vmul.f32 %v2190, %v2238
      %v2271 = vld [vmem:[%s547] sm:$0x1]
      %v2273 = vlaneseq
      %v2274 = vshrl.u32 %v2273, 7
      %v2275 = vsub.s32 0, %v2274
      %v2276 = vrot.slane %v2271, %v2275
      %v2278 = vmul.f32 %v2255, %v2276
      %v2279 = vmul.f32 %v2256, %v2276
      %v2280 = vmul.f32 %v2257, %v2276
      %v2281 = vmul.f32 %v2258, %v2276
      %v2282 = vmul.f32 %v2259, %v2276
      %v2283 = vmul.f32 %v2260, %v2276
      %v2284 = vmul.f32 %v2261, %v2276
      %v2285 = vmul.f32 %v2262, %v2276
      %v2286 = vmul.f32 %v2263, %v2276
      %v2287 = vmul.f32 %v2264, %v2276
      %v2288 = vmul.f32 %v2265, %v2276
      %v2289 = vmul.f32 %v2266, %v2276
      %v2290 = vmul.f32 %v2267, %v2276
      %v2291 = vmul.f32 %v2268, %v2276
      %v2292 = vmul.f32 %v2269, %v2276
      %v2293 = vmul.f32 %v2270, %v2276
      %v2294 = vld [vmem:[%s9] sm:$0xf]
      %v2295 = vlaneseq
      %v2296 = vshrl.u32 %v2295, 7
      %v2297 = vsub.s32 4, %v2296
      %v2298 = vrot.slane %v561, %v2297
      %v2300 = vsel %vm586, %v2278, 0
      %v2303 = vsel %vm586, %v2279, 0
      %v2306 = vsel %vm586, %v2280, 0
      %v2309 = vsel %vm586, %v2281, 0
      %v2312 = vsel %vm586, %v2282, 0
      %v2315 = vsel %vm586, %v2283, 0
      %v2318 = vsel %vm586, %v2284, 0
      %v2321 = vsel %vm586, %v2285, 0
      %v2324 = vsel %vm586, %v2286, 0
      %v2327 = vsel %vm586, %v2287, 0
      %v2330 = vsel %vm586, %v2288, 0
      %v2333 = vsel %vm586, %v2289, 0
      %v2336 = vsel %vm586, %v2290, 0
      %v2339 = vsel %vm586, %v2291, 0
      %v2342 = vsel %vm586, %v2292, 0
      %v2345 = vsel %vm586, %v2293, 0
      %v2348 = vsel %vm1009, %v2294, 0
      %2350 = vmatprep.subr.mxu0 0.0
      %2351 = vmatpush1.msra.mxu0 0.0
      %2352 = vmatprep.subr.mxu0 0.0
      %2353 = vmatpush1.msra.mxu0 0.0
      %2354 = vmatprep.subr.mxu0 0.0
      %2355 = vmatpush1.msra.mxu0 0.0
      %2356 = vmatprep.subr.mxu0 0.0
      %2357 = vmatpush1.msra.mxu0 0.0
      %2358 = vmatprep.subr.mxu0 0.0
      %2359 = vmatpush1.msra.mxu0 0.0
      %2360 = vmatprep.subr.mxu0 0.0
      %2361 = vmatpush1.msra.mxu0 0.0
      %2362 = vmatprep.subr.mxu0 0.0
      %2363 = vmatpush1.msra.mxu0 0.0
      %2364 = vmatprep.subr.mxu0 0.0
      %2365 = vmatpush1.msra.mxu0 0.0
      %2366 = vmatprep.subr.mxu0 0.0
      %2367 = vmatpush1.msra.mxu0 0.0
      %2368 = vmatprep.subr.mxu0 0.0
      %2369 = vmatpush1.msra.mxu0 0.0
      %2370 = vmatprep.subr.mxu0 0.0
      %2371 = vmatpush1.msra.mxu0 0.0
      %2372 = vmatprep.subr.mxu0 0.0
      %2373 = vmatpush1.msra.mxu0 0.0
      %2374 = vmatprep.subr.mxu0 0.0
      %2375 = vmatpush1.msra.mxu0 0.0
      %2376 = vmatprep.subr.mxu0 0.0
      %2377 = vmatpush1.msra.mxu0 0.0
      %2378 = vmatprep.subr.mxu0 0.0
      %2379 = vmatpush1.msra.mxu0 0.0
      %2380 = vmatprep.subr.mxu0 0.0
      %2381 = vmatpush1.msra.mxu0 %v2348
      %2382 = vmatprep.subr.mxu0 0.0
      %2383 = vmatpush2.msra.mxu0 0.0
      %2384 = vmatprep.subr.mxu0 0.0
      %2385 = vmatpush2.msra.mxu0 0.0
      %2386 = vmatprep.subr.mxu0 0.0
      %2387 = vmatpush2.msra.mxu0 0.0
      %2388 = vmatprep.subr.mxu0 0.0
      %2389 = vmatpush2.msra.mxu0 0.0
      %2390 = vmatprep.subr.mxu0 0.0
      %2391 = vmatpush2.msra.mxu0 0.0
      %2392 = vmatprep.subr.mxu0 0.0
      %2393 = vmatpush2.msra.mxu0 0.0
      %2394 = vmatprep.subr.mxu0 0.0
      %2395 = vmatpush2.msra.mxu0 0.0
      %2396 = vmatprep.subr.mxu0 0.0
      %2397 = vmatpush2.msra.mxu0 0.0
      %2398 = vmatprep.subr.mxu0 0.0
      %2399 = vmatpush2.msra.mxu0 0.0
      %2400 = vmatprep.subr.mxu0 0.0
      %2401 = vmatpush2.msra.mxu0 0.0
      %2402 = vmatprep.subr.mxu0 0.0
      %2403 = vmatpush2.msra.mxu0 0.0
      %2404 = vmatprep.subr.mxu0 0.0
      %2405 = vmatpush2.msra.mxu0 0.0
      %2406 = vmatprep.subr.mxu0 0.0
      %2407 = vmatpush2.msra.mxu0 0.0
      %2408 = vmatprep.subr.mxu0 0.0
      %2409 = vmatpush2.msra.mxu0 0.0
      %2410 = vmatprep.subr.mxu0 0.0
      %2411 = vmatpush2.msra.mxu0 0.0
      %2412 = vmatprep.subr.mxu0 0.0
      %2413 = vmatpush2.msra.mxu0 0.0
      %2414 = vmatprep.mubr.f32.mxu0 0.0
      %2415 = vmatmul.mubr.f32.gmra.mxu0 %v2300
      %v2416 = vpop.f32.mrf.mxu0
      %v2417 = vadd.f32 %v2298, %v2416
      %v2418 = vpop.f32.mrf.mxu0
      %2419 = vmatprep.mubr.f32.mxu0 0.0
      %2420 = vmatmul.mubr.f32.gmra.mxu0 %v2303
      %v2421 = vpop.f32.mrf.mxu0
      %v2422 = vadd.f32 %v2298, %v2421
      %v2423 = vpop.f32.mrf.mxu0
      %2424 = vmatprep.mubr.f32.mxu0 0.0
      %2425 = vmatmul.mubr.f32.gmra.mxu0 %v2306
      %v2426 = vpop.f32.mrf.mxu0
      %v2427 = vadd.f32 %v2298, %v2426
      %v2428 = vpop.f32.mrf.mxu0
      %2429 = vmatprep.mubr.f32.mxu0 0.0
      %2430 = vmatmul.mubr.f32.gmra.mxu0 %v2309
      %v2431 = vpop.f32.mrf.mxu0
      %v2432 = vadd.f32 %v2298, %v2431
      %v2433 = vpop.f32.mrf.mxu0
      %2434 = vmatprep.mubr.f32.mxu0 0.0
      %2435 = vmatmul.mubr.f32.gmra.mxu0 %v2312
      %v2436 = vpop.f32.mrf.mxu0
      %v2437 = vadd.f32 %v2298, %v2436
      %v2438 = vpop.f32.mrf.mxu0
      %2439 = vmatprep.mubr.f32.mxu0 0.0
      %2440 = vmatmul.mubr.f32.gmra.mxu0 %v2315
      %v2441 = vpop.f32.mrf.mxu0
      %v2442 = vadd.f32 %v2298, %v2441
      %v2443 = vpop.f32.mrf.mxu0
      %2444 = vmatprep.mubr.f32.mxu0 0.0
      %2445 = vmatmul.mubr.f32.gmra.mxu0 %v2318
      %v2446 = vpop.f32.mrf.mxu0
      %v2447 = vadd.f32 %v2298, %v2446
      %v2448 = vpop.f32.mrf.mxu0
      %2449 = vmatprep.mubr.f32.mxu0 0.0
      %2450 = vmatmul.mubr.f32.gmra.mxu0 %v2321
      %v2451 = vpop.f32.mrf.mxu0
      %v2452 = vadd.f32 %v2298, %v2451
      %v2453 = vpop.f32.mrf.mxu0
      %2454 = vmatprep.mubr.f32.mxu0 0.0
      %2455 = vmatmul.mubr.f32.gmra.mxu0 %v2324
      %v2456 = vpop.f32.mrf.mxu0
      %v2457 = vadd.f32 %v2298, %v2456
      %v2458 = vpop.f32.mrf.mxu0
      %2459 = vmatprep.mubr.f32.mxu0 0.0
      %2460 = vmatmul.mubr.f32.gmra.mxu0 %v2327
      %v2461 = vpop.f32.mrf.mxu0
      %v2462 = vadd.f32 %v2298, %v2461
      %v2463 = vpop.f32.mrf.mxu0
      %2464 = vmatprep.mubr.f32.mxu0 0.0
      %2465 = vmatmul.mubr.f32.gmra.mxu0 %v2330
      %v2466 = vpop.f32.mrf.mxu0
      %v2467 = vadd.f32 %v2298, %v2466
      %v2468 = vpop.f32.mrf.mxu0
      %2469 = vmatprep.mubr.f32.mxu0 0.0
      %2470 = vmatmul.mubr.f32.gmra.mxu0 %v2333
      %v2471 = vpop.f32.mrf.mxu0
      %v2472 = vadd.f32 %v2298, %v2471
      %v2473 = vpop.f32.mrf.mxu0
      %2474 = vmatprep.mubr.f32.mxu0 0.0
      %2475 = vmatmul.mubr.f32.gmra.mxu0 %v2336
      %v2476 = vpop.f32.mrf.mxu0
      %v2477 = vadd.f32 %v2298, %v2476
      %v2478 = vpop.f32.mrf.mxu0
      %2479 = vmatprep.mubr.f32.mxu0 0.0
      %2480 = vmatmul.mubr.f32.gmra.mxu0 %v2339
      %v2481 = vpop.f32.mrf.mxu0
      %v2482 = vadd.f32 %v2298, %v2481
      %v2483 = vpop.f32.mrf.mxu0
      %2484 = vmatprep.mubr.f32.mxu0 0.0
      %2485 = vmatmul.mubr.f32.gmra.mxu0 %v2342
      %v2486 = vpop.f32.mrf.mxu0
      %v2487 = vadd.f32 %v2298, %v2486
      %v2488 = vpop.f32.mrf.mxu0
      %2489 = vmatprep.mubr.f32.mxu0 0.0
      %2490 = vmatmul.mubr.f32.gmra.mxu0 %v2345
      %v2491 = vpop.f32.mrf.mxu0
      %v2492 = vadd.f32 %v2298, %v2491
      %v2493 = vpop.f32.mrf.mxu0
      %2494 = vdwg.mxu0
      %v2495 = vlaneseq
      %v2496 = vshrl.u32 %v2495, 7
      %v2497 = vsub.s32 6, %v2496
      %v2498 = vrot.slane %v561, %v2497
      %v2499 = vmul.f32 %v2417, %v2498
      %v2500 = vmul.f32 %v2422, %v2498
      %v2501 = vmul.f32 %v2427, %v2498
      %v2502 = vmul.f32 %v2432, %v2498
      %v2503 = vmul.f32 %v2437, %v2498
      %v2504 = vmul.f32 %v2442, %v2498
      %v2505 = vmul.f32 %v2447, %v2498
      %v2506 = vmul.f32 %v2452, %v2498
      %v2507 = vmul.f32 %v2457, %v2498
      %v2508 = vmul.f32 %v2462, %v2498
      %v2509 = vmul.f32 %v2467, %v2498
      %v2510 = vmul.f32 %v2472, %v2498
      %v2511 = vmul.f32 %v2477, %v2498
      %v2512 = vmul.f32 %v2482, %v2498
      %v2513 = vmul.f32 %v2487, %v2498
      %v2514 = vmul.f32 %v2492, %v2498
      %v2515 = vadd.f32 %v565, %v2499
      %v2516 = vadd.f32 %v566, %v2500
      %v2517 = vadd.f32 %v567, %v2501
      %v2518 = vadd.f32 %v568, %v2502
      %v2519 = vadd.f32 %v569, %v2503
      %v2520 = vadd.f32 %v570, %v2504
      %v2521 = vadd.f32 %v571, %v2505
      %v2522 = vadd.f32 %v572, %v2506
      %v2523 = vadd.f32 %v573, %v2507
      %v2524 = vadd.f32 %v574, %v2508
      %v2525 = vadd.f32 %v575, %v2509
      %v2526 = vadd.f32 %v576, %v2510
      %v2527 = vadd.f32 %v577, %v2511
      %v2528 = vadd.f32 %v578, %v2512
      %v2529 = vadd.f32 %v579, %v2513
      %v2530 = vadd.f32 %v580, %v2514
      %v2531 = vsel %vm586, %v2515, 0.0
      %2532 = vadd.xlane.f32.xlu0 %v2531
      %v2533 = vpop.xlane.xlu0 %2532
      %v2534 = vsel %vm586, %v2516, 0.0
      %2535 = vadd.xlane.f32.xlu0 %v2534
      %v2536 = vpop.xlane.xlu0 %2535
      %v2537 = vsel %vm586, %v2517, 0.0
      %2538 = vadd.xlane.f32.xlu0 %v2537
      %v2539 = vpop.xlane.xlu0 %2538
      %v2540 = vsel %vm586, %v2518, 0.0
      %2541 = vadd.xlane.f32.xlu0 %v2540
      %v2542 = vpop.xlane.xlu0 %2541
      %v2543 = vsel %vm586, %v2519, 0.0
      %2544 = vadd.xlane.f32.xlu0 %v2543
      %v2545 = vpop.xlane.xlu0 %2544
      %v2546 = vsel %vm586, %v2520, 0.0
      %2547 = vadd.xlane.f32.xlu0 %v2546
      %v2548 = vpop.xlane.xlu0 %2547
      %v2549 = vsel %vm586, %v2521, 0.0
      %2550 = vadd.xlane.f32.xlu0 %v2549
      %v2551 = vpop.xlane.xlu0 %2550
      %v2552 = vsel %vm586, %v2522, 0.0
      %2553 = vadd.xlane.f32.xlu0 %v2552
      %v2554 = vpop.xlane.xlu0 %2553
      %v2555 = vsel %vm586, %v2523, 0.0
      %2556 = vadd.xlane.f32.xlu0 %v2555
      %v2557 = vpop.xlane.xlu0 %2556
      %v2558 = vsel %vm586, %v2524, 0.0
      %2559 = vadd.xlane.f32.xlu0 %v2558
      %v2560 = vpop.xlane.xlu0 %2559
      %v2561 = vsel %vm586, %v2525, 0.0
      %2562 = vadd.xlane.f32.xlu0 %v2561
      %v2563 = vpop.xlane.xlu0 %2562
      %v2564 = vsel %vm586, %v2526, 0.0
      %2565 = vadd.xlane.f32.xlu0 %v2564
      %v2566 = vpop.xlane.xlu0 %2565
      %v2567 = vsel %vm586, %v2527, 0.0
      %2568 = vadd.xlane.f32.xlu0 %v2567
      %v2569 = vpop.xlane.xlu0 %2568
      %v2570 = vsel %vm586, %v2528, 0.0
      %2571 = vadd.xlane.f32.xlu0 %v2570
      %v2572 = vpop.xlane.xlu0 %2571
      %v2573 = vsel %vm586, %v2529, 0.0
      %2574 = vadd.xlane.f32.xlu0 %v2573
      %v2575 = vpop.xlane.xlu0 %2574
      %v2576 = vsel %vm586, %v2530, 0.0
      %2577 = vadd.xlane.f32.xlu0 %v2576
      %v2578 = vpop.xlane.xlu0 %2577
      %v2579 = vmul.f32 %v2533, %v647
      %v2580 = vmul.f32 %v2536, %v647
      %v2581 = vmul.f32 %v2539, %v647
      %v2582 = vmul.f32 %v2542, %v647
      %v2583 = vmul.f32 %v2545, %v647
      %v2584 = vmul.f32 %v2548, %v647
      %v2585 = vmul.f32 %v2551, %v647
      %v2586 = vmul.f32 %v2554, %v647
      %v2587 = vmul.f32 %v2557, %v647
      %v2588 = vmul.f32 %v2560, %v647
      %v2589 = vmul.f32 %v2563, %v647
      %v2590 = vmul.f32 %v2566, %v647
      %v2591 = vmul.f32 %v2569, %v647
      %v2592 = vmul.f32 %v2572, %v647
      %v2593 = vmul.f32 %v2575, %v647
      %v2594 = vmul.f32 %v2578, %v647
      %v2595 = vsub.f32 %v2515, %v2579
      %v2596 = vsub.f32 %v2516, %v2580
      %v2597 = vsub.f32 %v2517, %v2581
      %v2598 = vsub.f32 %v2518, %v2582
      %v2599 = vsub.f32 %v2519, %v2583
      %v2600 = vsub.f32 %v2520, %v2584
      %v2601 = vsub.f32 %v2521, %v2585
      %v2602 = vsub.f32 %v2522, %v2586
      %v2603 = vsub.f32 %v2523, %v2587
      %v2604 = vsub.f32 %v2524, %v2588
      %v2605 = vsub.f32 %v2525, %v2589
      %v2606 = vsub.f32 %v2526, %v2590
      %v2607 = vsub.f32 %v2527, %v2591
      %v2608 = vsub.f32 %v2528, %v2592
      %v2609 = vsub.f32 %v2529, %v2593
      %v2610 = vsub.f32 %v2530, %v2594
      %v2611 = vmul.f32 %v2595, %v2595
      %v2612 = vmul.f32 %v2596, %v2596
      %v2613 = vmul.f32 %v2597, %v2597
      %v2614 = vmul.f32 %v2598, %v2598
      %v2615 = vmul.f32 %v2599, %v2599
      %v2616 = vmul.f32 %v2600, %v2600
      %v2617 = vmul.f32 %v2601, %v2601
      %v2618 = vmul.f32 %v2602, %v2602
      %v2619 = vmul.f32 %v2603, %v2603
      %v2620 = vmul.f32 %v2604, %v2604
      %v2621 = vmul.f32 %v2605, %v2605
      %v2622 = vmul.f32 %v2606, %v2606
      %v2623 = vmul.f32 %v2607, %v2607
      %v2624 = vmul.f32 %v2608, %v2608
      %v2625 = vmul.f32 %v2609, %v2609
      %v2626 = vmul.f32 %v2610, %v2610
      %v2627 = vsel %vm586, %v2611, 0.0
      %2628 = vadd.xlane.f32.xlu0 %v2627
      %v2629 = vpop.xlane.xlu0 %2628
      %v2630 = vsel %vm586, %v2612, 0.0
      %2631 = vadd.xlane.f32.xlu0 %v2630
      %v2632 = vpop.xlane.xlu0 %2631
      %v2633 = vsel %vm586, %v2613, 0.0
      %2634 = vadd.xlane.f32.xlu0 %v2633
      %v2635 = vpop.xlane.xlu0 %2634
      %v2636 = vsel %vm586, %v2614, 0.0
      %2637 = vadd.xlane.f32.xlu0 %v2636
      %v2638 = vpop.xlane.xlu0 %2637
      %v2639 = vsel %vm586, %v2615, 0.0
      %2640 = vadd.xlane.f32.xlu0 %v2639
      %v2641 = vpop.xlane.xlu0 %2640
      %v2642 = vsel %vm586, %v2616, 0.0
      %2643 = vadd.xlane.f32.xlu0 %v2642
      %v2644 = vpop.xlane.xlu0 %2643
      %v2645 = vsel %vm586, %v2617, 0.0
      %2646 = vadd.xlane.f32.xlu0 %v2645
      %v2647 = vpop.xlane.xlu0 %2646
      %v2648 = vsel %vm586, %v2618, 0.0
      %2649 = vadd.xlane.f32.xlu0 %v2648
      %v2650 = vpop.xlane.xlu0 %2649
      %v2651 = vsel %vm586, %v2619, 0.0
      %2652 = vadd.xlane.f32.xlu0 %v2651
      %v2653 = vpop.xlane.xlu0 %2652
      %v2654 = vsel %vm586, %v2620, 0.0
      %2655 = vadd.xlane.f32.xlu0 %v2654
      %v2656 = vpop.xlane.xlu0 %2655
      %v2657 = vsel %vm586, %v2621, 0.0
      %2658 = vadd.xlane.f32.xlu0 %v2657
      %v2659 = vpop.xlane.xlu0 %2658
      %v2660 = vsel %vm586, %v2622, 0.0
      %2661 = vadd.xlane.f32.xlu0 %v2660
      %v2662 = vpop.xlane.xlu0 %2661
      %v2663 = vsel %vm586, %v2623, 0.0
      %2664 = vadd.xlane.f32.xlu0 %v2663
      %v2665 = vpop.xlane.xlu0 %2664
      %v2666 = vsel %vm586, %v2624, 0.0
      %2667 = vadd.xlane.f32.xlu0 %v2666
      %v2668 = vpop.xlane.xlu0 %2667
      %v2669 = vsel %vm586, %v2625, 0.0
      %2670 = vadd.xlane.f32.xlu0 %v2669
      %v2671 = vpop.xlane.xlu0 %2670
      %v2672 = vsel %vm586, %v2626, 0.0
      %2673 = vadd.xlane.f32.xlu0 %v2672
      %v2674 = vpop.xlane.xlu0 %2673
      %v2675 = vmul.f32 %v2629, %v647
      %v2676 = vmul.f32 %v2632, %v647
      %v2677 = vmul.f32 %v2635, %v647
      %v2678 = vmul.f32 %v2638, %v647
      %v2679 = vmul.f32 %v2641, %v647
      %v2680 = vmul.f32 %v2644, %v647
      %v2681 = vmul.f32 %v2647, %v647
      %v2682 = vmul.f32 %v2650, %v647
      %v2683 = vmul.f32 %v2653, %v647
      %v2684 = vmul.f32 %v2656, %v647
      %v2685 = vmul.f32 %v2659, %v647
      %v2686 = vmul.f32 %v2662, %v647
      %v2687 = vmul.f32 %v2665, %v647
      %v2688 = vmul.f32 %v2668, %v647
      %v2689 = vmul.f32 %v2671, %v647
      %v2690 = vmul.f32 %v2674, %v647
      %v2691 = vadd.f32 %v2675, 1e-05
      %v2692 = vadd.f32 %v2676, 1e-05
      %v2693 = vadd.f32 %v2677, 1e-05
      %v2694 = vadd.f32 %v2678, 1e-05
      %v2695 = vadd.f32 %v2679, 1e-05
      %v2696 = vadd.f32 %v2680, 1e-05
      %v2697 = vadd.f32 %v2681, 1e-05
      %v2698 = vadd.f32 %v2682, 1e-05
      %v2699 = vadd.f32 %v2683, 1e-05
      %v2700 = vadd.f32 %v2684, 1e-05
      %v2701 = vadd.f32 %v2685, 1e-05
      %v2702 = vadd.f32 %v2686, 1e-05
      %v2703 = vadd.f32 %v2687, 1e-05
      %v2704 = vadd.f32 %v2688, 1e-05
      %v2705 = vadd.f32 %v2689, 1e-05
      %v2706 = vadd.f32 %v2690, 1e-05
      %v2707 = vrsqrt.pop %v2691
      %v2708 = vrsqrt.pop %v2692
      %v2709 = vrsqrt.pop %v2693
      %v2710 = vrsqrt.pop %v2694
      %v2711 = vrsqrt.pop %v2695
      %v2712 = vrsqrt.pop %v2696
      %v2713 = vrsqrt.pop %v2697
      %v2714 = vrsqrt.pop %v2698
      %v2715 = vrsqrt.pop %v2699
      %v2716 = vrsqrt.pop %v2700
      %v2717 = vrsqrt.pop %v2701
      %v2718 = vrsqrt.pop %v2702
      %v2719 = vrsqrt.pop %v2703
      %v2720 = vrsqrt.pop %v2704
      %v2721 = vrsqrt.pop %v2705
      %v2722 = vrsqrt.pop %v2706
      %v2723 = vmul.f32 %v2595, %v2707
      %v2724 = vmul.f32 %v2596, %v2708
      %v2725 = vmul.f32 %v2597, %v2709
      %v2726 = vmul.f32 %v2598, %v2710
      %v2727 = vmul.f32 %v2599, %v2711
      %v2728 = vmul.f32 %v2600, %v2712
      %v2729 = vmul.f32 %v2601, %v2713
      %v2730 = vmul.f32 %v2602, %v2714
      %v2731 = vmul.f32 %v2603, %v2715
      %v2732 = vmul.f32 %v2604, %v2716
      %v2733 = vmul.f32 %v2605, %v2717
      %v2734 = vmul.f32 %v2606, %v2718
      %v2735 = vmul.f32 %v2607, %v2719
      %v2736 = vmul.f32 %v2608, %v2720
      %v2737 = vmul.f32 %v2609, %v2721
      %v2738 = vmul.f32 %v2610, %v2722
      %v2739 = vlaneseq
      %v2740 = vshrl.u32 %v2739, 7
      %v2741 = vsub.s32 2, %v2740
      %v2742 = vrot.slane %v561, %v2741
      %v2743 = vmul.f32 %v2723, %v2742
      %v2744 = vmul.f32 %v2724, %v2742
      %v2745 = vmul.f32 %v2725, %v2742
      %v2746 = vmul.f32 %v2726, %v2742
      %v2747 = vmul.f32 %v2727, %v2742
      %v2748 = vmul.f32 %v2728, %v2742
      %v2749 = vmul.f32 %v2729, %v2742
      %v2750 = vmul.f32 %v2730, %v2742
      %v2751 = vmul.f32 %v2731, %v2742
      %v2752 = vmul.f32 %v2732, %v2742
      %v2753 = vmul.f32 %v2733, %v2742
      %v2754 = vmul.f32 %v2734, %v2742
      %v2755 = vmul.f32 %v2735, %v2742
      %v2756 = vmul.f32 %v2736, %v2742
      %v2757 = vmul.f32 %v2737, %v2742
      %v2758 = vmul.f32 %v2738, %v2742
      %v2759 = vlaneseq
      %v2760 = vshrl.u32 %v2759, 7
      %v2761 = vsub.s32 3, %v2760
      %v2762 = vrot.slane %v561, %v2761
      %v2763 = vadd.f32 %v2743, %v2762
      %v2764 = vadd.f32 %v2744, %v2762
      %v2765 = vadd.f32 %v2745, %v2762
      %v2766 = vadd.f32 %v2746, %v2762
      %v2767 = vadd.f32 %v2747, %v2762
      %v2768 = vadd.f32 %v2748, %v2762
      %v2769 = vadd.f32 %v2749, %v2762
      %v2770 = vadd.f32 %v2750, %v2762
      %v2771 = vadd.f32 %v2751, %v2762
      %v2772 = vadd.f32 %v2752, %v2762
      %v2773 = vadd.f32 %v2753, %v2762
      %v2774 = vadd.f32 %v2754, %v2762
      %v2775 = vadd.f32 %v2755, %v2762
      %v2776 = vadd.f32 %v2756, %v2762
      %v2777 = vadd.f32 %v2757, %v2762
      %v2778 = vadd.f32 %v2758, %v2762
      %v2779 = vlaneseq
      %v2780 = vshrl.u32 %v2779, 7
      %v2781 = vsub.s32 3, %v2780
      %v2782 = vrot.slane %v896, %v2781
      %v2783 = vmul.f32 %v2763, %v2782
      %v2784 = vmul.f32 %v2764, %v2782
      %v2785 = vmul.f32 %v2765, %v2782
      %v2786 = vmul.f32 %v2766, %v2782
      %v2787 = vmul.f32 %v2767, %v2782
      %v2788 = vmul.f32 %v2768, %v2782
      %v2789 = vmul.f32 %v2769, %v2782
      %v2790 = vmul.f32 %v2770, %v2782
      %v2791 = vmul.f32 %v2771, %v2782
      %v2792 = vmul.f32 %v2772, %v2782
      %v2793 = vmul.f32 %v2773, %v2782
      %v2794 = vmul.f32 %v2774, %v2782
      %v2795 = vmul.f32 %v2775, %v2782
      %v2796 = vmul.f32 %v2776, %v2782
      %v2797 = vmul.f32 %v2777, %v2782
      %v2798 = vmul.f32 %v2778, %v2782
      %v2799 = vlaneseq
      %v2800 = vshrl.u32 %v2799, 7
      %v2801 = vsub.s32 2, %v2800
      %v2802 = vrot.slane %v560, %v2801
      %v2803 = vadd.f32 %v2783, %v2802
      %v2804 = vadd.f32 %v2784, %v2802
      %v2805 = vadd.f32 %v2785, %v2802
      %v2806 = vadd.f32 %v2786, %v2802
      %v2807 = vadd.f32 %v2787, %v2802
      %v2808 = vadd.f32 %v2788, %v2802
      %v2809 = vadd.f32 %v2789, %v2802
      %v2810 = vadd.f32 %v2790, %v2802
      %v2811 = vadd.f32 %v2791, %v2802
      %v2812 = vadd.f32 %v2792, %v2802
      %v2813 = vadd.f32 %v2793, %v2802
      %v2814 = vadd.f32 %v2794, %v2802
      %v2815 = vadd.f32 %v2795, %v2802
      %v2816 = vadd.f32 %v2796, %v2802
      %v2817 = vadd.f32 %v2797, %v2802
      %v2818 = vadd.f32 %v2798, %v2802
      %s2819 = scalar_lea.vmem %s7, 4
      %v2820 = vld [vmem:[%s2819] sm:$0xf]
      %v2821 = vlaneseq
      %v2822 = vshrl.u32 %v2821, 7
      %v2823 = vsub.s32 2, %v2822
      %v2824 = vrot.slane %v562, %v2823
      %v2826 = vsel %vm586, %v2803, 0
      %v2829 = vsel %vm586, %v2804, 0
      %v2832 = vsel %vm586, %v2805, 0
      %v2835 = vsel %vm586, %v2806, 0
      %v2838 = vsel %vm586, %v2807, 0
      %v2841 = vsel %vm586, %v2808, 0
      %v2844 = vsel %vm586, %v2809, 0
      %v2847 = vsel %vm586, %v2810, 0
      %v2850 = vsel %vm586, %v2811, 0
      %v2853 = vsel %vm586, %v2812, 0
      %v2856 = vsel %vm586, %v2813, 0
      %v2859 = vsel %vm586, %v2814, 0
      %v2862 = vsel %vm586, %v2815, 0
      %v2865 = vsel %vm586, %v2816, 0
      %v2868 = vsel %vm586, %v2817, 0
      %v2871 = vsel %vm586, %v2818, 0
      %v2874 = vsel %vm1009, %v2820, 0
      %2876 = vmatprep.subr.mxu0 0.0
      %2877 = vmatpush1.msra.mxu0 0.0
      %2878 = vmatprep.subr.mxu0 0.0
      %2879 = vmatpush1.msra.mxu0 0.0
      %2880 = vmatprep.subr.mxu0 0.0
      %2881 = vmatpush1.msra.mxu0 0.0
      %2882 = vmatprep.subr.mxu0 0.0
      %2883 = vmatpush1.msra.mxu0 0.0
      %2884 = vmatprep.subr.mxu0 0.0
      %2885 = vmatpush1.msra.mxu0 0.0
      %2886 = vmatprep.subr.mxu0 0.0
      %2887 = vmatpush1.msra.mxu0 0.0
      %2888 = vmatprep.subr.mxu0 0.0
      %2889 = vmatpush1.msra.mxu0 0.0
      %2890 = vmatprep.subr.mxu0 0.0
      %2891 = vmatpush1.msra.mxu0 0.0
      %2892 = vmatprep.subr.mxu0 0.0
      %2893 = vmatpush1.msra.mxu0 0.0
      %2894 = vmatprep.subr.mxu0 0.0
      %2895 = vmatpush1.msra.mxu0 0.0
      %2896 = vmatprep.subr.mxu0 0.0
      %2897 = vmatpush1.msra.mxu0 0.0
      %2898 = vmatprep.subr.mxu0 0.0
      %2899 = vmatpush1.msra.mxu0 0.0
      %2900 = vmatprep.subr.mxu0 0.0
      %2901 = vmatpush1.msra.mxu0 0.0
      %2902 = vmatprep.subr.mxu0 0.0
      %2903 = vmatpush1.msra.mxu0 0.0
      %2904 = vmatprep.subr.mxu0 0.0
      %2905 = vmatpush1.msra.mxu0 0.0
      %2906 = vmatprep.subr.mxu0 0.0
      %2907 = vmatpush1.msra.mxu0 %v2874
      %2908 = vmatprep.subr.mxu0 0.0
      %2909 = vmatpush2.msra.mxu0 0.0
      %2910 = vmatprep.subr.mxu0 0.0
      %2911 = vmatpush2.msra.mxu0 0.0
      %2912 = vmatprep.subr.mxu0 0.0
      %2913 = vmatpush2.msra.mxu0 0.0
      %2914 = vmatprep.subr.mxu0 0.0
      %2915 = vmatpush2.msra.mxu0 0.0
      %2916 = vmatprep.subr.mxu0 0.0
      %2917 = vmatpush2.msra.mxu0 0.0
      %2918 = vmatprep.subr.mxu0 0.0
      %2919 = vmatpush2.msra.mxu0 0.0
      %2920 = vmatprep.subr.mxu0 0.0
      %2921 = vmatpush2.msra.mxu0 0.0
      %2922 = vmatprep.subr.mxu0 0.0
      %2923 = vmatpush2.msra.mxu0 0.0
      %2924 = vmatprep.subr.mxu0 0.0
      %2925 = vmatpush2.msra.mxu0 0.0
      %2926 = vmatprep.subr.mxu0 0.0
      %2927 = vmatpush2.msra.mxu0 0.0
      %2928 = vmatprep.subr.mxu0 0.0
      %2929 = vmatpush2.msra.mxu0 0.0
      %2930 = vmatprep.subr.mxu0 0.0
      %2931 = vmatpush2.msra.mxu0 0.0
      %2932 = vmatprep.subr.mxu0 0.0
      %2933 = vmatpush2.msra.mxu0 0.0
      %2934 = vmatprep.subr.mxu0 0.0
      %2935 = vmatpush2.msra.mxu0 0.0
      %2936 = vmatprep.subr.mxu0 0.0
      %2937 = vmatpush2.msra.mxu0 0.0
      %2938 = vmatprep.subr.mxu0 0.0
      %2939 = vmatpush2.msra.mxu0 0.0
      %2940 = vmatprep.mubr.f32.mxu0 0.0
      %2941 = vmatmul.mubr.f32.gmra.mxu0 %v2826
      %v2942 = vpop.f32.mrf.mxu0
      %v2943 = vadd.f32 %v2824, %v2942
      %v2944 = vpop.f32.mrf.mxu0
      %2945 = vmatprep.mubr.f32.mxu0 0.0
      %2946 = vmatmul.mubr.f32.gmra.mxu0 %v2829
      %v2947 = vpop.f32.mrf.mxu0
      %v2948 = vadd.f32 %v2824, %v2947
      %v2949 = vpop.f32.mrf.mxu0
      %2950 = vmatprep.mubr.f32.mxu0 0.0
      %2951 = vmatmul.mubr.f32.gmra.mxu0 %v2832
      %v2952 = vpop.f32.mrf.mxu0
      %v2953 = vadd.f32 %v2824, %v2952
      %v2954 = vpop.f32.mrf.mxu0
      %2955 = vmatprep.mubr.f32.mxu0 0.0
      %2956 = vmatmul.mubr.f32.gmra.mxu0 %v2835
      %v2957 = vpop.f32.mrf.mxu0
      %v2958 = vadd.f32 %v2824, %v2957
      %v2959 = vpop.f32.mrf.mxu0
      %2960 = vmatprep.mubr.f32.mxu0 0.0
      %2961 = vmatmul.mubr.f32.gmra.mxu0 %v2838
      %v2962 = vpop.f32.mrf.mxu0
      %v2963 = vadd.f32 %v2824, %v2962
      %v2964 = vpop.f32.mrf.mxu0
      %2965 = vmatprep.mubr.f32.mxu0 0.0
      %2966 = vmatmul.mubr.f32.gmra.mxu0 %v2841
      %v2967 = vpop.f32.mrf.mxu0
      %v2968 = vadd.f32 %v2824, %v2967
      %v2969 = vpop.f32.mrf.mxu0
      %2970 = vmatprep.mubr.f32.mxu0 0.0
      %2971 = vmatmul.mubr.f32.gmra.mxu0 %v2844
      %v2972 = vpop.f32.mrf.mxu0
      %v2973 = vadd.f32 %v2824, %v2972
      %v2974 = vpop.f32.mrf.mxu0
      %2975 = vmatprep.mubr.f32.mxu0 0.0
      %2976 = vmatmul.mubr.f32.gmra.mxu0 %v2847
      %v2977 = vpop.f32.mrf.mxu0
      %v2978 = vadd.f32 %v2824, %v2977
      %v2979 = vpop.f32.mrf.mxu0
      %2980 = vmatprep.mubr.f32.mxu0 0.0
      %2981 = vmatmul.mubr.f32.gmra.mxu0 %v2850
      %v2982 = vpop.f32.mrf.mxu0
      %v2983 = vadd.f32 %v2824, %v2982
      %v2984 = vpop.f32.mrf.mxu0
      %2985 = vmatprep.mubr.f32.mxu0 0.0
      %2986 = vmatmul.mubr.f32.gmra.mxu0 %v2853
      %v2987 = vpop.f32.mrf.mxu0
      %v2988 = vadd.f32 %v2824, %v2987
      %v2989 = vpop.f32.mrf.mxu0
      %2990 = vmatprep.mubr.f32.mxu0 0.0
      %2991 = vmatmul.mubr.f32.gmra.mxu0 %v2856
      %v2992 = vpop.f32.mrf.mxu0
      %v2993 = vadd.f32 %v2824, %v2992
      %v2994 = vpop.f32.mrf.mxu0
      %2995 = vmatprep.mubr.f32.mxu0 0.0
      %2996 = vmatmul.mubr.f32.gmra.mxu0 %v2859
      %v2997 = vpop.f32.mrf.mxu0
      %v2998 = vadd.f32 %v2824, %v2997
      %v2999 = vpop.f32.mrf.mxu0
      %3000 = vmatprep.mubr.f32.mxu0 0.0
      %3001 = vmatmul.mubr.f32.gmra.mxu0 %v2862
      %v3002 = vpop.f32.mrf.mxu0
      %v3003 = vadd.f32 %v2824, %v3002
      %v3004 = vpop.f32.mrf.mxu0
      %3005 = vmatprep.mubr.f32.mxu0 0.0
      %3006 = vmatmul.mubr.f32.gmra.mxu0 %v2865
      %v3007 = vpop.f32.mrf.mxu0
      %v3008 = vadd.f32 %v2824, %v3007
      %v3009 = vpop.f32.mrf.mxu0
      %3010 = vmatprep.mubr.f32.mxu0 0.0
      %3011 = vmatmul.mubr.f32.gmra.mxu0 %v2868
      %v3012 = vpop.f32.mrf.mxu0
      %v3013 = vadd.f32 %v2824, %v3012
      %v3014 = vpop.f32.mrf.mxu0
      %3015 = vmatprep.mubr.f32.mxu0 0.0
      %3016 = vmatmul.mubr.f32.gmra.mxu0 %v2871
      %v3017 = vpop.f32.mrf.mxu0
      %v3018 = vadd.f32 %v2824, %v3017
      %v3019 = vpop.f32.mrf.mxu0
      %3020 = vdwg.mxu0
      %3037 = vrot.lane.b32.xlu0 %v2943, 124
      %v3038 = vpop.permute.xlu0 %3037
      %3039 = vrot.lane.b32.xlu0 %v2948, 124
      %v3040 = vpop.permute.xlu0 %3039
      %3041 = vrot.lane.b32.xlu0 %v2953, 124
      %v3042 = vpop.permute.xlu0 %3041
      %3043 = vrot.lane.b32.xlu0 %v2958, 124
      %v3044 = vpop.permute.xlu0 %3043
      %3045 = vrot.lane.b32.xlu0 %v2963, 124
      %v3046 = vpop.permute.xlu0 %3045
      %3047 = vrot.lane.b32.xlu0 %v2968, 124
      %v3048 = vpop.permute.xlu0 %3047
      %3049 = vrot.lane.b32.xlu0 %v2973, 124
      %v3050 = vpop.permute.xlu0 %3049
      %3051 = vrot.lane.b32.xlu0 %v2978, 124
      %v3052 = vpop.permute.xlu0 %3051
      %3053 = vrot.lane.b32.xlu0 %v2983, 124
      %v3054 = vpop.permute.xlu0 %3053
      %3055 = vrot.lane.b32.xlu0 %v2988, 124
      %v3056 = vpop.permute.xlu0 %3055
      %3057 = vrot.lane.b32.xlu0 %v2993, 124
      %v3058 = vpop.permute.xlu0 %3057
      %3059 = vrot.lane.b32.xlu0 %v2998, 124
      %v3060 = vpop.permute.xlu0 %3059
      %3061 = vrot.lane.b32.xlu0 %v3003, 124
      %v3062 = vpop.permute.xlu0 %3061
      %3063 = vrot.lane.b32.xlu0 %v3008, 124
      %v3064 = vpop.permute.xlu0 %3063
      %3065 = vrot.lane.b32.xlu0 %v3013, 124
      %v3066 = vpop.permute.xlu0 %3065
      %3067 = vrot.lane.b32.xlu0 %v3018, 124
      %v3068 = vpop.permute.xlu0 %3067
      %v3085 = vmul.f32 %v2943, %v3038
      %v3086 = vmul.f32 %v2948, %v3040
      %v3087 = vmul.f32 %v2953, %v3042
      %v3088 = vmul.f32 %v2958, %v3044
      %v3089 = vmul.f32 %v2963, %v3046
      %v3090 = vmul.f32 %v2968, %v3048
      %v3091 = vmul.f32 %v2973, %v3050
      %v3092 = vmul.f32 %v2978, %v3052
      %v3093 = vmul.f32 %v2983, %v3054
      %v3094 = vmul.f32 %v2988, %v3056
      %v3095 = vmul.f32 %v2993, %v3058
      %v3096 = vmul.f32 %v2998, %v3060
      %v3097 = vmul.f32 %v3003, %v3062
      %v3098 = vmul.f32 %v3008, %v3064
      %v3099 = vmul.f32 %v3013, %v3066
      %v3100 = vmul.f32 %v3018, %v3068
      %s3101 = scalar_lea.vmem %s9, 4
      %v3102 = vld [vmem:[%s3101] sm:$0xf]
      %v3103 = vlaneseq
      %v3104 = vshrl.u32 %v3103, 7
      %v3105 = vsub.s32 5, %v3104
      %v3106 = vrot.slane %v561, %v3105
      %v3108 = vsel %vm586, %v3085, 0
      %v3111 = vsel %vm586, %v3086, 0
      %v3114 = vsel %vm586, %v3087, 0
      %v3117 = vsel %vm586, %v3088, 0
      %v3120 = vsel %vm586, %v3089, 0
      %v3123 = vsel %vm586, %v3090, 0
      %v3126 = vsel %vm586, %v3091, 0
      %v3129 = vsel %vm586, %v3092, 0
      %v3132 = vsel %vm586, %v3093, 0
      %v3135 = vsel %vm586, %v3094, 0
      %v3138 = vsel %vm586, %v3095, 0
      %v3141 = vsel %vm586, %v3096, 0
      %v3144 = vsel %vm586, %v3097, 0
      %v3147 = vsel %vm586, %v3098, 0
      %v3150 = vsel %vm586, %v3099, 0
      %v3153 = vsel %vm586, %v3100, 0
      %v3156 = vsel %vm1009, %v3102, 0
      %3158 = vmatprep.subr.mxu0 0.0
      %3159 = vmatpush1.msra.mxu0 0.0
      %3160 = vmatprep.subr.mxu0 0.0
      %3161 = vmatpush1.msra.mxu0 0.0
      %3162 = vmatprep.subr.mxu0 0.0
      %3163 = vmatpush1.msra.mxu0 0.0
      %3164 = vmatprep.subr.mxu0 0.0
      %3165 = vmatpush1.msra.mxu0 0.0
      %3166 = vmatprep.subr.mxu0 0.0
      %3167 = vmatpush1.msra.mxu0 0.0
      %3168 = vmatprep.subr.mxu0 0.0
      %3169 = vmatpush1.msra.mxu0 0.0
      %3170 = vmatprep.subr.mxu0 0.0
      %3171 = vmatpush1.msra.mxu0 0.0
      %3172 = vmatprep.subr.mxu0 0.0
      %3173 = vmatpush1.msra.mxu0 0.0
      %3174 = vmatprep.subr.mxu0 0.0
      %3175 = vmatpush1.msra.mxu0 0.0
      %3176 = vmatprep.subr.mxu0 0.0
      %3177 = vmatpush1.msra.mxu0 0.0
      %3178 = vmatprep.subr.mxu0 0.0
      %3179 = vmatpush1.msra.mxu0 0.0
      %3180 = vmatprep.subr.mxu0 0.0
      %3181 = vmatpush1.msra.mxu0 0.0
      %3182 = vmatprep.subr.mxu0 0.0
      %3183 = vmatpush1.msra.mxu0 0.0
      %3184 = vmatprep.subr.mxu0 0.0
      %3185 = vmatpush1.msra.mxu0 0.0
      %3186 = vmatprep.subr.mxu0 0.0
      %3187 = vmatpush1.msra.mxu0 0.0
      %3188 = vmatprep.subr.mxu0 0.0
      %3189 = vmatpush1.msra.mxu0 %v3156
      %3190 = vmatprep.subr.mxu0 0.0
      %3191 = vmatpush2.msra.mxu0 0.0
      %3192 = vmatprep.subr.mxu0 0.0
      %3193 = vmatpush2.msra.mxu0 0.0
      %3194 = vmatprep.subr.mxu0 0.0
      %3195 = vmatpush2.msra.mxu0 0.0
      %3196 = vmatprep.subr.mxu0 0.0
      %3197 = vmatpush2.msra.mxu0 0.0
      %3198 = vmatprep.subr.mxu0 0.0
      %3199 = vmatpush2.msra.mxu0 0.0
      %3200 = vmatprep.subr.mxu0 0.0
      %3201 = vmatpush2.msra.mxu0 0.0
      %3202 = vmatprep.subr.mxu0 0.0
      %3203 = vmatpush2.msra.mxu0 0.0
      %3204 = vmatprep.subr.mxu0 0.0
      %3205 = vmatpush2.msra.mxu0 0.0
      %3206 = vmatprep.subr.mxu0 0.0
      %3207 = vmatpush2.msra.mxu0 0.0
      %3208 = vmatprep.subr.mxu0 0.0
      %3209 = vmatpush2.msra.mxu0 0.0
      %3210 = vmatprep.subr.mxu0 0.0
      %3211 = vmatpush2.msra.mxu0 0.0
      %3212 = vmatprep.subr.mxu0 0.0
      %3213 = vmatpush2.msra.mxu0 0.0
      %3214 = vmatprep.subr.mxu0 0.0
      %3215 = vmatpush2.msra.mxu0 0.0
      %3216 = vmatprep.subr.mxu0 0.0
      %3217 = vmatpush2.msra.mxu0 0.0
      %3218 = vmatprep.subr.mxu0 0.0
      %3219 = vmatpush2.msra.mxu0 0.0
      %3220 = vmatprep.subr.mxu0 0.0
      %3221 = vmatpush2.msra.mxu0 0.0
      %3222 = vmatprep.mubr.f32.mxu0 0.0
      %3223 = vmatmul.mubr.f32.gmra.mxu0 %v3108
      %v3224 = vpop.f32.mrf.mxu0
      %v3225 = vadd.f32 %v3106, %v3224
      %v3226 = vpop.f32.mrf.mxu0
      %3227 = vmatprep.mubr.f32.mxu0 0.0
      %3228 = vmatmul.mubr.f32.gmra.mxu0 %v3111
      %v3229 = vpop.f32.mrf.mxu0
      %v3230 = vadd.f32 %v3106, %v3229
      %v3231 = vpop.f32.mrf.mxu0
      %3232 = vmatprep.mubr.f32.mxu0 0.0
      %3233 = vmatmul.mubr.f32.gmra.mxu0 %v3114
      %v3234 = vpop.f32.mrf.mxu0
      %v3235 = vadd.f32 %v3106, %v3234
      %v3236 = vpop.f32.mrf.mxu0
      %3237 = vmatprep.mubr.f32.mxu0 0.0
      %3238 = vmatmul.mubr.f32.gmra.mxu0 %v3117
      %v3239 = vpop.f32.mrf.mxu0
      %v3240 = vadd.f32 %v3106, %v3239
      %v3241 = vpop.f32.mrf.mxu0
      %3242 = vmatprep.mubr.f32.mxu0 0.0
      %3243 = vmatmul.mubr.f32.gmra.mxu0 %v3120
      %v3244 = vpop.f32.mrf.mxu0
      %v3245 = vadd.f32 %v3106, %v3244
      %v3246 = vpop.f32.mrf.mxu0
      %3247 = vmatprep.mubr.f32.mxu0 0.0
      %3248 = vmatmul.mubr.f32.gmra.mxu0 %v3123
      %v3249 = vpop.f32.mrf.mxu0
      %v3250 = vadd.f32 %v3106, %v3249
      %v3251 = vpop.f32.mrf.mxu0
      %3252 = vmatprep.mubr.f32.mxu0 0.0
      %3253 = vmatmul.mubr.f32.gmra.mxu0 %v3126
      %v3254 = vpop.f32.mrf.mxu0
      %v3255 = vadd.f32 %v3106, %v3254
      %v3256 = vpop.f32.mrf.mxu0
      %3257 = vmatprep.mubr.f32.mxu0 0.0
      %3258 = vmatmul.mubr.f32.gmra.mxu0 %v3129
      %v3259 = vpop.f32.mrf.mxu0
      %v3260 = vadd.f32 %v3106, %v3259
      %v3261 = vpop.f32.mrf.mxu0
      %3262 = vmatprep.mubr.f32.mxu0 0.0
      %3263 = vmatmul.mubr.f32.gmra.mxu0 %v3132
      %v3264 = vpop.f32.mrf.mxu0
      %v3265 = vadd.f32 %v3106, %v3264
      %v3266 = vpop.f32.mrf.mxu0
      %3267 = vmatprep.mubr.f32.mxu0 0.0
      %3268 = vmatmul.mubr.f32.gmra.mxu0 %v3135
      %v3269 = vpop.f32.mrf.mxu0
      %v3270 = vadd.f32 %v3106, %v3269
      %v3271 = vpop.f32.mrf.mxu0
      %3272 = vmatprep.mubr.f32.mxu0 0.0
      %3273 = vmatmul.mubr.f32.gmra.mxu0 %v3138
      %v3274 = vpop.f32.mrf.mxu0
      %v3275 = vadd.f32 %v3106, %v3274
      %v3276 = vpop.f32.mrf.mxu0
      %3277 = vmatprep.mubr.f32.mxu0 0.0
      %3278 = vmatmul.mubr.f32.gmra.mxu0 %v3141
      %v3279 = vpop.f32.mrf.mxu0
      %v3280 = vadd.f32 %v3106, %v3279
      %v3281 = vpop.f32.mrf.mxu0
      %3282 = vmatprep.mubr.f32.mxu0 0.0
      %3283 = vmatmul.mubr.f32.gmra.mxu0 %v3144
      %v3284 = vpop.f32.mrf.mxu0
      %v3285 = vadd.f32 %v3106, %v3284
      %v3286 = vpop.f32.mrf.mxu0
      %3287 = vmatprep.mubr.f32.mxu0 0.0
      %3288 = vmatmul.mubr.f32.gmra.mxu0 %v3147
      %v3289 = vpop.f32.mrf.mxu0
      %v3290 = vadd.f32 %v3106, %v3289
      %v3291 = vpop.f32.mrf.mxu0
      %3292 = vmatprep.mubr.f32.mxu0 0.0
      %3293 = vmatmul.mubr.f32.gmra.mxu0 %v3150
      %v3294 = vpop.f32.mrf.mxu0
      %v3295 = vadd.f32 %v3106, %v3294
      %v3296 = vpop.f32.mrf.mxu0
      %3297 = vmatprep.mubr.f32.mxu0 0.0
      %3298 = vmatmul.mubr.f32.gmra.mxu0 %v3153
      %v3299 = vpop.f32.mrf.mxu0
      %v3300 = vadd.f32 %v3106, %v3299
      %v3301 = vpop.f32.mrf.mxu0
      %3302 = vdwg.mxu0
      %v3303 = vlaneseq
      %v3304 = vshrl.u32 %v3303, 7
      %v3305 = vsub.s32 7, %v3304
      %v3306 = vrot.slane %v561, %v3305
      %v3307 = vmul.f32 %v3225, %v3306
      %v3308 = vmul.f32 %v3230, %v3306
      %v3309 = vmul.f32 %v3235, %v3306
      %v3310 = vmul.f32 %v3240, %v3306
      %v3311 = vmul.f32 %v3245, %v3306
      %v3312 = vmul.f32 %v3250, %v3306
      %v3313 = vmul.f32 %v3255, %v3306
      %v3314 = vmul.f32 %v3260, %v3306
      %v3315 = vmul.f32 %v3265, %v3306
      %v3316 = vmul.f32 %v3270, %v3306
      %v3317 = vmul.f32 %v3275, %v3306
      %v3318 = vmul.f32 %v3280, %v3306
      %v3319 = vmul.f32 %v3285, %v3306
      %v3320 = vmul.f32 %v3290, %v3306
      %v3321 = vmul.f32 %v3295, %v3306
      %v3322 = vmul.f32 %v3300, %v3306
      %v3323 = vadd.f32 %v2515, %v3307
      %v3324 = vadd.f32 %v2516, %v3308
      %v3325 = vadd.f32 %v2517, %v3309
      %v3326 = vadd.f32 %v2518, %v3310
      %v3327 = vadd.f32 %v2519, %v3311
      %v3328 = vadd.f32 %v2520, %v3312
      %v3329 = vadd.f32 %v2521, %v3313
      %v3330 = vadd.f32 %v2522, %v3314
      %v3331 = vadd.f32 %v2523, %v3315
      %v3332 = vadd.f32 %v2524, %v3316
      %v3333 = vadd.f32 %v2525, %v3317
      %v3334 = vadd.f32 %v2526, %v3318
      %v3335 = vadd.f32 %v2527, %v3319
      %v3336 = vadd.f32 %v2528, %v3320
      %v3337 = vadd.f32 %v2529, %v3321
      %v3338 = vadd.f32 %v2530, %v3322
      %3339 = vst.msk [vmem:[%s556] sm:$0xff] %vm586, %v3323
      %3340 = vst.msk [vmem:[%s556 + $0x8] sm:$0xff] %vm586, %v3324
      %3341 = vst.msk [vmem:[%s556 + $0x10] sm:$0xff] %vm586, %v3325
      %3342 = vst.msk [vmem:[%s556 + $0x18] sm:$0xff] %vm586, %v3326
      %3343 = vst.msk [vmem:[%s556 + $0x20] sm:$0xff] %vm586, %v3327
      %3344 = vst.msk [vmem:[%s556 + $0x28] sm:$0xff] %vm586, %v3328
      %3345 = vst.msk [vmem:[%s556 + $0x30] sm:$0xff] %vm586, %v3329
      %3346 = vst.msk [vmem:[%s556 + $0x38] sm:$0xff] %vm586, %v3330
      %3347 = vst.msk [vmem:[%s556 + $0x40] sm:$0xff] %vm586, %v3331
      %3348 = vst.msk [vmem:[%s556 + $0x48] sm:$0xff] %vm586, %v3332
      %3349 = vst.msk [vmem:[%s556 + $0x50] sm:$0xff] %vm586, %v3333
      %3350 = vst.msk [vmem:[%s556 + $0x58] sm:$0xff] %vm586, %v3334
      %3351 = vst.msk [vmem:[%s556 + $0x60] sm:$0xff] %vm586, %v3335
      %3352 = vst.msk [vmem:[%s556 + $0x68] sm:$0xff] %vm586, %v3336
      %3353 = vst.msk [vmem:[%s556 + $0x70] sm:$0xff] %vm586, %v3337
      %3354 = vst.msk [vmem:[%s556 + $0x78] sm:$0xff] %vm586, %v3338
      %s3355 = smul.u32 16, %s26
      %p3356 = scmp.lt.s32.totalorder %s25, 1
      %s3357 = scalar_select %p3356, %s25, 1
      %p3358 = scmp.lt.s32.totalorder %s3355, 31
      %s3359 = scalar_select %p3358, %s3355, 31
      %s3360 = smul.addr %s3357, 32
      %s3361 = sadd.s32 %s3359, %s3360
      %s3362 = smul.addr %s3361, 8
      %s3363 = scalar_lea.vmem %s10, %s3362
      // Predicated region
      $region61: #{_nafblock_jit.3} parent=59 // pred_check
        %p3364 = pneg %p310
      $region62: #{_nafblock_jit.3} parent=59 // pred_check_branch
        %3366 = sbr.rel (%p3364) target = $region64
      $region63: #{_nafblock_jit.3} parent=59 // pred_region
        %s3367 = smul.u32 16, %s26
      $region64: #{_nafblock_jit.3} parent=59 // pred_fallthru
        _
    $region60: #{_nafblock_jit.3} parent=5 // pred_fallthru
      _
    %p3368 = scmp.le.s32.totalorder 2, %s16
    // Predicated region
    $region65: #{_nafblock_jit.3} parent=5 // pred_check
      %p3369 = pneg %p3368
    $region66: #{_nafblock_jit.3} parent=5 // pred_check_branch
      %3371 = sbr.rel (%p3369) target = $region68
    $region67: #{_nafblock_jit.3} parent=5 // pred_region
      %s3372 = ssub.s32 %s16, 2
      // Predicated region
      $region69: #{_nafblock_jit.3} parent=67 // pred_check
        %p3373 = pneg %p316
      $region70: #{_nafblock_jit.3} parent=67 // pred_check_branch
        %3375 = sbr.rel (%p3373) target = $region72
      $region71: #{_nafblock_jit.3} parent=67 // pred_region
        %s3376 = smul.u32 16, %s28
        %p3377 = scmp.lt.s32.totalorder %s27, 1
        %s3378 = scalar_select %p3377, %s27, 1
        %p3379 = scmp.lt.s32.totalorder %s3376, 31
        %s3380 = scalar_select %p3379, %s3376, 31
        %s3381 = smul.addr %s3378, 32
        %s3382 = sadd.s32 %s3380, %s3381
        %s3383 = smul.addr %s3382, 8
        %s3384 = scalar_lea.vmem %s10, %s3383
      $region72: #{_nafblock_jit.3} parent=67 // pred_fallthru
        _
    $region68: #{_nafblock_jit.3} parent=5 // pred_fallthru
      _
  $region6: #{_nafblock_jit.3} parent=0 // loop_footer
    %s20 = sadd.s32 1, %s16
  $region7: #{_nafblock_jit.3} parent=0 // loop_footer_branch
    %15 = sbr.rel target = $region3
  $region8: #{_nafblock_jit.3} parent=0 // loop_exit
    _

</llo_original>
